<compile_context>
chip_gen: v7x
topology: tpu7x:2x2x1
jax: 0.10.0
libtpu: 0.0.40
codegen_flags: <defaults>
</compile_context>

<pallas_src>
import math

import jax
import jax.numpy as jnp
from jax.experimental import pallas as pl
from jax.experimental.pallas import tpu as pltpu


# ----------------------------------------------------------------------------
# Fused BertImageLayer kernel (single grid step, batch folded into M)
# ----------------------------------------------------------------------------
def _make_kernel(B, S, num_heads, dynamic):
    inv_sqrt2 = 1.0 / math.sqrt(2.0)

    def body(x_ref, mask_ref, gates_ref, wqkv_ref, bqkv_ref, wo_ref,
             wi_ref, bi_ref, w2_ref, vecs_ref, out_ref):
        Dv = x_ref.shape[1]
        Dh = Dv // num_heads
        scale = 1.0 / math.sqrt(Dh)

        x = x_ref[...]                                  # [B*S, Dv] f32 (residual)
        xb = x.astype(jnp.bfloat16)

        # --- stacked QKV projection: one lane-dense matmul with M = B*S ---
        qkv = jnp.dot(xb, wqkv_ref[...],
                      preferred_element_type=jnp.float32) + bqkv_ref[...]   # [B*S, 3Dv]
        q = qkv[:, 0:Dv]
        k = qkv[:, Dv:2 * Dv]
        v = qkv[:, 2 * Dv:3 * Dv]

        mask = mask_ref[...]                            # [B, S] additive mask
        if dynamic:
            gates = gates_ref[...]                      # [2B, Dv]: gate_q rows, gate_k rows

        # --- multi-head self-attention: small per-(batch, head) S x S matmuls ---
        ctx_rows = []
        for b in range(B):                              # B, H small -> unrolled
            r0 = b * S
            qb = q[r0:r0 + S, :]
            kb = k[r0:r0 + S, :]
            if dynamic:
                qb = qb * gates[b:b + 1, :]
                kb = kb * gates[B + b:B + b + 1, :]
            # single cast after gating (low vreg pressure, no per-head recast)
            qb = qb.astype(jnp.bfloat16)
            kb = kb.astype(jnp.bfloat16)
            vb = v[r0:r0 + S, :].astype(jnp.bfloat16)
            mb = mask[b:b + 1, :]                       # [1, S] over keys

            head_ctx = []
            for h in range(num_heads):                  # 128-lane-aligned head slices
                lo = h * Dh
                s = jax.lax.dot_general(qb[:, lo:lo + Dh], kb[:, lo:lo + Dh],
                                        (((1,), (1,)), ((), ())),
                                        preferred_element_type=jnp.float32)
                s = s * scale + mb                      # [S, S]
                m = jnp.max(s, axis=-1, keepdims=True)
                e = jnp.exp(s - m)
                p = e * pl.reciprocal(jnp.sum(e, axis=-1, keepdims=True), approx=True)
                head_ctx.append(jnp.dot(p.astype(jnp.bfloat16), vb[:, lo:lo + Dh],
                                        preferred_element_type=jnp.float32))
            # lane-aligned concat of heads (free vreg placement, no scratch store)
            ctx_rows.append(jnp.concatenate(head_ctx, axis=-1))        # [S, Dv]
        ctx = jnp.concatenate(ctx_rows, axis=0)                        # [B*S, Dv]

        # packed small vectors: [b_dense; ln1_g; ln1_b; b_out; ln2_g; ln2_b]
        vecs = vecs_ref[...]
        bo, g1, be1 = vecs[0:1, :], vecs[1:2, :], vecs[2:3, :]
        b2, g2, be2 = vecs[3:4, :], vecs[4:5, :], vecs[5:6, :]

        def layer_norm(hh, g, bta):
            mu = jnp.mean(hh, axis=-1, keepdims=True)
            var = jnp.mean(jnp.square(hh - mu), axis=-1, keepdims=True)
            return (hh - mu) * jax.lax.rsqrt(var + 1e-12) * g + bta

        # --- BertImageSelfOutput: dense (M = B*S) + residual + LayerNorm ---
        h1 = jnp.dot(ctx.astype(jnp.bfloat16), wo_ref[...],
                     preferred_element_type=jnp.float32) + bo + x
        att = layer_norm(h1, g1, be1)

        # --- BertImageIntermediate: dense + exact-erf GELU ---
        hi = jnp.dot(att.astype(jnp.bfloat16), wi_ref[...],
                     preferred_element_type=jnp.float32) + bi_ref[...]
        gelu = 0.5 * hi * (1.0 + jax.lax.erf(hi * inv_sqrt2))

        # --- BertImageOutput: dense + residual + LayerNorm ---
        h2 = jnp.dot(gelu.astype(jnp.bfloat16), w2_ref[...],
                     preferred_element_type=jnp.float32) + b2 + att
        out_ref[...] = layer_norm(h2, g2, be2)

    if dynamic:
        return body

    def body_nodyn(x_ref, mask_ref, wqkv_ref, bqkv_ref, wo_ref,
                   wi_ref, bi_ref, w2_ref, vecs_ref, out_ref):
        return body(x_ref, mask_ref, None, wqkv_ref, bqkv_ref, wo_ref,
                    wi_ref, bi_ref, w2_ref, vecs_ref, out_ref)

    return body_nodyn


# ----------------------------------------------------------------------------
# Full BertImageLayer forward (single fused pallas_call)
# ----------------------------------------------------------------------------
def bert_image_layer(params, hidden_states, attention_mask,
                     txt_embedding, txt_attention_mask, cfg):
    B, S, Dv = hidden_states.shape
    H = cfg["v_num_attention_heads"]
    Iv = params["w_int"].shape[1]
    dynamic = bool(cfg.get("dynamic_attention", False))

    x_flat = hidden_states.reshape(B * S, Dv).astype(jnp.float32)
    # extended additive mask [B,1,1,S] -> [B,S]
    mask = attention_mask.reshape(B, S).astype(jnp.float32)

    bf16 = lambda a: a.astype(jnp.bfloat16)
    # stacked QKV weights/biases -> one lane-dense projection matmul in-kernel
    wqkv = bf16(jnp.concatenate([params["wq"], params["wk"], params["wv"]], axis=1))
    bqkv = jnp.concatenate([params["bq"], params["bk"], params["bv"]], axis=1)   # [1, 3Dv]
    # pack the six Dv-wide small operands into one input (fewer DMA descriptors)
    vecs = jnp.concatenate([params["b_dense"], params["ln1_g"], params["ln1_b"],
                            params["b_out"], params["ln2_g"], params["ln2_b"]],
                           axis=0)                                               # [6, Dv]

    full = lambda shape: pl.BlockSpec(shape, lambda i: (0,) * len(shape))

    args = [x_flat, mask]
    in_specs = [full((B * S, Dv)), full((B, S))]

    if dynamic:
        # Hoisted dynamic-attention gating: tiny [B, Dt] ops handled by XLA; the
        # kernel only sees the two precomputed gate rows per batch element.
        St = txt_embedding.shape[1]
        tx = txt_embedding.astype(jnp.float32)
        tm = txt_attention_mask.reshape(B, St, 1).astype(jnp.float32)
        pooled = jnp.sum(tx * tm, axis=1) / jnp.sum(tm, axis=1)                  # [B, Dt]
        gate_q = 1.0 + jax.nn.sigmoid(pooled @ params["w_dyq"] + params["b_dyq"])
        gate_k = 1.0 + jax.nn.sigmoid(pooled @ params["w_dyk"] + params["b_dyk"])
        gates = jnp.concatenate([gate_q, gate_k], axis=0)                        # [2B, Dv]
        args.append(gates)
        in_specs.append(full((2 * B, Dv)))

    args += [wqkv, bqkv, bf16(params["w_dense"]), bf16(params["w_int"]),
             params["b_int"], bf16(params["w_out"]), vecs]
    in_specs += [full((Dv, 3 * Dv)), full((1, 3 * Dv)), full((Dv, Dv)),
                 full((Dv, Iv)), full((1, Iv)), full((Iv, Dv)), full((6, Dv))]

    out = pl.pallas_call(
        _make_kernel(B, S, H, dynamic),
        out_shape=jax.ShapeDtypeStruct((B * S, Dv), jnp.float32),
        grid=(1,),                                  # single step: weights fetched once
        in_specs=in_specs,
        out_specs=pl.BlockSpec((B * S, Dv), lambda i: (0, 0)),
        compiler_params=pltpu.CompilerParams(dimension_semantics=("arbitrary",)),
    )(*args)

    attention_probs = {}  # config.visualization == False
    return out.reshape(B, S, Dv), attention_probs


# ----------------------------------------------------------------------------
# Deterministic parameter init (weights stored as [in, out]; identical math to
# PyTorch's x @ W.T with W stored [out, in]).
# ----------------------------------------------------------------------------
def init_params(key, cfg):
    Dv = cfg["v_hidden_size"]
    Dt = cfg["hidden_size"]
    Iv = cfg["v_intermediate_size"]
    keys = iter(jax.random.split(key, 32))

    def lin(din, dout):
        w = 0.02 * jax.random.normal(next(keys), (din, dout), jnp.float32)
        b = 0.02 * jax.random.normal(next(keys), (1, dout), jnp.float32)
        return w, b

    p = {}
    p["wq"], p["bq"] = lin(Dv, Dv)
    p["wk"], p["bk"] = lin(Dv, Dv)
    p["wv"], p["bv"] = lin(Dv, Dv)
    p["w_dyq"], p["b_dyq"] = lin(Dt, Dv)       # dyLinear_q (dynamic_attention)
    p["w_dyk"], p["b_dyk"] = lin(Dt, Dv)       # dyLinear_k
    p["w_dense"], p["b_dense"] = lin(Dv, Dv)   # BertImageSelfOutput.dense
    p["ln1_g"] = jnp.ones((1, Dv), jnp.float32)
    p["ln1_b"] = jnp.zeros((1, Dv), jnp.float32)
    p["w_int"], p["b_int"] = lin(Dv, Iv)       # BertImageIntermediate.dense
    p["w_out"], p["b_out"] = lin(Iv, Dv)       # BertImageOutput.dense
    p["ln2_g"] = jnp.ones((1, Dv), jnp.float32)
    p["ln2_b"] = jnp.zeros((1, Dv), jnp.float32)
    return p


if __name__ == "__main__":
    cfg = dict(
        v_hidden_size=256,           # visual hidden size (lane-dense, 2x128)
        v_num_attention_heads=2,     # head size = 128 (lane-aligned heads)
        v_intermediate_size=512,
        hidden_size=128,             # text hidden size (for dynamic gating)
        dynamic_attention=True,
        visualization=False,
        v_attention_probs_dropout_prob=0.0,   # dropouts are identity (eval mode)
        v_hidden_dropout_prob=0.0,
    )

    root = jax.random.PRNGKey(0)
    kp, k1, k2 = jax.random.split(root, 3)
    params = init_params(kp, cfg)

    B, S, St = 2, 16, 8
    hidden_states = jax.random.normal(k1, (B, S, cfg["v_hidden_size"]), jnp.float32)
    txt_embedding = jax.random.normal(k2, (B, St, cfg["hidden_size"]), jnp.float32)

    # extended additive BERT mask for image regions [B,1,1,S]: 0 = attend, -10000 = masked
    valid_img = jnp.ones((B, S), jnp.float32).at[:, -3:].set(0.0)
    attention_mask = ((1.0 - valid_img) * -10000.0)[:, None, None, :]
    # binary text mask [B, St, 1] used only for dynamic-attention pooling
    txt_attention_mask = jnp.ones((B, St), jnp.float32).at[:, -2:].set(0.0)[:, :, None]

    layer_out, attn_probs = bert_image_layer(
        params, hidden_states, attention_mask, txt_embedding, txt_attention_mask, cfg)
    jax.block_until_ready(layer_out)

    assert layer_out.shape == (B, S, cfg["v_hidden_size"])
    assert jnp.all(jnp.isfinite(layer_out))
    assert attn_probs == {}
    print("KERNEL_OK")
</pallas_src>

<mosaic_0001>
module attributes {stable_mosaic.version = 11 : i64} {
  func.func @body(%arg0: i32, %arg1: memref<32x256xf32, #tpu.memory_space<vmem>>, %arg2: memref<2x16xf32, #tpu.memory_space<vmem>>, %arg3: memref<4x256xf32, #tpu.memory_space<vmem>>, %arg4: memref<256x768xbf16, #tpu.memory_space<vmem>>, %arg5: memref<1x768xf32, #tpu.memory_space<vmem>>, %arg6: memref<256x256xbf16, #tpu.memory_space<vmem>>, %arg7: memref<256x512xbf16, #tpu.memory_space<vmem>>, %arg8: memref<1x512xf32, #tpu.memory_space<vmem>>, %arg9: memref<512x256xbf16, #tpu.memory_space<vmem>>, %arg10: memref<6x256xf32, #tpu.memory_space<vmem>>, %arg11: memref<32x256xf32, #tpu.memory_space<vmem>>) attributes {dimension_semantics = [#tpu.dimension_semantics<arbitrary>], iteration_bounds = array<i64: 1>, scalar_prefetch = 0 : i64, scratch_operands = 0 : i64, tpu.core_type = #tpu.core_type<tc>, window_params = [{pipeline_mode = #tpu.pipeline_mode<synchronous>, transform_indices = @transform_0, window_bounds = array<i64: 32, 256>}, {pipeline_mode = #tpu.pipeline_mode<synchronous>, transform_indices = @transform_1, window_bounds = array<i64: 2, 16>}, {pipeline_mode = #tpu.pipeline_mode<synchronous>, transform_indices = @transform_2, window_bounds = array<i64: 4, 256>}, {pipeline_mode = #tpu.pipeline_mode<synchronous>, transform_indices = @transform_3, window_bounds = array<i64: 256, 768>}, {pipeline_mode = #tpu.pipeline_mode<synchronous>, transform_indices = @transform_4, window_bounds = array<i64: 1, 768>}, {pipeline_mode = #tpu.pipeline_mode<synchronous>, transform_indices = @transform_5, window_bounds = array<i64: 256, 256>}, {pipeline_mode = #tpu.pipeline_mode<synchronous>, transform_indices = @transform_6, window_bounds = array<i64: 256, 512>}, {pipeline_mode = #tpu.pipeline_mode<synchronous>, transform_indices = @transform_7, window_bounds = array<i64: 1, 512>}, {pipeline_mode = #tpu.pipeline_mode<synchronous>, transform_indices = @transform_8, window_bounds = array<i64: 512, 256>}, {pipeline_mode = #tpu.pipeline_mode<synchronous>, transform_indices = @transform_9, window_bounds = array<i64: 6, 256>}, {pipeline_mode = #tpu.pipeline_mode<synchronous>, transform_indices = @transform_10, window_bounds = array<i64: 32, 256>}]} {
    %c0 = arith.constant 0 : index
    %c0_0 = arith.constant 0 : index
    %0 = vector.load %arg1[%c0, %c0_0] : memref<32x256xf32, #tpu.memory_space<vmem>>, vector<32x256xf32>
    %1 = arith.truncf %0 : vector<32x256xf32> to vector<32x256xbf16>
    %c0_1 = arith.constant 0 : index
    %c0_2 = arith.constant 0 : index
    %2 = vector.load %arg4[%c0_1, %c0_2] : memref<256x768xbf16, #tpu.memory_space<vmem>>, vector<256x768xbf16>
    %cst = arith.constant dense<0.000000e+00> : vector<32x768xf32>
    %3 = tpu.matmul %1, %2, %cst {dimension_numbers = #tpu.dot_dimension_numbers<[1], [0], [0], [1], [0, 0, 1, 1], [], []>} : vector<32x256xbf16>, vector<256x768xbf16>, vector<32x768xf32> -> vector<32x768xf32>
    %c0_3 = arith.constant 0 : index
    %c0_4 = arith.constant 0 : index
    %4 = vector.load %arg5[%c0_3, %c0_4] : memref<1x768xf32, #tpu.memory_space<vmem>>, vector<1x768xf32>
    %5 = vector.broadcast %4 : vector<1x768xf32> to vector<32x768xf32>
    %6 = arith.addf %3, %5 : vector<32x768xf32>
    %7 = vector.extract_strided_slice %6 {offsets = [0, 0], sizes = [32, 256], strides = [1, 1]} : vector<32x768xf32> to vector<32x256xf32>
    %8 = vector.extract_strided_slice %6 {offsets = [0, 256], sizes = [32, 256], strides = [1, 1]} : vector<32x768xf32> to vector<32x256xf32>
    %9 = vector.extract_strided_slice %6 {offsets = [0, 512], sizes = [32, 256], strides = [1, 1]} : vector<32x768xf32> to vector<32x256xf32>
    %c0_5 = arith.constant 0 : index
    %c0_6 = arith.constant 0 : index
    %10 = vector.load %arg2[%c0_5, %c0_6] : memref<2x16xf32, #tpu.memory_space<vmem>>, vector<2x16xf32>
    %c0_7 = arith.constant 0 : index
    %c0_8 = arith.constant 0 : index
    %11 = vector.load %arg3[%c0_7, %c0_8] : memref<4x256xf32, #tpu.memory_space<vmem>>, vector<4x256xf32>
    %12 = vector.extract_strided_slice %7 {offsets = [0, 0], sizes = [16, 256], strides = [1, 1]} : vector<32x256xf32> to vector<16x256xf32>
    %13 = vector.extract_strided_slice %8 {offsets = [0, 0], sizes = [16, 256], strides = [1, 1]} : vector<32x256xf32> to vector<16x256xf32>
    %14 = vector.extract_strided_slice %11 {offsets = [0, 0], sizes = [1, 256], strides = [1, 1]} : vector<4x256xf32> to vector<1x256xf32>
    %15 = vector.broadcast %14 : vector<1x256xf32> to vector<16x256xf32>
    %16 = arith.mulf %12, %15 : vector<16x256xf32>
    %17 = vector.extract_strided_slice %11 {offsets = [2, 0], sizes = [1, 256], strides = [1, 1]} : vector<4x256xf32> to vector<1x256xf32>
    %18 = vector.broadcast %17 : vector<1x256xf32> to vector<16x256xf32>
    %19 = arith.mulf %13, %18 : vector<16x256xf32>
    %20 = arith.truncf %16 : vector<16x256xf32> to vector<16x256xbf16>
    %21 = arith.truncf %19 : vector<16x256xf32> to vector<16x256xbf16>
    %22 = vector.extract_strided_slice %9 {offsets = [0, 0], sizes = [16, 256], strides = [1, 1]} : vector<32x256xf32> to vector<16x256xf32>
    %23 = arith.truncf %22 : vector<16x256xf32> to vector<16x256xbf16>
    %24 = vector.extract_strided_slice %10 {offsets = [0, 0], sizes = [1, 16], strides = [1, 1]} : vector<2x16xf32> to vector<1x16xf32>
    %25 = vector.extract_strided_slice %20 {offsets = [0, 0], sizes = [16, 128], strides = [1, 1]} : vector<16x256xbf16> to vector<16x128xbf16>
    %26 = vector.extract_strided_slice %21 {offsets = [0, 0], sizes = [16, 128], strides = [1, 1]} : vector<16x256xbf16> to vector<16x128xbf16>
    %cst_9 = arith.constant dense<0.000000e+00> : vector<16x16xf32>
    %27 = tpu.matmul %25, %26, %cst_9 {dimension_numbers = #tpu.dot_dimension_numbers<[1], [1], [0], [0], [0, 0, 1, 0], [], []>} : vector<16x128xbf16>, vector<16x128xbf16>, vector<16x16xf32> -> vector<16x16xf32>
    %cst_10 = arith.constant 0.0883883461 : f32
    %28 = vector.broadcast %cst_10 : f32 to vector<16x16xf32>
    %29 = arith.mulf %27, %28 : vector<16x16xf32>
    %30 = vector.broadcast %24 : vector<1x16xf32> to vector<16x16xf32>
    %31 = arith.addf %29, %30 : vector<16x16xf32>
    %cst_11 = arith.constant dense<0xFF800000> : vector<16xf32>
    %32 = vector.multi_reduction <maximumf>, %31, %cst_11 [1] : vector<16x16xf32> to vector<16xf32>
    %33 = vector.shape_cast %32 : vector<16xf32> to vector<16x1xf32>
    %34 = vector.broadcast %33 : vector<16x1xf32> to vector<16x16xf32>
    %35 = arith.subf %31, %34 : vector<16x16xf32>
    %36 = math.exp %35 : vector<16x16xf32>
    %cst_12 = arith.constant dense<0.000000e+00> : vector<16xf32>
    %37 = vector.multi_reduction <add>, %36, %cst_12 [1] : vector<16x16xf32> to vector<16xf32>
    %38 = vector.shape_cast %37 : vector<16xf32> to vector<16x1xf32>
    %39 = tpu.reciprocal %38 {approx = true} : vector<16x1xf32> -> vector<16x1xf32>
    %40 = vector.broadcast %39 : vector<16x1xf32> to vector<16x16xf32>
    %41 = arith.mulf %36, %40 : vector<16x16xf32>
    %42 = arith.truncf %41 : vector<16x16xf32> to vector<16x16xbf16>
    %43 = vector.extract_strided_slice %23 {offsets = [0, 0], sizes = [16, 128], strides = [1, 1]} : vector<16x256xbf16> to vector<16x128xbf16>
    %cst_13 = arith.constant dense<0.000000e+00> : vector<16x128xf32>
    %44 = tpu.matmul %42, %43, %cst_13 {dimension_numbers = #tpu.dot_dimension_numbers<[1], [0], [0], [1], [0, 0, 1, 1], [], []>} : vector<16x16xbf16>, vector<16x128xbf16>, vector<16x128xf32> -> vector<16x128xf32>
    %45 = vector.extract_strided_slice %20 {offsets = [0, 128], sizes = [16, 128], strides = [1, 1]} : vector<16x256xbf16> to vector<16x128xbf16>
    %46 = vector.extract_strided_slice %21 {offsets = [0, 128], sizes = [16, 128], strides = [1, 1]} : vector<16x256xbf16> to vector<16x128xbf16>
    %cst_14 = arith.constant dense<0.000000e+00> : vector<16x16xf32>
    %47 = tpu.matmul %45, %46, %cst_14 {dimension_numbers = #tpu.dot_dimension_numbers<[1], [1], [0], [0], [0, 0, 1, 0], [], []>} : vector<16x128xbf16>, vector<16x128xbf16>, vector<16x16xf32> -> vector<16x16xf32>
    %cst_15 = arith.constant 0.0883883461 : f32
    %48 = vector.broadcast %cst_15 : f32 to vector<16x16xf32>
    %49 = arith.mulf %47, %48 : vector<16x16xf32>
    %50 = vector.broadcast %24 : vector<1x16xf32> to vector<16x16xf32>
    %51 = arith.addf %49, %50 : vector<16x16xf32>
    %cst_16 = arith.constant dense<0xFF800000> : vector<16xf32>
    %52 = vector.multi_reduction <maximumf>, %51, %cst_16 [1] : vector<16x16xf32> to vector<16xf32>
    %53 = vector.shape_cast %52 : vector<16xf32> to vector<16x1xf32>
    %54 = vector.broadcast %53 : vector<16x1xf32> to vector<16x16xf32>
    %55 = arith.subf %51, %54 : vector<16x16xf32>
    %56 = math.exp %55 : vector<16x16xf32>
    %cst_17 = arith.constant dense<0.000000e+00> : vector<16xf32>
    %57 = vector.multi_reduction <add>, %56, %cst_17 [1] : vector<16x16xf32> to vector<16xf32>
    %58 = vector.shape_cast %57 : vector<16xf32> to vector<16x1xf32>
    %59 = tpu.reciprocal %58 {approx = true} : vector<16x1xf32> -> vector<16x1xf32>
    %60 = vector.broadcast %59 : vector<16x1xf32> to vector<16x16xf32>
    %61 = arith.mulf %56, %60 : vector<16x16xf32>
    %62 = arith.truncf %61 : vector<16x16xf32> to vector<16x16xbf16>
    %63 = vector.extract_strided_slice %23 {offsets = [0, 128], sizes = [16, 128], strides = [1, 1]} : vector<16x256xbf16> to vector<16x128xbf16>
    %cst_18 = arith.constant dense<0.000000e+00> : vector<16x128xf32>
    %64 = tpu.matmul %62, %63, %cst_18 {dimension_numbers = #tpu.dot_dimension_numbers<[1], [0], [0], [1], [0, 0, 1, 1], [], []>} : vector<16x16xbf16>, vector<16x128xbf16>, vector<16x128xf32> -> vector<16x128xf32>
    %65 = tpu.concatenate %44, %64 in 1 : vector<16x128xf32>, vector<16x128xf32> -> vector<16x256xf32>
    %66 = vector.extract_strided_slice %7 {offsets = [16, 0], sizes = [16, 256], strides = [1, 1]} : vector<32x256xf32> to vector<16x256xf32>
    %67 = vector.extract_strided_slice %8 {offsets = [16, 0], sizes = [16, 256], strides = [1, 1]} : vector<32x256xf32> to vector<16x256xf32>
    %68 = vector.extract_strided_slice %11 {offsets = [1, 0], sizes = [1, 256], strides = [1, 1]} : vector<4x256xf32> to vector<1x256xf32>
    %69 = vector.broadcast %68 : vector<1x256xf32> to vector<16x256xf32>
    %70 = arith.mulf %66, %69 : vector<16x256xf32>
    %71 = vector.extract_strided_slice %11 {offsets = [3, 0], sizes = [1, 256], strides = [1, 1]} : vector<4x256xf32> to vector<1x256xf32>
    %72 = vector.broadcast %71 : vector<1x256xf32> to vector<16x256xf32>
    %73 = arith.mulf %67, %72 : vector<16x256xf32>
    %74 = arith.truncf %70 : vector<16x256xf32> to vector<16x256xbf16>
    %75 = arith.truncf %73 : vector<16x256xf32> to vector<16x256xbf16>
    %76 = vector.extract_strided_slice %9 {offsets = [16, 0], sizes = [16, 256], strides = [1, 1]} : vector<32x256xf32> to vector<16x256xf32>
    %77 = arith.truncf %76 : vector<16x256xf32> to vector<16x256xbf16>
    %78 = vector.extract_strided_slice %10 {offsets = [1, 0], sizes = [1, 16], strides = [1, 1]} : vector<2x16xf32> to vector<1x16xf32>
    %79 = vector.extract_strided_slice %74 {offsets = [0, 0], sizes = [16, 128], strides = [1, 1]} : vector<16x256xbf16> to vector<16x128xbf16>
    %80 = vector.extract_strided_slice %75 {offsets = [0, 0], sizes = [16, 128], strides = [1, 1]} : vector<16x256xbf16> to vector<16x128xbf16>
    %cst_19 = arith.constant dense<0.000000e+00> : vector<16x16xf32>
    %81 = tpu.matmul %79, %80, %cst_19 {dimension_numbers = #tpu.dot_dimension_numbers<[1], [1], [0], [0], [0, 0, 1, 0], [], []>} : vector<16x128xbf16>, vector<16x128xbf16>, vector<16x16xf32> -> vector<16x16xf32>
    %cst_20 = arith.constant 0.0883883461 : f32
    %82 = vector.broadcast %cst_20 : f32 to vector<16x16xf32>
    %83 = arith.mulf %81, %82 : vector<16x16xf32>
    %84 = vector.broadcast %78 : vector<1x16xf32> to vector<16x16xf32>
    %85 = arith.addf %83, %84 : vector<16x16xf32>
    %cst_21 = arith.constant dense<0xFF800000> : vector<16xf32>
    %86 = vector.multi_reduction <maximumf>, %85, %cst_21 [1] : vector<16x16xf32> to vector<16xf32>
    %87 = vector.shape_cast %86 : vector<16xf32> to vector<16x1xf32>
    %88 = vector.broadcast %87 : vector<16x1xf32> to vector<16x16xf32>
    %89 = arith.subf %85, %88 : vector<16x16xf32>
    %90 = math.exp %89 : vector<16x16xf32>
    %cst_22 = arith.constant dense<0.000000e+00> : vector<16xf32>
    %91 = vector.multi_reduction <add>, %90, %cst_22 [1] : vector<16x16xf32> to vector<16xf32>
    %92 = vector.shape_cast %91 : vector<16xf32> to vector<16x1xf32>
    %93 = tpu.reciprocal %92 {approx = true} : vector<16x1xf32> -> vector<16x1xf32>
    %94 = vector.broadcast %93 : vector<16x1xf32> to vector<16x16xf32>
    %95 = arith.mulf %90, %94 : vector<16x16xf32>
    %96 = arith.truncf %95 : vector<16x16xf32> to vector<16x16xbf16>
    %97 = vector.extract_strided_slice %77 {offsets = [0, 0], sizes = [16, 128], strides = [1, 1]} : vector<16x256xbf16> to vector<16x128xbf16>
    %cst_23 = arith.constant dense<0.000000e+00> : vector<16x128xf32>
    %98 = tpu.matmul %96, %97, %cst_23 {dimension_numbers = #tpu.dot_dimension_numbers<[1], [0], [0], [1], [0, 0, 1, 1], [], []>} : vector<16x16xbf16>, vector<16x128xbf16>, vector<16x128xf32> -> vector<16x128xf32>
    %99 = vector.extract_strided_slice %74 {offsets = [0, 128], sizes = [16, 128], strides = [1, 1]} : vector<16x256xbf16> to vector<16x128xbf16>
    %100 = vector.extract_strided_slice %75 {offsets = [0, 128], sizes = [16, 128], strides = [1, 1]} : vector<16x256xbf16> to vector<16x128xbf16>
    %cst_24 = arith.constant dense<0.000000e+00> : vector<16x16xf32>
    %101 = tpu.matmul %99, %100, %cst_24 {dimension_numbers = #tpu.dot_dimension_numbers<[1], [1], [0], [0], [0, 0, 1, 0], [], []>} : vector<16x128xbf16>, vector<16x128xbf16>, vector<16x16xf32> -> vector<16x16xf32>
    %cst_25 = arith.constant 0.0883883461 : f32
    %102 = vector.broadcast %cst_25 : f32 to vector<16x16xf32>
    %103 = arith.mulf %101, %102 : vector<16x16xf32>
    %104 = vector.broadcast %78 : vector<1x16xf32> to vector<16x16xf32>
    %105 = arith.addf %103, %104 : vector<16x16xf32>
    %cst_26 = arith.constant dense<0xFF800000> : vector<16xf32>
    %106 = vector.multi_reduction <maximumf>, %105, %cst_26 [1] : vector<16x16xf32> to vector<16xf32>
    %107 = vector.shape_cast %106 : vector<16xf32> to vector<16x1xf32>
    %108 = vector.broadcast %107 : vector<16x1xf32> to vector<16x16xf32>
    %109 = arith.subf %105, %108 : vector<16x16xf32>
    %110 = math.exp %109 : vector<16x16xf32>
    %cst_27 = arith.constant dense<0.000000e+00> : vector<16xf32>
    %111 = vector.multi_reduction <add>, %110, %cst_27 [1] : vector<16x16xf32> to vector<16xf32>
    %112 = vector.shape_cast %111 : vector<16xf32> to vector<16x1xf32>
    %113 = tpu.reciprocal %112 {approx = true} : vector<16x1xf32> -> vector<16x1xf32>
    %114 = vector.broadcast %113 : vector<16x1xf32> to vector<16x16xf32>
    %115 = arith.mulf %110, %114 : vector<16x16xf32>
    %116 = arith.truncf %115 : vector<16x16xf32> to vector<16x16xbf16>
    %117 = vector.extract_strided_slice %77 {offsets = [0, 128], sizes = [16, 128], strides = [1, 1]} : vector<16x256xbf16> to vector<16x128xbf16>
    %cst_28 = arith.constant dense<0.000000e+00> : vector<16x128xf32>
    %118 = tpu.matmul %116, %117, %cst_28 {dimension_numbers = #tpu.dot_dimension_numbers<[1], [0], [0], [1], [0, 0, 1, 1], [], []>} : vector<16x16xbf16>, vector<16x128xbf16>, vector<16x128xf32> -> vector<16x128xf32>
    %119 = tpu.concatenate %98, %118 in 1 : vector<16x128xf32>, vector<16x128xf32> -> vector<16x256xf32>
    %120 = tpu.concatenate %65, %119 in 0 : vector<16x256xf32>, vector<16x256xf32> -> vector<32x256xf32>
    %c0_29 = arith.constant 0 : index
    %c0_30 = arith.constant 0 : index
    %121 = vector.load %arg10[%c0_29, %c0_30] : memref<6x256xf32, #tpu.memory_space<vmem>>, vector<6x256xf32>
    %122 = vector.extract_strided_slice %121 {offsets = [0, 0], sizes = [1, 256], strides = [1, 1]} : vector<6x256xf32> to vector<1x256xf32>
    %123 = vector.extract_strided_slice %121 {offsets = [1, 0], sizes = [1, 256], strides = [1, 1]} : vector<6x256xf32> to vector<1x256xf32>
    %124 = vector.extract_strided_slice %121 {offsets = [2, 0], sizes = [1, 256], strides = [1, 1]} : vector<6x256xf32> to vector<1x256xf32>
    %125 = vector.extract_strided_slice %121 {offsets = [3, 0], sizes = [1, 256], strides = [1, 1]} : vector<6x256xf32> to vector<1x256xf32>
    %126 = vector.extract_strided_slice %121 {offsets = [4, 0], sizes = [1, 256], strides = [1, 1]} : vector<6x256xf32> to vector<1x256xf32>
    %127 = vector.extract_strided_slice %121 {offsets = [5, 0], sizes = [1, 256], strides = [1, 1]} : vector<6x256xf32> to vector<1x256xf32>
    %128 = arith.truncf %120 : vector<32x256xf32> to vector<32x256xbf16>
    %c0_31 = arith.constant 0 : index
    %c0_32 = arith.constant 0 : index
    %129 = vector.load %arg6[%c0_31, %c0_32] : memref<256x256xbf16, #tpu.memory_space<vmem>>, vector<256x256xbf16>
    %cst_33 = arith.constant dense<0.000000e+00> : vector<32x256xf32>
    %130 = tpu.matmul %128, %129, %cst_33 {dimension_numbers = #tpu.dot_dimension_numbers<[1], [0], [0], [1], [0, 0, 1, 1], [], []>} : vector<32x256xbf16>, vector<256x256xbf16>, vector<32x256xf32> -> vector<32x256xf32>
    %131 = vector.broadcast %122 : vector<1x256xf32> to vector<32x256xf32>
    %132 = arith.addf %130, %131 : vector<32x256xf32>
    %133 = arith.addf %132, %0 : vector<32x256xf32>
    %cst_34 = arith.constant dense<0.000000e+00> : vector<32xf32>
    %134 = vector.multi_reduction <add>, %133, %cst_34 [1] : vector<32x256xf32> to vector<32xf32>
    %135 = vector.shape_cast %134 : vector<32xf32> to vector<32x1xf32>
    %cst_35 = arith.constant 2.560000e+02 : f32
    %136 = vector.broadcast %cst_35 : f32 to vector<32x1xf32>
    %137 = arith.divf %135, %136 : vector<32x1xf32>
    %138 = vector.broadcast %137 : vector<32x1xf32> to vector<32x256xf32>
    %139 = arith.subf %133, %138 : vector<32x256xf32>
    %140 = arith.mulf %139, %139 : vector<32x256xf32>
    %cst_36 = arith.constant dense<0.000000e+00> : vector<32xf32>
    %141 = vector.multi_reduction <add>, %140, %cst_36 [1] : vector<32x256xf32> to vector<32xf32>
    %142 = vector.shape_cast %141 : vector<32xf32> to vector<32x1xf32>
    %cst_37 = arith.constant 2.560000e+02 : f32
    %143 = vector.broadcast %cst_37 : f32 to vector<32x1xf32>
    %144 = arith.divf %142, %143 : vector<32x1xf32>
    %145 = vector.broadcast %137 : vector<32x1xf32> to vector<32x256xf32>
    %146 = arith.subf %133, %145 : vector<32x256xf32>
    %cst_38 = arith.constant 9.99999996E-13 : f32
    %147 = vector.broadcast %cst_38 : f32 to vector<32x1xf32>
    %148 = arith.addf %144, %147 : vector<32x1xf32>
    %149 = math.rsqrt %148 : vector<32x1xf32>
    %150 = vector.broadcast %149 : vector<32x1xf32> to vector<32x256xf32>
    %151 = arith.mulf %146, %150 : vector<32x256xf32>
    %152 = vector.broadcast %123 : vector<1x256xf32> to vector<32x256xf32>
    %153 = arith.mulf %151, %152 : vector<32x256xf32>
    %154 = vector.broadcast %124 : vector<1x256xf32> to vector<32x256xf32>
    %155 = arith.addf %153, %154 : vector<32x256xf32>
    %156 = arith.truncf %155 : vector<32x256xf32> to vector<32x256xbf16>
    %c0_39 = arith.constant 0 : index
    %c0_40 = arith.constant 0 : index
    %157 = vector.load %arg7[%c0_39, %c0_40] : memref<256x512xbf16, #tpu.memory_space<vmem>>, vector<256x512xbf16>
    %cst_41 = arith.constant dense<0.000000e+00> : vector<32x512xf32>
    %158 = tpu.matmul %156, %157, %cst_41 {dimension_numbers = #tpu.dot_dimension_numbers<[1], [0], [0], [1], [0, 0, 1, 1], [], []>} : vector<32x256xbf16>, vector<256x512xbf16>, vector<32x512xf32> -> vector<32x512xf32>
    %c0_42 = arith.constant 0 : index
    %c0_43 = arith.constant 0 : index
    %159 = vector.load %arg8[%c0_42, %c0_43] : memref<1x512xf32, #tpu.memory_space<vmem>>, vector<1x512xf32>
    %160 = vector.broadcast %159 : vector<1x512xf32> to vector<32x512xf32>
    %161 = arith.addf %158, %160 : vector<32x512xf32>
    %cst_44 = arith.constant 5.000000e-01 : f32
    %162 = vector.broadcast %cst_44 : f32 to vector<32x512xf32>
    %163 = arith.mulf %162, %161 : vector<32x512xf32>
    %cst_45 = arith.constant 0.707106769 : f32
    %164 = vector.broadcast %cst_45 : f32 to vector<32x512xf32>
    %165 = arith.mulf %161, %164 : vector<32x512xf32>
    %166 = math.erf %165 : vector<32x512xf32>
    %cst_46 = arith.constant 1.000000e+00 : f32
    %167 = vector.broadcast %cst_46 : f32 to vector<32x512xf32>
    %168 = arith.addf %167, %166 : vector<32x512xf32>
    %169 = arith.mulf %163, %168 : vector<32x512xf32>
    %170 = arith.truncf %169 : vector<32x512xf32> to vector<32x512xbf16>
    %c0_47 = arith.constant 0 : index
    %c0_48 = arith.constant 0 : index
    %171 = vector.load %arg9[%c0_47, %c0_48] : memref<512x256xbf16, #tpu.memory_space<vmem>>, vector<512x256xbf16>
    %cst_49 = arith.constant dense<0.000000e+00> : vector<32x256xf32>
    %172 = tpu.matmul %170, %171, %cst_49 {dimension_numbers = #tpu.dot_dimension_numbers<[1], [0], [0], [1], [0, 0, 1, 1], [], []>} : vector<32x512xbf16>, vector<512x256xbf16>, vector<32x256xf32> -> vector<32x256xf32>
    %173 = vector.broadcast %125 : vector<1x256xf32> to vector<32x256xf32>
    %174 = arith.addf %172, %173 : vector<32x256xf32>
    %175 = arith.addf %174, %155 : vector<32x256xf32>
    %cst_50 = arith.constant dense<0.000000e+00> : vector<32xf32>
    %176 = vector.multi_reduction <add>, %175, %cst_50 [1] : vector<32x256xf32> to vector<32xf32>
    %177 = vector.shape_cast %176 : vector<32xf32> to vector<32x1xf32>
    %cst_51 = arith.constant 2.560000e+02 : f32
    %178 = vector.broadcast %cst_51 : f32 to vector<32x1xf32>
    %179 = arith.divf %177, %178 : vector<32x1xf32>
    %180 = vector.broadcast %179 : vector<32x1xf32> to vector<32x256xf32>
    %181 = arith.subf %175, %180 : vector<32x256xf32>
    %182 = arith.mulf %181, %181 : vector<32x256xf32>
    %cst_52 = arith.constant dense<0.000000e+00> : vector<32xf32>
    %183 = vector.multi_reduction <add>, %182, %cst_52 [1] : vector<32x256xf32> to vector<32xf32>
    %184 = vector.shape_cast %183 : vector<32xf32> to vector<32x1xf32>
    %cst_53 = arith.constant 2.560000e+02 : f32
    %185 = vector.broadcast %cst_53 : f32 to vector<32x1xf32>
    %186 = arith.divf %184, %185 : vector<32x1xf32>
    %187 = vector.broadcast %179 : vector<32x1xf32> to vector<32x256xf32>
    %188 = arith.subf %175, %187 : vector<32x256xf32>
    %cst_54 = arith.constant 9.99999996E-13 : f32
    %189 = vector.broadcast %cst_54 : f32 to vector<32x1xf32>
    %190 = arith.addf %186, %189 : vector<32x1xf32>
    %191 = math.rsqrt %190 : vector<32x1xf32>
    %192 = vector.broadcast %191 : vector<32x1xf32> to vector<32x256xf32>
    %193 = arith.mulf %188, %192 : vector<32x256xf32>
    %194 = vector.broadcast %126 : vector<1x256xf32> to vector<32x256xf32>
    %195 = arith.mulf %193, %194 : vector<32x256xf32>
    %196 = vector.broadcast %127 : vector<1x256xf32> to vector<32x256xf32>
    %197 = arith.addf %195, %196 : vector<32x256xf32>
    %c0_55 = arith.constant 0 : index
    %c0_56 = arith.constant 0 : index
    %198 = vector.load %arg11[%c0_55, %c0_56] : memref<32x256xf32, #tpu.memory_space<vmem>>, vector<32x256xf32>
    tpu.vector_store %arg11[%c0_55, %c0_56], %197 {strides = array<i32>} : memref<32x256xf32, #tpu.memory_space<vmem>>, vector<32x256xf32>,
    return
  }
  func.func @transform_0(%arg0: i32) -> (i32, i32) {
    %c0_i32 = arith.constant 0 : i32
    %c0_i32_0 = arith.constant 0 : i32
    %c0_i32_1 = arith.constant 0 : i32
    return %c0_i32, %c0_i32_0 : i32, i32
  }
  func.func @transform_1(%arg0: i32) -> (i32, i32) {
    %c0_i32 = arith.constant 0 : i32
    %c0_i32_0 = arith.constant 0 : i32
    %c0_i32_1 = arith.constant 0 : i32
    return %c0_i32, %c0_i32_0 : i32, i32
  }
  func.func @transform_2(%arg0: i32) -> (i32, i32) {
    %c0_i32 = arith.constant 0 : i32
    %c0_i32_0 = arith.constant 0 : i32
    %c0_i32_1 = arith.constant 0 : i32
    return %c0_i32, %c0_i32_0 : i32, i32
  }
  func.func @transform_3(%arg0: i32) -> (i32, i32) {
    %c0_i32 = arith.constant 0 : i32
    %c0_i32_0 = arith.constant 0 : i32
    %c0_i32_1 = arith.constant 0 : i32
    return %c0_i32, %c0_i32_0 : i32, i32
  }
  func.func @transform_4(%arg0: i32) -> (i32, i32) {
    %c0_i32 = arith.constant 0 : i32
    %c0_i32_0 = arith.constant 0 : i32
    %c0_i32_1 = arith.constant 0 : i32
    return %c0_i32, %c0_i32_0 : i32, i32
  }
  func.func @transform_5(%arg0: i32) -> (i32, i32) {
    %c0_i32 = arith.constant 0 : i32
    %c0_i32_0 = arith.constant 0 : i32
    %c0_i32_1 = arith.constant 0 : i32
    return %c0_i32, %c0_i32_0 : i32, i32
  }
  func.func @transform_6(%arg0: i32) -> (i32, i32) {
    %c0_i32 = arith.constant 0 : i32
    %c0_i32_0 = arith.constant 0 : i32
    %c0_i32_1 = arith.constant 0 : i32
    return %c0_i32, %c0_i32_0 : i32, i32
  }
  func.func @transform_7(%arg0: i32) -> (i32, i32) {
    %c0_i32 = arith.constant 0 : i32
    %c0_i32_0 = arith.constant 0 : i32
    %c0_i32_1 = arith.constant 0 : i32
    return %c0_i32, %c0_i32_0 : i32, i32
  }
  func.func @transform_8(%arg0: i32) -> (i32, i32) {
    %c0_i32 = arith.constant 0 : i32
    %c0_i32_0 = arith.constant 0 : i32
    %c0_i32_1 = arith.constant 0 : i32
    return %c0_i32, %c0_i32_0 : i32, i32
  }
  func.func @transform_9(%arg0: i32) -> (i32, i32) {
    %c0_i32 = arith.constant 0 : i32
    %c0_i32_0 = arith.constant 0 : i32
    %c0_i32_1 = arith.constant 0 : i32
    return %c0_i32, %c0_i32_0 : i32, i32
  }
  func.func @transform_10(%arg0: i32) -> (i32, i32) {
    %c0_i32 = arith.constant 0 : i32
    %c0_i32_0 = arith.constant 0 : i32
    %c0_i32_1 = arith.constant 0 : i32
    return %c0_i32, %c0_i32_0 : i32, i32
  }
}

</mosaic_0001>

<llo_original>
// kernel: tpu_custom_call.1
$region0: #{tpu_custom_call.1}
  #allocation0 [shape = 'u32[]', space=smem, size = 0x4, offset = 0x4, fixed_abs, tag = 'smem constant byte address 0x4 - core index']
  #allocation1 [shape = 'u32[144,128]{1,0:T(1,128)}', space=vmem, size = 0x12000, scoped, tag = 'internal scratch']
  %s0 = inlined_call_operand.hbm [shape: f32[32,256], index: 0, kind: input, shape index: {}]
  %s1 = inlined_call_operand.hbm [shape: f32[2,16], index: 1, kind: input, shape index: {}]
  %s2 = inlined_call_operand.hbm [shape: f32[4,256], index: 2, kind: input, shape index: {}]
  %s3 = inlined_call_operand.hbm [shape: bf16[256,768], index: 3, kind: input, shape index: {}]
  %s4 = inlined_call_operand.vmem [shape: f32[1,768], index: 4, kind: input, shape index: {}]
  %s5 = inlined_call_operand.hbm [shape: bf16[256,256], index: 5, kind: input, shape index: {}]
  %s6 = inlined_call_operand.hbm [shape: bf16[256,512], index: 6, kind: input, shape index: {}]
  %s7 = inlined_call_operand.vmem [shape: f32[1,512], index: 7, kind: input, shape index: {}]
  %s8 = inlined_call_operand.hbm [shape: bf16[512,256], index: 8, kind: input, shape index: {}]
  %s9 = inlined_call_operand.vmem [shape: f32[6,256], index: 9, kind: input, shape index: {}]
  %s10 = inlined_call_operand.hbm [shape: f32[32,256], index: 10, kind: output, shape index: {}]
  %s11 = sld [smem:[#allocation0]]
  $region78: #{tpu_custom_call.1} parent=0
    _
  %s13 = ssub.s32 1, %s11
  %s14 = scalar_select 0, %s13, %s11
  $region1: #{tpu_custom_call.1} parent=0
    #allocation2 [shape = 'u8[32768]{0}', space=vmem, size = 0x8000, scoped, tag = 'input window, operand 0, single buffered']
    #allocation3 [shape = 's32[1]{0}', space=sflag, size = 0x4, scoped, tag = 'scoped memory for tpu_custom_call.1']
    #allocation4 [shape = 's32[1]{0}', space=sflag, size = 0x4, scoped, tag = 'scoped memory for tpu_custom_call.1']
    #allocation5 [shape = 'u8[1024]{0}', space=vmem, size = 0x400, scoped, tag = 'input window, operand 1, single buffered']
    #allocation6 [shape = 's32[1]{0}', space=sflag, size = 0x4, scoped, tag = 'scoped memory for tpu_custom_call.1']
    #allocation7 [shape = 'u8[4096]{0}', space=vmem, size = 0x1000, scoped, tag = 'input window, operand 2, single buffered']
    #allocation8 [shape = 'u8[393216]{0}', space=vmem, size = 0x60000, scoped, tag = 'input window, operand 3, single buffered']
    #allocation9 [shape = 's32[1]{0}', space=sflag, size = 0x4, scoped, tag = 'scoped memory for tpu_custom_call.1']
    #allocation10 [shape = 'u8[131072]{0}', space=vmem, size = 0x20000, scoped, tag = 'input window, operand 5, single buffered']
    #allocation11 [shape = 'u8[262144]{0}', space=vmem, size = 0x40000, scoped, tag = 'input window, operand 6, single buffered']
    #allocation12 [shape = 's32[1]{0}', space=sflag, size = 0x4, scoped, tag = 'scoped memory for tpu_custom_call.1']
    #allocation13 [shape = 'u8[262144]{0}', space=vmem, size = 0x40000, scoped, tag = 'input window, operand 8, single buffered']
    #allocation14 [shape = 'u8[32768]{0}', space=vmem, size = 0x8000, scoped, tag = 'output window, operand 0, single buffered']
    %15 = vsyncpa [#allocation3], 0
    %16 = vsyncpa [#allocation6], 0
    %17 = vsyncpa [#allocation9], 0
    %18 = vsyncpa [#allocation12], 0
    %19 = vsyncpa [#allocation4], 0
    // Predicated region
    $region2: #{tpu_custom_call.1} parent=1 // pred_check
      _
    $region3: #{tpu_custom_call.1} parent=1 // pred_check_branch
      %21 = sbr.rel (0) target = $region5
    $region4: #{tpu_custom_call.1} parent=1 // pred_region
      %s23 = ssub.s32 1024, 1024
      %24 = vsyncadd [#allocation3], %s23
      %s25 = sshll.u32 [#allocation2], 4
      %s26 = int_to_ptr.vmem [resolvable:$true] %s25
      %31 = dma.hbm_to_vmem [thread:$0]  %s0, 1024, %s26, [#allocation3], 256, 256, 16
    $region5: #{tpu_custom_call.1} parent=1 // pred_fallthru
      _
    // Predicated region
    $region6: #{tpu_custom_call.1} parent=1 // pred_check
      _
    $region7: #{tpu_custom_call.1} parent=1 // pred_check_branch
      %33 = sbr.rel (0) target = $region9
    $region8: #{tpu_custom_call.1} parent=1 // pred_region
      %s35 = ssub.s32 32, 32
      %36 = vsyncadd [#allocation6], %s35
      %s38 = sshll.u32 [#allocation5], 4
      %s39 = int_to_ptr.vmem [resolvable:$true] %s38
      %41 = dma.hbm_to_vmem [thread:$0]  %s1, 32, %s39, [#allocation6]
    $region9: #{tpu_custom_call.1} parent=1 // pred_fallthru
      _
    // Predicated region
    $region10: #{tpu_custom_call.1} parent=1 // pred_check
      _
    $region11: #{tpu_custom_call.1} parent=1 // pred_check_branch
      %43 = sbr.rel (0) target = $region13
    $region12: #{tpu_custom_call.1} parent=1 // pred_region
      %s45 = ssub.s32 128, 128
      %46 = vsyncadd [#allocation6], %s45
      %s48 = sshll.u32 [#allocation7], 4
      %s49 = int_to_ptr.vmem [resolvable:$true] %s48
      %51 = dma.hbm_to_vmem [thread:$0]  %s2, 128, %s49, [#allocation6]
    $region13: #{tpu_custom_call.1} parent=1 // pred_fallthru
      _
    // Predicated region
    $region14: #{tpu_custom_call.1} parent=1 // pred_check
      _
    $region15: #{tpu_custom_call.1} parent=1 // pred_check_branch
      %53 = sbr.rel (0) target = $region17
    $region16: #{tpu_custom_call.1} parent=1 // pred_region
      %s55 = ssub.s32 12288, 12288
      %56 = vsyncadd [#allocation9], %s55
      %s57 = sshll.u32 [#allocation8], 4
      %s58 = int_to_ptr.vmem [resolvable:$true] %s57
      %63 = dma.hbm_to_vmem [thread:$0]  %s3, 12288, %s58, [#allocation9], 384, 384, 24
    $region17: #{tpu_custom_call.1} parent=1 // pred_fallthru
      _
    // Predicated region
    $region18: #{tpu_custom_call.1} parent=1 // pred_check
      _
    $region19: #{tpu_custom_call.1} parent=1 // pred_check_branch
      %65 = sbr.rel (0) target = $region21
    $region20: #{tpu_custom_call.1} parent=1 // pred_region
      _
    $region21: #{tpu_custom_call.1} parent=1 // pred_fallthru
      _
    // Predicated region
    $region22: #{tpu_custom_call.1} parent=1 // pred_check
      _
    $region23: #{tpu_custom_call.1} parent=1 // pred_check_branch
      %67 = sbr.rel (0) target = $region25
    $region24: #{tpu_custom_call.1} parent=1 // pred_region
      %s69 = ssub.s32 4096, 4096
      %70 = vsyncadd [#allocation9], %s69
      %s71 = sshll.u32 [#allocation10], 4
      %s72 = int_to_ptr.vmem [resolvable:$true] %s71
      %77 = dma.hbm_to_vmem [thread:$0]  %s5, 4096, %s72, [#allocation9], 128, 128, 8
    $region25: #{tpu_custom_call.1} parent=1 // pred_fallthru
      _
    // Predicated region
    $region26: #{tpu_custom_call.1} parent=1 // pred_check
      _
    $region27: #{tpu_custom_call.1} parent=1 // pred_check_branch
      %79 = sbr.rel (0) target = $region29
    $region28: #{tpu_custom_call.1} parent=1 // pred_region
      %s81 = ssub.s32 8192, 8192
      %82 = vsyncadd [#allocation12], %s81
      %s83 = sshll.u32 [#allocation11], 4
      %s84 = int_to_ptr.vmem [resolvable:$true] %s83
      %89 = dma.hbm_to_vmem [thread:$0]  %s6, 8192, %s84, [#allocation12], 256, 256, 16
    $region29: #{tpu_custom_call.1} parent=1 // pred_fallthru
      _
    // Predicated region
    $region30: #{tpu_custom_call.1} parent=1 // pred_check
      _
    $region31: #{tpu_custom_call.1} parent=1 // pred_check_branch
      %91 = sbr.rel (0) target = $region33
    $region32: #{tpu_custom_call.1} parent=1 // pred_region
      _
    $region33: #{tpu_custom_call.1} parent=1 // pred_fallthru
      _
    // Predicated region
    $region34: #{tpu_custom_call.1} parent=1 // pred_check
      _
    $region35: #{tpu_custom_call.1} parent=1 // pred_check_branch
      %93 = sbr.rel (0) target = $region37
    $region36: #{tpu_custom_call.1} parent=1 // pred_region
      %s95 = ssub.s32 8192, 8192
      %96 = vsyncadd [#allocation12], %s95
      %s97 = sshll.u32 [#allocation13], 4
      %s98 = int_to_ptr.vmem [resolvable:$true] %s97
      %103 = dma.hbm_to_vmem [thread:$0]  %s8, 8192, %s98, [#allocation12], 128, 128, 8
    $region37: #{tpu_custom_call.1} parent=1 // pred_fallthru
      _
    // Predicated region
    $region38: #{tpu_custom_call.1} parent=1 // pred_check
      _
    $region39: #{tpu_custom_call.1} parent=1 // pred_check_branch
      %105 = sbr.rel (0) target = $region41
    $region40: #{tpu_custom_call.1} parent=1 // pred_region
      _
    $region41: #{tpu_custom_call.1} parent=1 // pred_fallthru
      _
    // Predicated region
    $region42: #{tpu_custom_call.1} parent=1 // pred_check
      _
    $region43: #{tpu_custom_call.1} parent=1 // pred_check_branch
      %107 = sbr.rel (0) target = $region45
    $region44: #{tpu_custom_call.1} parent=1 // pred_region
      %108 = dma.done [#allocation3], 1024
    $region45: #{tpu_custom_call.1} parent=1 // pred_fallthru
      _
    // Predicated region
    $region46: #{tpu_custom_call.1} parent=1 // pred_check
      _
    $region47: #{tpu_custom_call.1} parent=1 // pred_check_branch
      %110 = sbr.rel (0) target = $region49
    $region48: #{tpu_custom_call.1} parent=1 // pred_region
      %111 = dma.done [#allocation6], 32
    $region49: #{tpu_custom_call.1} parent=1 // pred_fallthru
      _
    // Predicated region
    $region50: #{tpu_custom_call.1} parent=1 // pred_check
      _
    $region51: #{tpu_custom_call.1} parent=1 // pred_check_branch
      %113 = sbr.rel (0) target = $region53
    $region52: #{tpu_custom_call.1} parent=1 // pred_region
      %114 = dma.done [#allocation6], 128
    $region53: #{tpu_custom_call.1} parent=1 // pred_fallthru
      _
    // Predicated region
    $region54: #{tpu_custom_call.1} parent=1 // pred_check
      _
    $region55: #{tpu_custom_call.1} parent=1 // pred_check_branch
      %116 = sbr.rel (0) target = $region57
    $region56: #{tpu_custom_call.1} parent=1 // pred_region
      %117 = dma.done [#allocation9], 12288
    $region57: #{tpu_custom_call.1} parent=1 // pred_fallthru
      _
    // Predicated region
    $region58: #{tpu_custom_call.1} parent=1 // pred_check
      _
    $region59: #{tpu_custom_call.1} parent=1 // pred_check_branch
      %119 = sbr.rel (0) target = $region61
    $region60: #{tpu_custom_call.1} parent=1 // pred_region
      %120 = dma.done [#allocation9], 4096
    $region61: #{tpu_custom_call.1} parent=1 // pred_fallthru
      _
    // Predicated region
    $region62: #{tpu_custom_call.1} parent=1 // pred_check
      _
    $region63: #{tpu_custom_call.1} parent=1 // pred_check_branch
      %122 = sbr.rel (0) target = $region65
    $region64: #{tpu_custom_call.1} parent=1 // pred_region
      %123 = dma.done [#allocation12], 8192
    $region65: #{tpu_custom_call.1} parent=1 // pred_fallthru
      _
    // Predicated region
    $region66: #{tpu_custom_call.1} parent=1 // pred_check
      _
    $region67: #{tpu_custom_call.1} parent=1 // pred_check_branch
      %125 = sbr.rel (0) target = $region69
    $region68: #{tpu_custom_call.1} parent=1 // pred_region
      %126 = dma.done [#allocation12], 8192
    $region69: #{tpu_custom_call.1} parent=1 // pred_fallthru
      _
    %v128 = vld [vmem:[#allocation2] sm:$0xff]
    %v129 = vld [vmem:[#allocation2 + $0x8] sm:$0xff]
    %v130 = vld [vmem:[#allocation2 + $0x10] sm:$0xff]
    %v131 = vld [vmem:[#allocation2 + $0x18] sm:$0xff]
    %v132 = vld [vmem:[#allocation2 + $0x20] sm:$0xff]
    %v133 = vld [vmem:[#allocation2 + $0x28] sm:$0xff]
    %v134 = vld [vmem:[#allocation2 + $0x30] sm:$0xff]
    %v135 = vld [vmem:[#allocation2 + $0x38] sm:$0xff]
    %v136 = vpack.c.bf16 %v130, %v128
    %v137 = vpack.c.bf16 %v131, %v129
    %v138 = vpack.c.bf16 %v134, %v132
    %v139 = vpack.c.bf16 %v135, %v133
    %v140 = vld [vmem:[#allocation8] sm:$0xff]
    %v141 = vld [vmem:[#allocation8 + $0x8] sm:$0xff]
    %v142 = vld [vmem:[#allocation8 + $0x10] sm:$0xff]
    %v143 = vld [vmem:[#allocation8 + $0x18] sm:$0xff]
    %v144 = vld [vmem:[#allocation8 + $0x20] sm:$0xff]
    %v145 = vld [vmem:[#allocation8 + $0x28] sm:$0xff]
    %v146 = vld [vmem:[#allocation8 + $0x30] sm:$0xff]
    %v147 = vld [vmem:[#allocation8 + $0x38] sm:$0xff]
    %v148 = vld [vmem:[#allocation8 + $0x40] sm:$0xff]
    %v149 = vld [vmem:[#allocation8 + $0x48] sm:$0xff]
    %v150 = vld [vmem:[#allocation8 + $0x50] sm:$0xff]
    %v151 = vld [vmem:[#allocation8 + $0x58] sm:$0xff]
    %v152 = vld [vmem:[#allocation8 + $0x60] sm:$0xff]
    %v153 = vld [vmem:[#allocation8 + $0x68] sm:$0xff]
    %v154 = vld [vmem:[#allocation8 + $0x70] sm:$0xff]
    %v155 = vld [vmem:[#allocation8 + $0x78] sm:$0xff]
    %v156 = vld [vmem:[#allocation8 + $0x80] sm:$0xff]
    %v157 = vld [vmem:[#allocation8 + $0x88] sm:$0xff]
    %v158 = vld [vmem:[#allocation8 + $0x90] sm:$0xff]
    %v159 = vld [vmem:[#allocation8 + $0x98] sm:$0xff]
    %v160 = vld [vmem:[#allocation8 + $0xa0] sm:$0xff]
    %v161 = vld [vmem:[#allocation8 + $0xa8] sm:$0xff]
    %v162 = vld [vmem:[#allocation8 + $0xb0] sm:$0xff]
    %v163 = vld [vmem:[#allocation8 + $0xb8] sm:$0xff]
    %v164 = vld [vmem:[#allocation8 + $0xc0] sm:$0xff]
    %v165 = vld [vmem:[#allocation8 + $0xc8] sm:$0xff]
    %v166 = vld [vmem:[#allocation8 + $0xd0] sm:$0xff]
    %v167 = vld [vmem:[#allocation8 + $0xd8] sm:$0xff]
    %v168 = vld [vmem:[#allocation8 + $0xe0] sm:$0xff]
    %v169 = vld [vmem:[#allocation8 + $0xe8] sm:$0xff]
    %v170 = vld [vmem:[#allocation8 + $0xf0] sm:$0xff]
    %v171 = vld [vmem:[#allocation8 + $0xf8] sm:$0xff]
    %v172 = vld [vmem:[#allocation8 + $0x100] sm:$0xff]
    %v173 = vld [vmem:[#allocation8 + $0x108] sm:$0xff]
    %v174 = vld [vmem:[#allocation8 + $0x110] sm:$0xff]
    %v175 = vld [vmem:[#allocation8 + $0x118] sm:$0xff]
    %v176 = vld [vmem:[#allocation8 + $0x120] sm:$0xff]
    %v177 = vld [vmem:[#allocation8 + $0x128] sm:$0xff]
    %v178 = vld [vmem:[#allocation8 + $0x130] sm:$0xff]
    %v179 = vld [vmem:[#allocation8 + $0x138] sm:$0xff]
    %v180 = vld [vmem:[#allocation8 + $0x140] sm:$0xff]
    %v181 = vld [vmem:[#allocation8 + $0x148] sm:$0xff]
    %v182 = vld [vmem:[#allocation8 + $0x150] sm:$0xff]
    %v183 = vld [vmem:[#allocation8 + $0x158] sm:$0xff]
    %v184 = vld [vmem:[#allocation8 + $0x160] sm:$0xff]
    %v185 = vld [vmem:[#allocation8 + $0x168] sm:$0xff]
    %v186 = vld [vmem:[#allocation8 + $0x170] sm:$0xff]
    %v187 = vld [vmem:[#allocation8 + $0x178] sm:$0xff]
    %v188 = vld [vmem:[#allocation8 + $0x180] sm:$0xff]
    %v189 = vld [vmem:[#allocation8 + $0x188] sm:$0xff]
    %v190 = vld [vmem:[#allocation8 + $0x190] sm:$0xff]
    %v191 = vld [vmem:[#allocation8 + $0x198] sm:$0xff]
    %v192 = vld [vmem:[#allocation8 + $0x1a0] sm:$0xff]
    %v193 = vld [vmem:[#allocation8 + $0x1a8] sm:$0xff]
    %v194 = vld [vmem:[#allocation8 + $0x1b0] sm:$0xff]
    %v195 = vld [vmem:[#allocation8 + $0x1b8] sm:$0xff]
    %v196 = vld [vmem:[#allocation8 + $0x1c0] sm:$0xff]
    %v197 = vld [vmem:[#allocation8 + $0x1c8] sm:$0xff]
    %v198 = vld [vmem:[#allocation8 + $0x1d0] sm:$0xff]
    %v199 = vld [vmem:[#allocation8 + $0x1d8] sm:$0xff]
    %v200 = vld [vmem:[#allocation8 + $0x1e0] sm:$0xff]
    %v201 = vld [vmem:[#allocation8 + $0x1e8] sm:$0xff]
    %v202 = vld [vmem:[#allocation8 + $0x1f0] sm:$0xff]
    %v203 = vld [vmem:[#allocation8 + $0x1f8] sm:$0xff]
    %v204 = vld [vmem:[#allocation8 + $0x200] sm:$0xff]
    %v205 = vld [vmem:[#allocation8 + $0x208] sm:$0xff]
    %v206 = vld [vmem:[#allocation8 + $0x210] sm:$0xff]
    %v207 = vld [vmem:[#allocation8 + $0x218] sm:$0xff]
    %v208 = vld [vmem:[#allocation8 + $0x220] sm:$0xff]
    %v209 = vld [vmem:[#allocation8 + $0x228] sm:$0xff]
    %v210 = vld [vmem:[#allocation8 + $0x230] sm:$0xff]
    %v211 = vld [vmem:[#allocation8 + $0x238] sm:$0xff]
    %v212 = vld [vmem:[#allocation8 + $0x240] sm:$0xff]
    %v213 = vld [vmem:[#allocation8 + $0x248] sm:$0xff]
    %v214 = vld [vmem:[#allocation8 + $0x250] sm:$0xff]
    %v215 = vld [vmem:[#allocation8 + $0x258] sm:$0xff]
    %v216 = vld [vmem:[#allocation8 + $0x260] sm:$0xff]
    %v217 = vld [vmem:[#allocation8 + $0x268] sm:$0xff]
    %v218 = vld [vmem:[#allocation8 + $0x270] sm:$0xff]
    %v219 = vld [vmem:[#allocation8 + $0x278] sm:$0xff]
    %v220 = vld [vmem:[#allocation8 + $0x280] sm:$0xff]
    %v221 = vld [vmem:[#allocation8 + $0x288] sm:$0xff]
    %v222 = vld [vmem:[#allocation8 + $0x290] sm:$0xff]
    %v223 = vld [vmem:[#allocation8 + $0x298] sm:$0xff]
    %v224 = vld [vmem:[#allocation8 + $0x2a0] sm:$0xff]
    %v225 = vld [vmem:[#allocation8 + $0x2a8] sm:$0xff]
    %v226 = vld [vmem:[#allocation8 + $0x2b0] sm:$0xff]
    %v227 = vld [vmem:[#allocation8 + $0x2b8] sm:$0xff]
    %v228 = vld [vmem:[#allocation8 + $0x2c0] sm:$0xff]
    %v229 = vld [vmem:[#allocation8 + $0x2c8] sm:$0xff]
    %v230 = vld [vmem:[#allocation8 + $0x2d0] sm:$0xff]
    %v231 = vld [vmem:[#allocation8 + $0x2d8] sm:$0xff]
    %v232 = vld [vmem:[#allocation8 + $0x2e0] sm:$0xff]
    %v233 = vld [vmem:[#allocation8 + $0x2e8] sm:$0xff]
    %v234 = vld [vmem:[#allocation8 + $0x2f0] sm:$0xff]
    %v235 = vld [vmem:[#allocation8 + $0x2f8] sm:$0xff]
    %v236 = vld [vmem:[%s4] sm:$0x3f]
    %v238 = vlaneseq
    %v239 = vshrl.u32 %v238, 7
    %v240 = vsub.s32 0, %v239
    %v241 = vrot.slane %v236, %v240
    %v242 = vlaneseq
    %v243 = vshrl.u32 %v242, 7
    %v244 = vsub.s32 1, %v243
    %v245 = vrot.slane %v236, %v244
    %v246 = vlaneseq
    %v247 = vshrl.u32 %v246, 7
    %v248 = vsub.s32 2, %v247
    %v249 = vrot.slane %v236, %v248
    %v250 = vlaneseq
    %v251 = vshrl.u32 %v250, 7
    %v252 = vsub.s32 3, %v251
    %v253 = vrot.slane %v236, %v252
    %v254 = vlaneseq
    %v255 = vshrl.u32 %v254, 7
    %v256 = vsub.s32 4, %v255
    %v257 = vrot.slane %v236, %v256
    %v258 = vlaneseq
    %v259 = vshrl.u32 %v258, 7
    %v260 = vsub.s32 5, %v259
    %v261 = vrot.slane %v236, %v260
    %v364 = vunpack.c.l.b16 %v140
    %v365 = vunpack.c.h.b16 %v140
    %v366 = vunpack.c.l.b16 %v141
    %v367 = vunpack.c.h.b16 %v141
    %v368 = vunpack.c.l.b16 %v142
    %v369 = vunpack.c.h.b16 %v142
    %v370 = vunpack.c.l.b16 %v143
    %v371 = vunpack.c.h.b16 %v143
    %v372 = vunpack.c.l.b16 %v144
    %v373 = vunpack.c.h.b16 %v144
    %v374 = vunpack.c.l.b16 %v145
    %v375 = vunpack.c.h.b16 %v145
    %v376 = vunpack.c.l.b16 %v146
    %v377 = vunpack.c.h.b16 %v146
    %v378 = vunpack.c.l.b16 %v147
    %v379 = vunpack.c.h.b16 %v147
    %v380 = vunpack.c.l.b16 %v148
    %v381 = vunpack.c.h.b16 %v148
    %v382 = vunpack.c.l.b16 %v149
    %v383 = vunpack.c.h.b16 %v149
    %v384 = vunpack.c.l.b16 %v150
    %v385 = vunpack.c.h.b16 %v150
    %v386 = vunpack.c.l.b16 %v151
    %v387 = vunpack.c.h.b16 %v151
    %v388 = vunpack.c.l.b16 %v152
    %v389 = vunpack.c.h.b16 %v152
    %v390 = vunpack.c.l.b16 %v153
    %v391 = vunpack.c.h.b16 %v153
    %v392 = vunpack.c.l.b16 %v154
    %v393 = vunpack.c.h.b16 %v154
    %v394 = vunpack.c.l.b16 %v155
    %v395 = vunpack.c.h.b16 %v155
    %v396 = vunpack.c.l.b16 %v156
    %v397 = vunpack.c.h.b16 %v156
    %v398 = vunpack.c.l.b16 %v157
    %v399 = vunpack.c.h.b16 %v157
    %v400 = vunpack.c.l.b16 %v158
    %v401 = vunpack.c.h.b16 %v158
    %v402 = vunpack.c.l.b16 %v159
    %v403 = vunpack.c.h.b16 %v159
    %v404 = vunpack.c.l.b16 %v160
    %v405 = vunpack.c.h.b16 %v160
    %v406 = vunpack.c.l.b16 %v161
    %v407 = vunpack.c.h.b16 %v161
    %v408 = vunpack.c.l.b16 %v162
    %v409 = vunpack.c.h.b16 %v162
    %v410 = vunpack.c.l.b16 %v163
    %v411 = vunpack.c.h.b16 %v163
    %v412 = vunpack.c.l.b16 %v164
    %v413 = vunpack.c.h.b16 %v164
    %v414 = vunpack.c.l.b16 %v165
    %v415 = vunpack.c.h.b16 %v165
    %v416 = vunpack.c.l.b16 %v166
    %v417 = vunpack.c.h.b16 %v166
    %v418 = vunpack.c.l.b16 %v167
    %v419 = vunpack.c.h.b16 %v167
    %v420 = vunpack.c.l.b16 %v168
    %v421 = vunpack.c.h.b16 %v168
    %v422 = vunpack.c.l.b16 %v169
    %v423 = vunpack.c.h.b16 %v169
    %v424 = vunpack.c.l.b16 %v170
    %v425 = vunpack.c.h.b16 %v170
    %v426 = vunpack.c.l.b16 %v171
    %v427 = vunpack.c.h.b16 %v171
    %v428 = vunpack.c.l.b16 %v172
    %v429 = vunpack.c.h.b16 %v172
    %v430 = vunpack.c.l.b16 %v173
    %v431 = vunpack.c.h.b16 %v173
    %v432 = vunpack.c.l.b16 %v174
    %v433 = vunpack.c.h.b16 %v174
    %v434 = vunpack.c.l.b16 %v175
    %v435 = vunpack.c.h.b16 %v175
    %v436 = vunpack.c.l.b16 %v176
    %v437 = vunpack.c.h.b16 %v176
    %v438 = vunpack.c.l.b16 %v177
    %v439 = vunpack.c.h.b16 %v177
    %v440 = vunpack.c.l.b16 %v178
    %v441 = vunpack.c.h.b16 %v178
    %v442 = vunpack.c.l.b16 %v179
    %v443 = vunpack.c.h.b16 %v179
    %v444 = vunpack.c.l.b16 %v180
    %v445 = vunpack.c.h.b16 %v180
    %v446 = vunpack.c.l.b16 %v181
    %v447 = vunpack.c.h.b16 %v181
    %v448 = vunpack.c.l.b16 %v182
    %v449 = vunpack.c.h.b16 %v182
    %v450 = vunpack.c.l.b16 %v183
    %v451 = vunpack.c.h.b16 %v183
    %v452 = vunpack.c.l.b16 %v184
    %v453 = vunpack.c.h.b16 %v184
    %v454 = vunpack.c.l.b16 %v185
    %v455 = vunpack.c.h.b16 %v185
    %v456 = vunpack.c.l.b16 %v186
    %v457 = vunpack.c.h.b16 %v186
    %v458 = vunpack.c.l.b16 %v187
    %v459 = vunpack.c.h.b16 %v187
    %v460 = vunpack.c.l.b16 %v188
    %v461 = vunpack.c.h.b16 %v188
    %v462 = vunpack.c.l.b16 %v189
    %v463 = vunpack.c.h.b16 %v189
    %v464 = vunpack.c.l.b16 %v190
    %v465 = vunpack.c.h.b16 %v190
    %v466 = vunpack.c.l.b16 %v191
    %v467 = vunpack.c.h.b16 %v191
    %v468 = vunpack.c.l.b16 %v192
    %v469 = vunpack.c.h.b16 %v192
    %v470 = vunpack.c.l.b16 %v193
    %v471 = vunpack.c.h.b16 %v193
    %v472 = vunpack.c.l.b16 %v194
    %v473 = vunpack.c.h.b16 %v194
    %v474 = vunpack.c.l.b16 %v195
    %v475 = vunpack.c.h.b16 %v195
    %v476 = vunpack.c.l.b16 %v196
    %v477 = vunpack.c.h.b16 %v196
    %v478 = vunpack.c.l.b16 %v197
    %v479 = vunpack.c.h.b16 %v197
    %v480 = vunpack.c.l.b16 %v198
    %v481 = vunpack.c.h.b16 %v198
    %v482 = vunpack.c.l.b16 %v199
    %v483 = vunpack.c.h.b16 %v199
    %v484 = vunpack.c.l.b16 %v200
    %v485 = vunpack.c.h.b16 %v200
    %v486 = vunpack.c.l.b16 %v201
    %v487 = vunpack.c.h.b16 %v201
    %v488 = vunpack.c.l.b16 %v202
    %v489 = vunpack.c.h.b16 %v202
    %v490 = vunpack.c.l.b16 %v203
    %v491 = vunpack.c.h.b16 %v203
    %v492 = vunpack.c.l.b16 %v204
    %v493 = vunpack.c.h.b16 %v204
    %v494 = vunpack.c.l.b16 %v205
    %v495 = vunpack.c.h.b16 %v205
    %v496 = vunpack.c.l.b16 %v206
    %v497 = vunpack.c.h.b16 %v206
    %v498 = vunpack.c.l.b16 %v207
    %v499 = vunpack.c.h.b16 %v207
    %v500 = vunpack.c.l.b16 %v208
    %v501 = vunpack.c.h.b16 %v208
    %v502 = vunpack.c.l.b16 %v209
    %v503 = vunpack.c.h.b16 %v209
    %v504 = vunpack.c.l.b16 %v210
    %v505 = vunpack.c.h.b16 %v210
    %v506 = vunpack.c.l.b16 %v211
    %v507 = vunpack.c.h.b16 %v211
    %v508 = vunpack.c.l.b16 %v212
    %v509 = vunpack.c.h.b16 %v212
    %v510 = vunpack.c.l.b16 %v213
    %v511 = vunpack.c.h.b16 %v213
    %v512 = vunpack.c.l.b16 %v214
    %v513 = vunpack.c.h.b16 %v214
    %v514 = vunpack.c.l.b16 %v215
    %v515 = vunpack.c.h.b16 %v215
    %v516 = vunpack.c.l.b16 %v216
    %v517 = vunpack.c.h.b16 %v216
    %v518 = vunpack.c.l.b16 %v217
    %v519 = vunpack.c.h.b16 %v217
    %v520 = vunpack.c.l.b16 %v218
    %v521 = vunpack.c.h.b16 %v218
    %v522 = vunpack.c.l.b16 %v219
    %v523 = vunpack.c.h.b16 %v219
    %v524 = vunpack.c.l.b16 %v220
    %v525 = vunpack.c.h.b16 %v220
    %v526 = vunpack.c.l.b16 %v221
    %v527 = vunpack.c.h.b16 %v221
    %v528 = vunpack.c.l.b16 %v222
    %v529 = vunpack.c.h.b16 %v222
    %v530 = vunpack.c.l.b16 %v223
    %v531 = vunpack.c.h.b16 %v223
    %v532 = vunpack.c.l.b16 %v224
    %v533 = vunpack.c.h.b16 %v224
    %v534 = vunpack.c.l.b16 %v225
    %v535 = vunpack.c.h.b16 %v225
    %v536 = vunpack.c.l.b16 %v226
    %v537 = vunpack.c.h.b16 %v226
    %v538 = vunpack.c.l.b16 %v227
    %v539 = vunpack.c.h.b16 %v227
    %v540 = vunpack.c.l.b16 %v228
    %v541 = vunpack.c.h.b16 %v228
    %v542 = vunpack.c.l.b16 %v229
    %v543 = vunpack.c.h.b16 %v229
    %v544 = vunpack.c.l.b16 %v230
    %v545 = vunpack.c.h.b16 %v230
    %v546 = vunpack.c.l.b16 %v231
    %v547 = vunpack.c.h.b16 %v231
    %v548 = vunpack.c.l.b16 %v232
    %v549 = vunpack.c.h.b16 %v232
    %v550 = vunpack.c.l.b16 %v233
    %v551 = vunpack.c.h.b16 %v233
    %v552 = vunpack.c.l.b16 %v234
    %v553 = vunpack.c.h.b16 %v234
    %v554 = vunpack.c.l.b16 %v235
    %v555 = vunpack.c.h.b16 %v235
    %v556 = vpack.c.b16 %v370, %v364
    %v557 = vpack.c.b16 %v371, %v365
    %v558 = vpack.c.b16 %v372, %v366
    %v559 = vpack.c.b16 %v373, %v367
    %v560 = vpack.c.b16 %v374, %v368
    %v561 = vpack.c.b16 %v375, %v369
    %v562 = vpack.c.b16 %v382, %v376
    %v563 = vpack.c.b16 %v383, %v377
    %v564 = vpack.c.b16 %v384, %v378
    %v565 = vpack.c.b16 %v385, %v379
    %v566 = vpack.c.b16 %v386, %v380
    %v567 = vpack.c.b16 %v387, %v381
    %v568 = vpack.c.b16 %v394, %v388
    %v569 = vpack.c.b16 %v395, %v389
    %v570 = vpack.c.b16 %v396, %v390
    %v571 = vpack.c.b16 %v397, %v391
    %v572 = vpack.c.b16 %v398, %v392
    %v573 = vpack.c.b16 %v399, %v393
    %v574 = vpack.c.b16 %v406, %v400
    %v575 = vpack.c.b16 %v407, %v401
    %v576 = vpack.c.b16 %v408, %v402
    %v577 = vpack.c.b16 %v409, %v403
    %v578 = vpack.c.b16 %v410, %v404
    %v579 = vpack.c.b16 %v411, %v405
    %v580 = vpack.c.b16 %v418, %v412
    %v581 = vpack.c.b16 %v419, %v413
    %v582 = vpack.c.b16 %v420, %v414
    %v583 = vpack.c.b16 %v421, %v415
    %v584 = vpack.c.b16 %v422, %v416
    %v585 = vpack.c.b16 %v423, %v417
    %v586 = vpack.c.b16 %v430, %v424
    %v587 = vpack.c.b16 %v431, %v425
    %v588 = vpack.c.b16 %v432, %v426
    %v589 = vpack.c.b16 %v433, %v427
    %v590 = vpack.c.b16 %v434, %v428
    %v591 = vpack.c.b16 %v435, %v429
    %v592 = vpack.c.b16 %v442, %v436
    %v593 = vpack.c.b16 %v443, %v437
    %v594 = vpack.c.b16 %v444, %v438
    %v595 = vpack.c.b16 %v445, %v439
    %v596 = vpack.c.b16 %v446, %v440
    %v597 = vpack.c.b16 %v447, %v441
    %v598 = vpack.c.b16 %v454, %v448
    %v599 = vpack.c.b16 %v455, %v449
    %v600 = vpack.c.b16 %v456, %v450
    %v601 = vpack.c.b16 %v457, %v451
    %v602 = vpack.c.b16 %v458, %v452
    %v603 = vpack.c.b16 %v459, %v453
    %v604 = vpack.c.b16 %v466, %v460
    %v605 = vpack.c.b16 %v467, %v461
    %v606 = vpack.c.b16 %v468, %v462
    %v607 = vpack.c.b16 %v469, %v463
    %v608 = vpack.c.b16 %v470, %v464
    %v609 = vpack.c.b16 %v471, %v465
    %v610 = vpack.c.b16 %v478, %v472
    %v611 = vpack.c.b16 %v479, %v473
    %v612 = vpack.c.b16 %v480, %v474
    %v613 = vpack.c.b16 %v481, %v475
    %v614 = vpack.c.b16 %v482, %v476
    %v615 = vpack.c.b16 %v483, %v477
    %v616 = vpack.c.b16 %v490, %v484
    %v617 = vpack.c.b16 %v491, %v485
    %v618 = vpack.c.b16 %v492, %v486
    %v619 = vpack.c.b16 %v493, %v487
    %v620 = vpack.c.b16 %v494, %v488
    %v621 = vpack.c.b16 %v495, %v489
    %v622 = vpack.c.b16 %v502, %v496
    %v623 = vpack.c.b16 %v503, %v497
    %v624 = vpack.c.b16 %v504, %v498
    %v625 = vpack.c.b16 %v505, %v499
    %v626 = vpack.c.b16 %v506, %v500
    %v627 = vpack.c.b16 %v507, %v501
    %v628 = vpack.c.b16 %v514, %v508
    %v629 = vpack.c.b16 %v515, %v509
    %v630 = vpack.c.b16 %v516, %v510
    %v631 = vpack.c.b16 %v517, %v511
    %v632 = vpack.c.b16 %v518, %v512
    %v633 = vpack.c.b16 %v519, %v513
    %v634 = vpack.c.b16 %v526, %v520
    %v635 = vpack.c.b16 %v527, %v521
    %v636 = vpack.c.b16 %v528, %v522
    %v637 = vpack.c.b16 %v529, %v523
    %v638 = vpack.c.b16 %v530, %v524
    %v639 = vpack.c.b16 %v531, %v525
    %v640 = vpack.c.b16 %v538, %v532
    %v641 = vpack.c.b16 %v539, %v533
    %v642 = vpack.c.b16 %v540, %v534
    %v643 = vpack.c.b16 %v541, %v535
    %v644 = vpack.c.b16 %v542, %v536
    %v645 = vpack.c.b16 %v543, %v537
    %v646 = vpack.c.b16 %v550, %v544
    %v647 = vpack.c.b16 %v551, %v545
    %v648 = vpack.c.b16 %v552, %v546
    %v649 = vpack.c.b16 %v553, %v547
    %v650 = vpack.c.b16 %v554, %v548
    %v651 = vpack.c.b16 %v555, %v549
    %748 = vmatprep.subr.bf16.mxu0 %v557
    %749 = vmatpush1.bf16.msra.mxu0 %v556
    %750 = vmatprep.subr.bf16.mxu0 %v563
    %751 = vmatpush1.bf16.msra.mxu0 %v562
    %752 = vmatprep.subr.bf16.mxu0 %v569
    %753 = vmatpush1.bf16.msra.mxu0 %v568
    %754 = vmatprep.subr.bf16.mxu0 %v575
    %755 = vmatpush1.bf16.msra.mxu0 %v574
    %756 = vmatprep.subr.bf16.mxu0 %v581
    %757 = vmatpush1.bf16.msra.mxu0 %v580
    %758 = vmatprep.subr.bf16.mxu0 %v587
    %759 = vmatpush1.bf16.msra.mxu0 %v586
    %760 = vmatprep.subr.bf16.mxu0 %v593
    %761 = vmatpush1.bf16.msra.mxu0 %v592
    %762 = vmatprep.subr.bf16.mxu0 %v599
    %763 = vmatpush1.bf16.msra.mxu0 %v598
    %764 = vmatprep.subr.bf16.mxu0 %v605
    %765 = vmatpush1.bf16.msra.mxu0 %v604
    %766 = vmatprep.subr.bf16.mxu0 %v611
    %767 = vmatpush1.bf16.msra.mxu0 %v610
    %768 = vmatprep.subr.bf16.mxu0 %v617
    %769 = vmatpush1.bf16.msra.mxu0 %v616
    %770 = vmatprep.subr.bf16.mxu0 %v623
    %771 = vmatpush1.bf16.msra.mxu0 %v622
    %772 = vmatprep.subr.bf16.mxu0 %v629
    %773 = vmatpush1.bf16.msra.mxu0 %v628
    %774 = vmatprep.subr.bf16.mxu0 %v635
    %775 = vmatpush1.bf16.msra.mxu0 %v634
    %776 = vmatprep.subr.bf16.mxu0 %v641
    %777 = vmatpush1.bf16.msra.mxu0 %v640
    %778 = vmatprep.subr.bf16.mxu0 %v647
    %779 = vmatpush1.bf16.msra.mxu0 %v646
    %780 = vmatprep.mubr.bf16.mxu0 %v137
    %781 = vmatmul.mubr.bf16.gmra.mrb[0].mxu0 %v136
    %v782 = vpop.f32.mrb[0].mxu0
    %v783 = vadd.f32 %v241, %v782
    %v784 = vpop.f32.mrb[0].mxu0
    %v785 = vadd.f32 %v245, %v784
    %v786 = vpop.f32.mrb[0].mxu0
    %v787 = vadd.f32 %v241, %v786
    %v788 = vpop.f32.mrb[0].mxu0
    %v789 = vadd.f32 %v245, %v788
    %790 = vmatprep.mubr.bf16.mxu0 %v139
    %791 = vmatmul.mubr.bf16.gmra.mrb[0].mxu0 %v138
    %v792 = vpop.f32.mrb[0].mxu0
    %v793 = vadd.f32 %v241, %v792
    %v794 = vpop.f32.mrb[0].mxu0
    %v795 = vadd.f32 %v245, %v794
    %v796 = vpop.f32.mrb[0].mxu0
    %v797 = vadd.f32 %v241, %v796
    %v798 = vpop.f32.mrb[0].mxu0
    %v799 = vadd.f32 %v245, %v798
    %800 = vdwg.mxu0
    %801 = vmatprep.subr.bf16.mxu0 %v559
    %802 = vmatpush1.bf16.msra.mxu0 %v558
    %803 = vmatprep.subr.bf16.mxu0 %v565
    %804 = vmatpush1.bf16.msra.mxu0 %v564
    %805 = vmatprep.subr.bf16.mxu0 %v571
    %806 = vmatpush1.bf16.msra.mxu0 %v570
    %807 = vmatprep.subr.bf16.mxu0 %v577
    %808 = vmatpush1.bf16.msra.mxu0 %v576
    %809 = vmatprep.subr.bf16.mxu0 %v583
    %810 = vmatpush1.bf16.msra.mxu0 %v582
    %811 = vmatprep.subr.bf16.mxu0 %v589
    %812 = vmatpush1.bf16.msra.mxu0 %v588
    %813 = vmatprep.subr.bf16.mxu0 %v595
    %814 = vmatpush1.bf16.msra.mxu0 %v594
    %815 = vmatprep.subr.bf16.mxu0 %v601
    %816 = vmatpush1.bf16.msra.mxu0 %v600
    %817 = vmatprep.subr.bf16.mxu0 %v607
    %818 = vmatpush1.bf16.msra.mxu0 %v606
    %819 = vmatprep.subr.bf16.mxu0 %v613
    %820 = vmatpush1.bf16.msra.mxu0 %v612
    %821 = vmatprep.subr.bf16.mxu0 %v619
    %822 = vmatpush1.bf16.msra.mxu0 %v618
    %823 = vmatprep.subr.bf16.mxu0 %v625
    %824 = vmatpush1.bf16.msra.mxu0 %v624
    %825 = vmatprep.subr.bf16.mxu0 %v631
    %826 = vmatpush1.bf16.msra.mxu0 %v630
    %827 = vmatprep.subr.bf16.mxu0 %v637
    %828 = vmatpush1.bf16.msra.mxu0 %v636
    %829 = vmatprep.subr.bf16.mxu0 %v643
    %830 = vmatpush1.bf16.msra.mxu0 %v642
    %831 = vmatprep.subr.bf16.mxu0 %v649
    %832 = vmatpush1.bf16.msra.mxu0 %v648
    %833 = vmatprep.mubr.bf16.mxu0 %v137
    %834 = vmatmul.mubr.bf16.gmra.mrb[0].mxu0 %v136
    %v835 = vpop.f32.mrb[0].mxu0
    %v836 = vadd.f32 %v249, %v835
    %v837 = vpop.f32.mrb[0].mxu0
    %v838 = vadd.f32 %v253, %v837
    %v839 = vpop.f32.mrb[0].mxu0
    %v840 = vadd.f32 %v249, %v839
    %v841 = vpop.f32.mrb[0].mxu0
    %v842 = vadd.f32 %v253, %v841
    %843 = vmatprep.mubr.bf16.mxu0 %v139
    %844 = vmatmul.mubr.bf16.gmra.mrb[0].mxu0 %v138
    %v845 = vpop.f32.mrb[0].mxu0
    %v846 = vadd.f32 %v249, %v845
    %v847 = vpop.f32.mrb[0].mxu0
    %v848 = vadd.f32 %v253, %v847
    %v849 = vpop.f32.mrb[0].mxu0
    %v850 = vadd.f32 %v249, %v849
    %v851 = vpop.f32.mrb[0].mxu0
    %v852 = vadd.f32 %v253, %v851
    %853 = vdwg.mxu0
    %854 = vmatprep.subr.bf16.mxu0 %v561
    %855 = vmatpush1.bf16.msra.mxu0 %v560
    %856 = vmatprep.subr.bf16.mxu0 %v567
    %857 = vmatpush1.bf16.msra.mxu0 %v566
    %858 = vmatprep.subr.bf16.mxu0 %v573
    %859 = vmatpush1.bf16.msra.mxu0 %v572
    %860 = vmatprep.subr.bf16.mxu0 %v579
    %861 = vmatpush1.bf16.msra.mxu0 %v578
    %862 = vmatprep.subr.bf16.mxu0 %v585
    %863 = vmatpush1.bf16.msra.mxu0 %v584
    %864 = vmatprep.subr.bf16.mxu0 %v591
    %865 = vmatpush1.bf16.msra.mxu0 %v590
    %866 = vmatprep.subr.bf16.mxu0 %v597
    %867 = vmatpush1.bf16.msra.mxu0 %v596
    %868 = vmatprep.subr.bf16.mxu0 %v603
    %869 = vmatpush1.bf16.msra.mxu0 %v602
    %870 = vmatprep.subr.bf16.mxu0 %v609
    %871 = vmatpush1.bf16.msra.mxu0 %v608
    %872 = vmatprep.subr.bf16.mxu0 %v615
    %873 = vmatpush1.bf16.msra.mxu0 %v614
    %874 = vmatprep.subr.bf16.mxu0 %v621
    %875 = vmatpush1.bf16.msra.mxu0 %v620
    %876 = vmatprep.subr.bf16.mxu0 %v627
    %877 = vmatpush1.bf16.msra.mxu0 %v626
    %878 = vmatprep.subr.bf16.mxu0 %v633
    %879 = vmatpush1.bf16.msra.mxu0 %v632
    %880 = vmatprep.subr.bf16.mxu0 %v639
    %881 = vmatpush1.bf16.msra.mxu0 %v638
    %882 = vmatprep.subr.bf16.mxu0 %v645
    %883 = vmatpush1.bf16.msra.mxu0 %v644
    %884 = vmatprep.subr.bf16.mxu0 %v651
    %885 = vmatpush1.bf16.msra.mxu0 %v650
    %886 = vmatprep.mubr.bf16.mxu0 %v137
    %887 = vmatmul.mubr.bf16.gmra.mrb[0].mxu0 %v136
    %v888 = vpop.f32.mrb[0].mxu0
    %v889 = vadd.f32 %v257, %v888
    %v890 = vpop.f32.mrb[0].mxu0
    %v891 = vadd.f32 %v261, %v890
    %v892 = vpop.f32.mrb[0].mxu0
    %v893 = vadd.f32 %v257, %v892
    %v894 = vpop.f32.mrb[0].mxu0
    %v895 = vadd.f32 %v261, %v894
    %896 = vmatprep.mubr.bf16.mxu0 %v139
    %897 = vmatmul.mubr.bf16.gmra.mrb[0].mxu0 %v138
    %v898 = vpop.f32.mrb[0].mxu0
    %v899 = vadd.f32 %v257, %v898
    %v900 = vpop.f32.mrb[0].mxu0
    %v901 = vadd.f32 %v261, %v900
    %v902 = vpop.f32.mrb[0].mxu0
    %v903 = vadd.f32 %v257, %v902
    %v904 = vpop.f32.mrb[0].mxu0
    %v905 = vadd.f32 %v261, %v904
    %906 = vdwg.mxu0
    %v907 = vld [vmem:[#allocation5] sm:$0x3]
    %v908 = vld [vmem:[#allocation7] sm:$0xff]
    %v910 = vlaneseq
    %v911 = vshrl.u32 %v910, 7
    %v912 = vsub.s32 0, %v911
    %v913 = vrot.slane %v908, %v912
    %v914 = vlaneseq
    %v915 = vshrl.u32 %v914, 7
    %v916 = vsub.s32 4, %v915
    %v917 = vrot.slane %v908, %v916
    %v920 = vlaneseq
    %v921 = vshrl.u32 %v920, 7
    %v922 = vsub.s32 0, %v921
    %v923 = vrot.slane %v913, %v922
    %v924 = vlaneseq
    %v925 = vshrl.u32 %v924, 7
    %v926 = vsub.s32 0, %v925
    %v927 = vrot.slane %v917, %v926
    %v928 = vmul.f32 %v783, %v923
    %v929 = vmul.f32 %v785, %v927
    %v930 = vmul.f32 %v787, %v923
    %v931 = vmul.f32 %v789, %v927
    %v932 = vlaneseq
    %v933 = vshrl.u32 %v932, 7
    %v934 = vsub.s32 2, %v933
    %v935 = vrot.slane %v908, %v934
    %v936 = vlaneseq
    %v937 = vshrl.u32 %v936, 7
    %v938 = vsub.s32 6, %v937
    %v939 = vrot.slane %v908, %v938
    %v942 = vlaneseq
    %v943 = vshrl.u32 %v942, 7
    %v944 = vsub.s32 2, %v943
    %v945 = vrot.slane %v935, %v944
    %v946 = vlaneseq
    %v947 = vshrl.u32 %v946, 7
    %v948 = vsub.s32 2, %v947
    %v949 = vrot.slane %v939, %v948
    %v950 = vmul.f32 %v836, %v945
    %v951 = vmul.f32 %v838, %v949
    %v952 = vmul.f32 %v840, %v945
    %v953 = vmul.f32 %v842, %v949
    %v954 = vpack.c.bf16 %v930, %v928
    %v955 = vpack.c.bf16 %v931, %v929
    %v956 = vpack.c.bf16 %v952, %v950
    %v957 = vpack.c.bf16 %v953, %v951
    %v958 = vpack.c.bf16 %v893, %v889
    %v959 = vpack.c.bf16 %v895, %v891
    %960 = vmatprep.subr.bf16.mxu0 0
    %961 = vmatpush1.bf16.xpose.msra.mxu0 %v956
    %962 = vmatprep.subr.bf16.mxu0 0
    %963 = vmatpush1.bf16.xpose.msra.mxu0 0
    %964 = vmatprep.subr.bf16.mxu0 0
    %965 = vmatpush1.bf16.xpose.msra.mxu0 0
    %966 = vmatprep.subr.bf16.mxu0 0
    %967 = vmatpush1.bf16.xpose.msra.mxu0 0
    %968 = vmatprep.subr.bf16.mxu0 0
    %969 = vmatpush1.bf16.xpose.msra.mxu0 0
    %970 = vmatprep.subr.bf16.mxu0 0
    %971 = vmatpush1.bf16.xpose.msra.mxu0 0
    %972 = vmatprep.subr.bf16.mxu0 0
    %973 = vmatpush1.bf16.xpose.msra.mxu0 0
    %974 = vmatprep.subr.bf16.mxu0 0
    %975 = vmatpush1.bf16.xpose.msra.mxu0 0
    %976 = vmatprep.subr.bf16.mxu0 0
    %977 = vmatpush1.bf16.xpose.msra.mxu0 0
    %978 = vmatprep.subr.bf16.mxu0 0
    %979 = vmatpush1.bf16.xpose.msra.mxu0 0
    %980 = vmatprep.subr.bf16.mxu0 0
    %981 = vmatpush1.bf16.xpose.msra.mxu0 0
    %982 = vmatprep.subr.bf16.mxu0 0
    %983 = vmatpush1.bf16.xpose.msra.mxu0 0
    %984 = vmatprep.subr.bf16.mxu0 0
    %985 = vmatpush1.bf16.xpose.msra.mxu0 0
    %986 = vmatprep.subr.bf16.mxu0 0
    %987 = vmatpush1.bf16.xpose.msra.mxu0 0
    %988 = vmatprep.subr.bf16.mxu0 0
    %989 = vmatpush1.bf16.xpose.msra.mxu0 0
    %990 = vmatprep.subr.bf16.mxu0 0
    %991 = vmatpush1.bf16.xpose.msra.mxu0 0
    %992 = vmatprep.mubr.bf16.mxu0 0
    %993 = vmatmul.mubr.bf16.gmra.mrb[0].mxu0 %v954
    %v994 = vpop.f32.mrb[0].mxu0
    %v995 = vadd.f32 0.0, %v994
    %v996 = vpop.f32.mrb[0].mxu0
    %v997 = vpop.f32.mrb[0].mxu0
    %v998 = vadd.f32 0.0, %v997
    %v999 = vpop.f32.mrb[0].mxu0
    %1000 = vdwg.mxu0
    %v1001 = vmul.f32 %v995, 0.088388346
    %v1002 = vmul.f32 %v998, 0.088388346
    %v1003 = vlaneseq
    %v1004 = vshrl.u32 %v1003, 7
    %v1005 = vsub.s32 0, %v1004
    %v1006 = vrot.slane %v907, %v1005
    %v1007 = vadd.f32 %v1001, %v1006
    %v1008 = vadd.f32 %v1002, %v1006
    %vm1009 = vcmask 130048
    %v1010 = vsel %vm1009, %v1007, -inf
    %1011 = vmax.xlane.f32.xlu0 %v1010
    %v1012 = vpop.xlane.xlu0 %1011
    %v1013 = vsel %vm1009, %v1008, -inf
    %1014 = vmax.xlane.f32.xlu0 %v1013
    %v1015 = vpop.xlane.xlu0 %1014
    %v1016 = vsub.f32 %v1007, %v1012
    %v1017 = vsub.f32 %v1008, %v1015
    %v1018 = vmul.f32 %v1016, 1.442695
    %v1019 = vpow.pop %v1018
    %v1020 = vmul.f32 %v1017, 1.442695
    %v1021 = vpow.pop %v1020
    %v1022 = vsel %vm1009, %v1019, 0.0
    %1023 = vadd.xlane.f32.xlu0 %v1022
    %v1024 = vpop.xlane.xlu0 %1023
    %v1025 = vsel %vm1009, %v1021, 0.0
    %1026 = vadd.xlane.f32.xlu0 %v1025
    %v1027 = vpop.xlane.xlu0 %1026
    %v1028 = vrcp.pop %v1024
    %v1029 = vrcp.pop %v1027
    %v1030 = vmul.f32 %v1019, %v1028
    %v1031 = vmul.f32 %v1021, %v1029
    %v1032 = vpack.c.bf16 %v1031, %v1030
    %v1034 = vsel %vm1009, %v1032, 0
    %1036 = vmatprep.subr.bf16.mxu0 0
    %1037 = vmatpush1.bf16.msra.mxu0 %v958
    %1038 = vmatprep.subr.bf16.mxu0 0
    %1039 = vmatpush1.bf16.msra.mxu0 0
    %1040 = vmatprep.subr.bf16.mxu0 0
    %1041 = vmatpush1.bf16.msra.mxu0 0
    %1042 = vmatprep.subr.bf16.mxu0 0
    %1043 = vmatpush1.bf16.msra.mxu0 0
    %1044 = vmatprep.subr.bf16.mxu0 0
    %1045 = vmatpush1.bf16.msra.mxu0 0
    %1046 = vmatprep.subr.bf16.mxu0 0
    %1047 = vmatpush1.bf16.msra.mxu0 0
    %1048 = vmatprep.subr.bf16.mxu0 0
    %1049 = vmatpush1.bf16.msra.mxu0 0
    %1050 = vmatprep.subr.bf16.mxu0 0
    %1051 = vmatpush1.bf16.msra.mxu0 0
    %1052 = vmatprep.subr.bf16.mxu0 0
    %1053 = vmatpush1.bf16.msra.mxu0 0
    %1054 = vmatprep.subr.bf16.mxu0 0
    %1055 = vmatpush1.bf16.msra.mxu0 0
    %1056 = vmatprep.subr.bf16.mxu0 0
    %1057 = vmatpush1.bf16.msra.mxu0 0
    %1058 = vmatprep.subr.bf16.mxu0 0
    %1059 = vmatpush1.bf16.msra.mxu0 0
    %1060 = vmatprep.subr.bf16.mxu0 0
    %1061 = vmatpush1.bf16.msra.mxu0 0
    %1062 = vmatprep.subr.bf16.mxu0 0
    %1063 = vmatpush1.bf16.msra.mxu0 0
    %1064 = vmatprep.subr.bf16.mxu0 0
    %1065 = vmatpush1.bf16.msra.mxu0 0
    %1066 = vmatprep.subr.bf16.mxu0 0
    %1067 = vmatpush1.bf16.msra.mxu0 0
    %1068 = vmatprep.mubr.bf16.mxu0 0
    %1069 = vmatmul.mubr.bf16.gmra.mrb[0].mxu0 %v1034
    %v1070 = vpop.f32.mrb[0].mxu0
    %v1071 = vadd.f32 0.0, %v1070
    %v1072 = vpop.f32.mrb[0].mxu0
    %v1073 = vpop.f32.mrb[0].mxu0
    %v1074 = vadd.f32 0.0, %v1073
    %v1075 = vpop.f32.mrb[0].mxu0
    %1076 = vdwg.mxu0
    %1077 = vmatprep.subr.bf16.mxu0 0
    %1078 = vmatpush1.bf16.xpose.msra.mxu0 %v957
    %1079 = vmatprep.subr.bf16.mxu0 0
    %1080 = vmatpush1.bf16.xpose.msra.mxu0 0
    %1081 = vmatprep.subr.bf16.mxu0 0
    %1082 = vmatpush1.bf16.xpose.msra.mxu0 0
    %1083 = vmatprep.subr.bf16.mxu0 0
    %1084 = vmatpush1.bf16.xpose.msra.mxu0 0
    %1085 = vmatprep.subr.bf16.mxu0 0
    %1086 = vmatpush1.bf16.xpose.msra.mxu0 0
    %1087 = vmatprep.subr.bf16.mxu0 0
    %1088 = vmatpush1.bf16.xpose.msra.mxu0 0
    %1089 = vmatprep.subr.bf16.mxu0 0
    %1090 = vmatpush1.bf16.xpose.msra.mxu0 0
    %1091 = vmatprep.subr.bf16.mxu0 0
    %1092 = vmatpush1.bf16.xpose.msra.mxu0 0
    %1093 = vmatprep.subr.bf16.mxu0 0
    %1094 = vmatpush1.bf16.xpose.msra.mxu0 0
    %1095 = vmatprep.subr.bf16.mxu0 0
    %1096 = vmatpush1.bf16.xpose.msra.mxu0 0
    %1097 = vmatprep.subr.bf16.mxu0 0
    %1098 = vmatpush1.bf16.xpose.msra.mxu0 0
    %1099 = vmatprep.subr.bf16.mxu0 0
    %1100 = vmatpush1.bf16.xpose.msra.mxu0 0
    %1101 = vmatprep.subr.bf16.mxu0 0
    %1102 = vmatpush1.bf16.xpose.msra.mxu0 0
    %1103 = vmatprep.subr.bf16.mxu0 0
    %1104 = vmatpush1.bf16.xpose.msra.mxu0 0
    %1105 = vmatprep.subr.bf16.mxu0 0
    %1106 = vmatpush1.bf16.xpose.msra.mxu0 0
    %1107 = vmatprep.subr.bf16.mxu0 0
    %1108 = vmatpush1.bf16.xpose.msra.mxu0 0
    %1109 = vmatprep.mubr.bf16.mxu0 0
    %1110 = vmatmul.mubr.bf16.gmra.mrb[0].mxu0 %v955
    %v1111 = vpop.f32.mrb[0].mxu0
    %v1112 = vadd.f32 0.0, %v1111
    %v1113 = vpop.f32.mrb[0].mxu0
    %v1114 = vpop.f32.mrb[0].mxu0
    %v1115 = vadd.f32 0.0, %v1114
    %v1116 = vpop.f32.mrb[0].mxu0
    %1117 = vdwg.mxu0
    %v1118 = vmul.f32 %v1112, 0.088388346
    %v1119 = vmul.f32 %v1115, 0.088388346
    %v1120 = vadd.f32 %v1118, %v1006
    %v1121 = vadd.f32 %v1119, %v1006
    %v1122 = vsel %vm1009, %v1120, -inf
    %1123 = vmax.xlane.f32.xlu0 %v1122
    %v1124 = vpop.xlane.xlu0 %1123
    %v1125 = vsel %vm1009, %v1121, -inf
    %1126 = vmax.xlane.f32.xlu0 %v1125
    %v1127 = vpop.xlane.xlu0 %1126
    %v1128 = vsub.f32 %v1120, %v1124
    %v1129 = vsub.f32 %v1121, %v1127
    %v1130 = vmul.f32 %v1128, 1.442695
    %v1131 = vpow.pop %v1130
    %v1132 = vmul.f32 %v1129, 1.442695
    %v1133 = vpow.pop %v1132
    %v1134 = vsel %vm1009, %v1131, 0.0
    %1135 = vadd.xlane.f32.xlu0 %v1134
    %v1136 = vpop.xlane.xlu0 %1135
    %v1137 = vsel %vm1009, %v1133, 0.0
    %1138 = vadd.xlane.f32.xlu0 %v1137
    %v1139 = vpop.xlane.xlu0 %1138
    %v1140 = vrcp.pop %v1136
    %v1141 = vrcp.pop %v1139
    %v1142 = vmul.f32 %v1131, %v1140
    %v1143 = vmul.f32 %v1133, %v1141
    %v1144 = vpack.c.bf16 %v1143, %v1142
    %v1146 = vsel %vm1009, %v1144, 0
    %1148 = vmatprep.subr.bf16.mxu0 0
    %1149 = vmatpush1.bf16.msra.mxu0 %v959
    %1150 = vmatprep.subr.bf16.mxu0 0
    %1151 = vmatpush1.bf16.msra.mxu0 0
    %1152 = vmatprep.subr.bf16.mxu0 0
    %1153 = vmatpush1.bf16.msra.mxu0 0
    %1154 = vmatprep.subr.bf16.mxu0 0
    %1155 = vmatpush1.bf16.msra.mxu0 0
    %1156 = vmatprep.subr.bf16.mxu0 0
    %1157 = vmatpush1.bf16.msra.mxu0 0
    %1158 = vmatprep.subr.bf16.mxu0 0
    %1159 = vmatpush1.bf16.msra.mxu0 0
    %1160 = vmatprep.subr.bf16.mxu0 0
    %1161 = vmatpush1.bf16.msra.mxu0 0
    %1162 = vmatprep.subr.bf16.mxu0 0
    %1163 = vmatpush1.bf16.msra.mxu0 0
    %1164 = vmatprep.subr.bf16.mxu0 0
    %1165 = vmatpush1.bf16.msra.mxu0 0
    %1166 = vmatprep.subr.bf16.mxu0 0
    %1167 = vmatpush1.bf16.msra.mxu0 0
    %1168 = vmatprep.subr.bf16.mxu0 0
    %1169 = vmatpush1.bf16.msra.mxu0 0
    %1170 = vmatprep.subr.bf16.mxu0 0
    %1171 = vmatpush1.bf16.msra.mxu0 0
    %1172 = vmatprep.subr.bf16.mxu0 0
    %1173 = vmatpush1.bf16.msra.mxu0 0
    %1174 = vmatprep.subr.bf16.mxu0 0
    %1175 = vmatpush1.bf16.msra.mxu0 0
    %1176 = vmatprep.subr.bf16.mxu0 0
    %1177 = vmatpush1.bf16.msra.mxu0 0
    %1178 = vmatprep.subr.bf16.mxu0 0
    %1179 = vmatpush1.bf16.msra.mxu0 0
    %1180 = vmatprep.mubr.bf16.mxu0 0
    %1181 = vmatmul.mubr.bf16.gmra.mrb[0].mxu0 %v1146
    %v1182 = vpop.f32.mrb[0].mxu0
    %v1183 = vadd.f32 0.0, %v1182
    %v1184 = vpop.f32.mrb[0].mxu0
    %v1185 = vpop.f32.mrb[0].mxu0
    %v1186 = vadd.f32 0.0, %v1185
    %v1187 = vpop.f32.mrb[0].mxu0
    %1188 = vdwg.mxu0
    %v1189 = vlaneseq
    %v1190 = vshrl.u32 %v1189, 7
    %v1191 = vsub.s32 1, %v1190
    %v1192 = vrot.slane %v908, %v1191
    %v1193 = vlaneseq
    %v1194 = vshrl.u32 %v1193, 7
    %v1195 = vsub.s32 5, %v1194
    %v1196 = vrot.slane %v908, %v1195
    %v1199 = vlaneseq
    %v1200 = vshrl.u32 %v1199, 7
    %v1201 = vsub.s32 1, %v1200
    %v1202 = vrot.slane %v1192, %v1201
    %v1203 = vlaneseq
    %v1204 = vshrl.u32 %v1203, 7
    %v1205 = vsub.s32 1, %v1204
    %v1206 = vrot.slane %v1196, %v1205
    %v1207 = vmul.f32 %v793, %v1202
    %v1208 = vmul.f32 %v795, %v1206
    %v1209 = vmul.f32 %v797, %v1202
    %v1210 = vmul.f32 %v799, %v1206
    %v1211 = vlaneseq
    %v1212 = vshrl.u32 %v1211, 7
    %v1213 = vsub.s32 3, %v1212
    %v1214 = vrot.slane %v908, %v1213
    %v1215 = vlaneseq
    %v1216 = vshrl.u32 %v1215, 7
    %v1217 = vsub.s32 7, %v1216
    %v1218 = vrot.slane %v908, %v1217
    %v1221 = vlaneseq
    %v1222 = vshrl.u32 %v1221, 7
    %v1223 = vsub.s32 3, %v1222
    %v1224 = vrot.slane %v1214, %v1223
    %v1225 = vlaneseq
    %v1226 = vshrl.u32 %v1225, 7
    %v1227 = vsub.s32 3, %v1226
    %v1228 = vrot.slane %v1218, %v1227
    %v1229 = vmul.f32 %v846, %v1224
    %v1230 = vmul.f32 %v848, %v1228
    %v1231 = vmul.f32 %v850, %v1224
    %v1232 = vmul.f32 %v852, %v1228
    %v1233 = vpack.c.bf16 %v1209, %v1207
    %v1234 = vpack.c.bf16 %v1210, %v1208
    %v1235 = vpack.c.bf16 %v1231, %v1229
    %v1236 = vpack.c.bf16 %v1232, %v1230
    %v1237 = vpack.c.bf16 %v903, %v899
    %v1238 = vpack.c.bf16 %v905, %v901
    %1239 = vmatprep.subr.bf16.mxu0 0
    %1240 = vmatpush1.bf16.xpose.msra.mxu0 %v1235
    %1241 = vmatprep.subr.bf16.mxu0 0
    %1242 = vmatpush1.bf16.xpose.msra.mxu0 0
    %1243 = vmatprep.subr.bf16.mxu0 0
    %1244 = vmatpush1.bf16.xpose.msra.mxu0 0
    %1245 = vmatprep.subr.bf16.mxu0 0
    %1246 = vmatpush1.bf16.xpose.msra.mxu0 0
    %1247 = vmatprep.subr.bf16.mxu0 0
    %1248 = vmatpush1.bf16.xpose.msra.mxu0 0
    %1249 = vmatprep.subr.bf16.mxu0 0
    %1250 = vmatpush1.bf16.xpose.msra.mxu0 0
    %1251 = vmatprep.subr.bf16.mxu0 0
    %1252 = vmatpush1.bf16.xpose.msra.mxu0 0
    %1253 = vmatprep.subr.bf16.mxu0 0
    %1254 = vmatpush1.bf16.xpose.msra.mxu0 0
    %1255 = vmatprep.subr.bf16.mxu0 0
    %1256 = vmatpush1.bf16.xpose.msra.mxu0 0
    %1257 = vmatprep.subr.bf16.mxu0 0
    %1258 = vmatpush1.bf16.xpose.msra.mxu0 0
    %1259 = vmatprep.subr.bf16.mxu0 0
    %1260 = vmatpush1.bf16.xpose.msra.mxu0 0
    %1261 = vmatprep.subr.bf16.mxu0 0
    %1262 = vmatpush1.bf16.xpose.msra.mxu0 0
    %1263 = vmatprep.subr.bf16.mxu0 0
    %1264 = vmatpush1.bf16.xpose.msra.mxu0 0
    %1265 = vmatprep.subr.bf16.mxu0 0
    %1266 = vmatpush1.bf16.xpose.msra.mxu0 0
    %1267 = vmatprep.subr.bf16.mxu0 0
    %1268 = vmatpush1.bf16.xpose.msra.mxu0 0
    %1269 = vmatprep.subr.bf16.mxu0 0
    %1270 = vmatpush1.bf16.xpose.msra.mxu0 0
    %1271 = vmatprep.mubr.bf16.mxu0 0
    %1272 = vmatmul.mubr.bf16.gmra.mrb[0].mxu0 %v1233
    %v1273 = vpop.f32.mrb[0].mxu0
    %v1274 = vadd.f32 0.0, %v1273
    %v1275 = vpop.f32.mrb[0].mxu0
    %v1276 = vpop.f32.mrb[0].mxu0
    %v1277 = vadd.f32 0.0, %v1276
    %v1278 = vpop.f32.mrb[0].mxu0
    %1279 = vdwg.mxu0
    %v1280 = vmul.f32 %v1274, 0.088388346
    %v1281 = vmul.f32 %v1277, 0.088388346
    %v1282 = vlaneseq
    %v1283 = vshrl.u32 %v1282, 7
    %v1284 = vsub.s32 1, %v1283
    %v1285 = vrot.slane %v907, %v1284
    %v1286 = vadd.f32 %v1280, %v1285
    %v1287 = vadd.f32 %v1281, %v1285
    %v1288 = vsel %vm1009, %v1286, -inf
    %1289 = vmax.xlane.f32.xlu0 %v1288
    %v1290 = vpop.xlane.xlu0 %1289
    %v1291 = vsel %vm1009, %v1287, -inf
    %1292 = vmax.xlane.f32.xlu0 %v1291
    %v1293 = vpop.xlane.xlu0 %1292
    %v1294 = vsub.f32 %v1286, %v1290
    %v1295 = vsub.f32 %v1287, %v1293
    %v1296 = vmul.f32 %v1294, 1.442695
    %v1297 = vpow.pop %v1296
    %v1298 = vmul.f32 %v1295, 1.442695
    %v1299 = vpow.pop %v1298
    %v1300 = vsel %vm1009, %v1297, 0.0
    %1301 = vadd.xlane.f32.xlu0 %v1300
    %v1302 = vpop.xlane.xlu0 %1301
    %v1303 = vsel %vm1009, %v1299, 0.0
    %1304 = vadd.xlane.f32.xlu0 %v1303
    %v1305 = vpop.xlane.xlu0 %1304
    %v1306 = vrcp.pop %v1302
    %v1307 = vrcp.pop %v1305
    %v1308 = vmul.f32 %v1297, %v1306
    %v1309 = vmul.f32 %v1299, %v1307
    %v1310 = vpack.c.bf16 %v1309, %v1308
    %v1312 = vsel %vm1009, %v1310, 0
    %1314 = vmatprep.subr.bf16.mxu0 0
    %1315 = vmatpush1.bf16.msra.mxu0 %v1237
    %1316 = vmatprep.subr.bf16.mxu0 0
    %1317 = vmatpush1.bf16.msra.mxu0 0
    %1318 = vmatprep.subr.bf16.mxu0 0
    %1319 = vmatpush1.bf16.msra.mxu0 0
    %1320 = vmatprep.subr.bf16.mxu0 0
    %1321 = vmatpush1.bf16.msra.mxu0 0
    %1322 = vmatprep.subr.bf16.mxu0 0
    %1323 = vmatpush1.bf16.msra.mxu0 0
    %1324 = vmatprep.subr.bf16.mxu0 0
    %1325 = vmatpush1.bf16.msra.mxu0 0
    %1326 = vmatprep.subr.bf16.mxu0 0
    %1327 = vmatpush1.bf16.msra.mxu0 0
    %1328 = vmatprep.subr.bf16.mxu0 0
    %1329 = vmatpush1.bf16.msra.mxu0 0
    %1330 = vmatprep.subr.bf16.mxu0 0
    %1331 = vmatpush1.bf16.msra.mxu0 0
    %1332 = vmatprep.subr.bf16.mxu0 0
    %1333 = vmatpush1.bf16.msra.mxu0 0
    %1334 = vmatprep.subr.bf16.mxu0 0
    %1335 = vmatpush1.bf16.msra.mxu0 0
    %1336 = vmatprep.subr.bf16.mxu0 0
    %1337 = vmatpush1.bf16.msra.mxu0 0
    %1338 = vmatprep.subr.bf16.mxu0 0
    %1339 = vmatpush1.bf16.msra.mxu0 0
    %1340 = vmatprep.subr.bf16.mxu0 0
    %1341 = vmatpush1.bf16.msra.mxu0 0
    %1342 = vmatprep.subr.bf16.mxu0 0
    %1343 = vmatpush1.bf16.msra.mxu0 0
    %1344 = vmatprep.subr.bf16.mxu0 0
    %1345 = vmatpush1.bf16.msra.mxu0 0
    %1346 = vmatprep.mubr.bf16.mxu0 0
    %1347 = vmatmul.mubr.bf16.gmra.mrb[0].mxu0 %v1312
    %v1348 = vpop.f32.mrb[0].mxu0
    %v1349 = vadd.f32 0.0, %v1348
    %v1350 = vpop.f32.mrb[0].mxu0
    %v1351 = vpop.f32.mrb[0].mxu0
    %v1352 = vadd.f32 0.0, %v1351
    %v1353 = vpop.f32.mrb[0].mxu0
    %1354 = vdwg.mxu0
    %1355 = vmatprep.subr.bf16.mxu0 0
    %1356 = vmatpush1.bf16.xpose.msra.mxu0 %v1236
    %1357 = vmatprep.subr.bf16.mxu0 0
    %1358 = vmatpush1.bf16.xpose.msra.mxu0 0
    %1359 = vmatprep.subr.bf16.mxu0 0
    %1360 = vmatpush1.bf16.xpose.msra.mxu0 0
    %1361 = vmatprep.subr.bf16.mxu0 0
    %1362 = vmatpush1.bf16.xpose.msra.mxu0 0
    %1363 = vmatprep.subr.bf16.mxu0 0
    %1364 = vmatpush1.bf16.xpose.msra.mxu0 0
    %1365 = vmatprep.subr.bf16.mxu0 0
    %1366 = vmatpush1.bf16.xpose.msra.mxu0 0
    %1367 = vmatprep.subr.bf16.mxu0 0
    %1368 = vmatpush1.bf16.xpose.msra.mxu0 0
    %1369 = vmatprep.subr.bf16.mxu0 0
    %1370 = vmatpush1.bf16.xpose.msra.mxu0 0
    %1371 = vmatprep.subr.bf16.mxu0 0
    %1372 = vmatpush1.bf16.xpose.msra.mxu0 0
    %1373 = vmatprep.subr.bf16.mxu0 0
    %1374 = vmatpush1.bf16.xpose.msra.mxu0 0
    %1375 = vmatprep.subr.bf16.mxu0 0
    %1376 = vmatpush1.bf16.xpose.msra.mxu0 0
    %1377 = vmatprep.subr.bf16.mxu0 0
    %1378 = vmatpush1.bf16.xpose.msra.mxu0 0
    %1379 = vmatprep.subr.bf16.mxu0 0
    %1380 = vmatpush1.bf16.xpose.msra.mxu0 0
    %1381 = vmatprep.subr.bf16.mxu0 0
    %1382 = vmatpush1.bf16.xpose.msra.mxu0 0
    %1383 = vmatprep.subr.bf16.mxu0 0
    %1384 = vmatpush1.bf16.xpose.msra.mxu0 0
    %1385 = vmatprep.subr.bf16.mxu0 0
    %1386 = vmatpush1.bf16.xpose.msra.mxu0 0
    %1387 = vmatprep.mubr.bf16.mxu0 0
    %1388 = vmatmul.mubr.bf16.gmra.mrb[0].mxu0 %v1234
    %v1389 = vpop.f32.mrb[0].mxu0
    %v1390 = vadd.f32 0.0, %v1389
    %v1391 = vpop.f32.mrb[0].mxu0
    %v1392 = vpop.f32.mrb[0].mxu0
    %v1393 = vadd.f32 0.0, %v1392
    %v1394 = vpop.f32.mrb[0].mxu0
    %1395 = vdwg.mxu0
    %v1396 = vmul.f32 %v1390, 0.088388346
    %v1397 = vmul.f32 %v1393, 0.088388346
    %v1398 = vadd.f32 %v1396, %v1285
    %v1399 = vadd.f32 %v1397, %v1285
    %v1400 = vsel %vm1009, %v1398, -inf
    %1401 = vmax.xlane.f32.xlu0 %v1400
    %v1402 = vpop.xlane.xlu0 %1401
    %v1403 = vsel %vm1009, %v1399, -inf
    %1404 = vmax.xlane.f32.xlu0 %v1403
    %v1405 = vpop.xlane.xlu0 %1404
    %v1406 = vsub.f32 %v1398, %v1402
    %v1407 = vsub.f32 %v1399, %v1405
    %v1408 = vmul.f32 %v1406, 1.442695
    %v1409 = vpow.pop %v1408
    %v1410 = vmul.f32 %v1407, 1.442695
    %v1411 = vpow.pop %v1410
    %v1412 = vsel %vm1009, %v1409, 0.0
    %1413 = vadd.xlane.f32.xlu0 %v1412
    %v1414 = vpop.xlane.xlu0 %1413
    %v1415 = vsel %vm1009, %v1411, 0.0
    %1416 = vadd.xlane.f32.xlu0 %v1415
    %v1417 = vpop.xlane.xlu0 %1416
    %v1418 = vrcp.pop %v1414
    %v1419 = vrcp.pop %v1417
    %v1420 = vmul.f32 %v1409, %v1418
    %v1421 = vmul.f32 %v1411, %v1419
    %v1422 = vpack.c.bf16 %v1421, %v1420
    %v1424 = vsel %vm1009, %v1422, 0
    %1426 = vmatprep.subr.bf16.mxu0 0
    %1427 = vmatpush1.bf16.msra.mxu0 %v1238
    %1428 = vmatprep.subr.bf16.mxu0 0
    %1429 = vmatpush1.bf16.msra.mxu0 0
    %1430 = vmatprep.subr.bf16.mxu0 0
    %1431 = vmatpush1.bf16.msra.mxu0 0
    %1432 = vmatprep.subr.bf16.mxu0 0
    %1433 = vmatpush1.bf16.msra.mxu0 0
    %1434 = vmatprep.subr.bf16.mxu0 0
    %1435 = vmatpush1.bf16.msra.mxu0 0
    %1436 = vmatprep.subr.bf16.mxu0 0
    %1437 = vmatpush1.bf16.msra.mxu0 0
    %1438 = vmatprep.subr.bf16.mxu0 0
    %1439 = vmatpush1.bf16.msra.mxu0 0
    %1440 = vmatprep.subr.bf16.mxu0 0
    %1441 = vmatpush1.bf16.msra.mxu0 0
    %1442 = vmatprep.subr.bf16.mxu0 0
    %1443 = vmatpush1.bf16.msra.mxu0 0
    %1444 = vmatprep.subr.bf16.mxu0 0
    %1445 = vmatpush1.bf16.msra.mxu0 0
    %1446 = vmatprep.subr.bf16.mxu0 0
    %1447 = vmatpush1.bf16.msra.mxu0 0
    %1448 = vmatprep.subr.bf16.mxu0 0
    %1449 = vmatpush1.bf16.msra.mxu0 0
    %1450 = vmatprep.subr.bf16.mxu0 0
    %1451 = vmatpush1.bf16.msra.mxu0 0
    %1452 = vmatprep.subr.bf16.mxu0 0
    %1453 = vmatpush1.bf16.msra.mxu0 0
    %1454 = vmatprep.subr.bf16.mxu0 0
    %1455 = vmatpush1.bf16.msra.mxu0 0
    %1456 = vmatprep.subr.bf16.mxu0 0
    %1457 = vmatpush1.bf16.msra.mxu0 0
    %1458 = vmatprep.mubr.bf16.mxu0 0
    %1459 = vmatmul.mubr.bf16.gmra.mrb[0].mxu0 %v1424
    %v1460 = vpop.f32.mrb[0].mxu0
    %v1461 = vadd.f32 0.0, %v1460
    %v1462 = vpop.f32.mrb[0].mxu0
    %v1463 = vpop.f32.mrb[0].mxu0
    %v1464 = vadd.f32 0.0, %v1463
    %v1465 = vpop.f32.mrb[0].mxu0
    %1466 = vdwg.mxu0
    %v1467 = vld [vmem:[%s9] sm:$0x3f]
    %v1468 = vld [vmem:[%s9 + $0x8] sm:$0x3f]
    %v1469 = vpack.c.bf16 %v1074, %v1071
    %v1470 = vpack.c.bf16 %v1186, %v1183
    %v1471 = vpack.c.bf16 %v1352, %v1349
    %v1472 = vpack.c.bf16 %v1464, %v1461
    %v1473 = vld [vmem:[#allocation10] sm:$0xff]
    %v1474 = vld [vmem:[#allocation10 + $0x8] sm:$0xff]
    %v1475 = vld [vmem:[#allocation10 + $0x10] sm:$0xff]
    %v1476 = vld [vmem:[#allocation10 + $0x18] sm:$0xff]
    %v1477 = vld [vmem:[#allocation10 + $0x20] sm:$0xff]
    %v1478 = vld [vmem:[#allocation10 + $0x28] sm:$0xff]
    %v1479 = vld [vmem:[#allocation10 + $0x30] sm:$0xff]
    %v1480 = vld [vmem:[#allocation10 + $0x38] sm:$0xff]
    %v1481 = vld [vmem:[#allocation10 + $0x40] sm:$0xff]
    %v1482 = vld [vmem:[#allocation10 + $0x48] sm:$0xff]
    %v1483 = vld [vmem:[#allocation10 + $0x50] sm:$0xff]
    %v1484 = vld [vmem:[#allocation10 + $0x58] sm:$0xff]
    %v1485 = vld [vmem:[#allocation10 + $0x60] sm:$0xff]
    %v1486 = vld [vmem:[#allocation10 + $0x68] sm:$0xff]
    %v1487 = vld [vmem:[#allocation10 + $0x70] sm:$0xff]
    %v1488 = vld [vmem:[#allocation10 + $0x78] sm:$0xff]
    %v1489 = vld [vmem:[#allocation10 + $0x80] sm:$0xff]
    %v1490 = vld [vmem:[#allocation10 + $0x88] sm:$0xff]
    %v1491 = vld [vmem:[#allocation10 + $0x90] sm:$0xff]
    %v1492 = vld [vmem:[#allocation10 + $0x98] sm:$0xff]
    %v1493 = vld [vmem:[#allocation10 + $0xa0] sm:$0xff]
    %v1494 = vld [vmem:[#allocation10 + $0xa8] sm:$0xff]
    %v1495 = vld [vmem:[#allocation10 + $0xb0] sm:$0xff]
    %v1496 = vld [vmem:[#allocation10 + $0xb8] sm:$0xff]
    %v1497 = vld [vmem:[#allocation10 + $0xc0] sm:$0xff]
    %v1498 = vld [vmem:[#allocation10 + $0xc8] sm:$0xff]
    %v1499 = vld [vmem:[#allocation10 + $0xd0] sm:$0xff]
    %v1500 = vld [vmem:[#allocation10 + $0xd8] sm:$0xff]
    %v1501 = vld [vmem:[#allocation10 + $0xe0] sm:$0xff]
    %v1502 = vld [vmem:[#allocation10 + $0xe8] sm:$0xff]
    %v1503 = vld [vmem:[#allocation10 + $0xf0] sm:$0xff]
    %v1504 = vld [vmem:[#allocation10 + $0xf8] sm:$0xff]
    %v1505 = vlaneseq
    %v1506 = vshrl.u32 %v1505, 7
    %v1507 = vsub.s32 0, %v1506
    %v1508 = vrot.slane %v1467, %v1507
    %v1509 = vlaneseq
    %v1510 = vshrl.u32 %v1509, 7
    %v1511 = vsub.s32 0, %v1510
    %v1512 = vrot.slane %v1468, %v1511
    %v1545 = vunpack.c.l.b16 %v1473
    %v1546 = vunpack.c.h.b16 %v1473
    %v1547 = vunpack.c.l.b16 %v1474
    %v1548 = vunpack.c.h.b16 %v1474
    %v1549 = vunpack.c.l.b16 %v1475
    %v1550 = vunpack.c.h.b16 %v1475
    %v1551 = vunpack.c.l.b16 %v1476
    %v1552 = vunpack.c.h.b16 %v1476
    %v1553 = vunpack.c.l.b16 %v1477
    %v1554 = vunpack.c.h.b16 %v1477
    %v1555 = vunpack.c.l.b16 %v1478
    %v1556 = vunpack.c.h.b16 %v1478
    %v1557 = vunpack.c.l.b16 %v1479
    %v1558 = vunpack.c.h.b16 %v1479
    %v1559 = vunpack.c.l.b16 %v1480
    %v1560 = vunpack.c.h.b16 %v1480
    %v1561 = vunpack.c.l.b16 %v1481
    %v1562 = vunpack.c.h.b16 %v1481
    %v1563 = vunpack.c.l.b16 %v1482
    %v1564 = vunpack.c.h.b16 %v1482
    %v1565 = vunpack.c.l.b16 %v1483
    %v1566 = vunpack.c.h.b16 %v1483
    %v1567 = vunpack.c.l.b16 %v1484
    %v1568 = vunpack.c.h.b16 %v1484
    %v1569 = vunpack.c.l.b16 %v1485
    %v1570 = vunpack.c.h.b16 %v1485
    %v1571 = vunpack.c.l.b16 %v1486
    %v1572 = vunpack.c.h.b16 %v1486
    %v1573 = vunpack.c.l.b16 %v1487
    %v1574 = vunpack.c.h.b16 %v1487
    %v1575 = vunpack.c.l.b16 %v1488
    %v1576 = vunpack.c.h.b16 %v1488
    %v1577 = vunpack.c.l.b16 %v1489
    %v1578 = vunpack.c.h.b16 %v1489
    %v1579 = vunpack.c.l.b16 %v1490
    %v1580 = vunpack.c.h.b16 %v1490
    %v1581 = vunpack.c.l.b16 %v1491
    %v1582 = vunpack.c.h.b16 %v1491
    %v1583 = vunpack.c.l.b16 %v1492
    %v1584 = vunpack.c.h.b16 %v1492
    %v1585 = vunpack.c.l.b16 %v1493
    %v1586 = vunpack.c.h.b16 %v1493
    %v1587 = vunpack.c.l.b16 %v1494
    %v1588 = vunpack.c.h.b16 %v1494
    %v1589 = vunpack.c.l.b16 %v1495
    %v1590 = vunpack.c.h.b16 %v1495
    %v1591 = vunpack.c.l.b16 %v1496
    %v1592 = vunpack.c.h.b16 %v1496
    %v1593 = vunpack.c.l.b16 %v1497
    %v1594 = vunpack.c.h.b16 %v1497
    %v1595 = vunpack.c.l.b16 %v1498
    %v1596 = vunpack.c.h.b16 %v1498
    %v1597 = vunpack.c.l.b16 %v1499
    %v1598 = vunpack.c.h.b16 %v1499
    %v1599 = vunpack.c.l.b16 %v1500
    %v1600 = vunpack.c.h.b16 %v1500
    %v1601 = vunpack.c.l.b16 %v1501
    %v1602 = vunpack.c.h.b16 %v1501
    %v1603 = vunpack.c.l.b16 %v1502
    %v1604 = vunpack.c.h.b16 %v1502
    %v1605 = vunpack.c.l.b16 %v1503
    %v1606 = vunpack.c.h.b16 %v1503
    %v1607 = vunpack.c.l.b16 %v1504
    %v1608 = vunpack.c.h.b16 %v1504
    %v1609 = vpack.c.b16 %v1547, %v1545
    %v1610 = vpack.c.b16 %v1548, %v1546
    %v1611 = vpack.c.b16 %v1551, %v1549
    %v1612 = vpack.c.b16 %v1552, %v1550
    %v1613 = vpack.c.b16 %v1555, %v1553
    %v1614 = vpack.c.b16 %v1556, %v1554
    %v1615 = vpack.c.b16 %v1559, %v1557
    %v1616 = vpack.c.b16 %v1560, %v1558
    %v1617 = vpack.c.b16 %v1563, %v1561
    %v1618 = vpack.c.b16 %v1564, %v1562
    %v1619 = vpack.c.b16 %v1567, %v1565
    %v1620 = vpack.c.b16 %v1568, %v1566
    %v1621 = vpack.c.b16 %v1571, %v1569
    %v1622 = vpack.c.b16 %v1572, %v1570
    %v1623 = vpack.c.b16 %v1575, %v1573
    %v1624 = vpack.c.b16 %v1576, %v1574
    %v1625 = vpack.c.b16 %v1579, %v1577
    %v1626 = vpack.c.b16 %v1580, %v1578
    %v1627 = vpack.c.b16 %v1583, %v1581
    %v1628 = vpack.c.b16 %v1584, %v1582
    %v1629 = vpack.c.b16 %v1587, %v1585
    %v1630 = vpack.c.b16 %v1588, %v1586
    %v1631 = vpack.c.b16 %v1591, %v1589
    %v1632 = vpack.c.b16 %v1592, %v1590
    %v1633 = vpack.c.b16 %v1595, %v1593
    %v1634 = vpack.c.b16 %v1596, %v1594
    %v1635 = vpack.c.b16 %v1599, %v1597
    %v1636 = vpack.c.b16 %v1600, %v1598
    %v1637 = vpack.c.b16 %v1603, %v1601
    %v1638 = vpack.c.b16 %v1604, %v1602
    %v1639 = vpack.c.b16 %v1607, %v1605
    %v1640 = vpack.c.b16 %v1608, %v1606
    %1673 = vmatprep.subr.bf16.mxu0 %v1610
    %1674 = vmatpush1.bf16.msra.mxu0 %v1609
    %1675 = vmatprep.subr.bf16.mxu0 %v1612
    %1676 = vmatpush1.bf16.msra.mxu0 %v1611
    %1677 = vmatprep.subr.bf16.mxu0 %v1614
    %1678 = vmatpush1.bf16.msra.mxu0 %v1613
    %1679 = vmatprep.subr.bf16.mxu0 %v1616
    %1680 = vmatpush1.bf16.msra.mxu0 %v1615
    %1681 = vmatprep.subr.bf16.mxu0 %v1618
    %1682 = vmatpush1.bf16.msra.mxu0 %v1617
    %1683 = vmatprep.subr.bf16.mxu0 %v1620
    %1684 = vmatpush1.bf16.msra.mxu0 %v1619
    %1685 = vmatprep.subr.bf16.mxu0 %v1622
    %1686 = vmatpush1.bf16.msra.mxu0 %v1621
    %1687 = vmatprep.subr.bf16.mxu0 %v1624
    %1688 = vmatpush1.bf16.msra.mxu0 %v1623
    %1689 = vmatprep.subr.bf16.mxu0 %v1626
    %1690 = vmatpush1.bf16.msra.mxu0 %v1625
    %1691 = vmatprep.subr.bf16.mxu0 %v1628
    %1692 = vmatpush1.bf16.msra.mxu0 %v1627
    %1693 = vmatprep.subr.bf16.mxu0 %v1630
    %1694 = vmatpush1.bf16.msra.mxu0 %v1629
    %1695 = vmatprep.subr.bf16.mxu0 %v1632
    %1696 = vmatpush1.bf16.msra.mxu0 %v1631
    %1697 = vmatprep.subr.bf16.mxu0 %v1634
    %1698 = vmatpush1.bf16.msra.mxu0 %v1633
    %1699 = vmatprep.subr.bf16.mxu0 %v1636
    %1700 = vmatpush1.bf16.msra.mxu0 %v1635
    %1701 = vmatprep.subr.bf16.mxu0 %v1638
    %1702 = vmatpush1.bf16.msra.mxu0 %v1637
    %1703 = vmatprep.subr.bf16.mxu0 %v1640
    %1704 = vmatpush1.bf16.msra.mxu0 %v1639
    %1705 = vmatprep.mubr.bf16.mxu0 %v1470
    %1706 = vmatmul.mubr.bf16.gmra.mrb[0].mxu0 %v1469
    %v1707 = vpop.f32.mrb[0].mxu0
    %v1708 = vadd.f32 %v1508, %v1707
    %v1709 = vpop.f32.mrb[0].mxu0
    %v1710 = vadd.f32 %v1512, %v1709
    %v1711 = vpop.f32.mrb[0].mxu0
    %v1712 = vadd.f32 %v1508, %v1711
    %v1713 = vpop.f32.mrb[0].mxu0
    %v1714 = vadd.f32 %v1512, %v1713
    %1715 = vmatprep.mubr.bf16.mxu0 %v1472
    %1716 = vmatmul.mubr.bf16.gmra.mrb[0].mxu0 %v1471
    %v1717 = vpop.f32.mrb[0].mxu0
    %v1718 = vadd.f32 %v1508, %v1717
    %v1719 = vpop.f32.mrb[0].mxu0
    %v1720 = vadd.f32 %v1512, %v1719
    %v1721 = vpop.f32.mrb[0].mxu0
    %v1722 = vadd.f32 %v1508, %v1721
    %v1723 = vpop.f32.mrb[0].mxu0
    %v1724 = vadd.f32 %v1512, %v1723
    %1725 = vdwg.mxu0
    %v1726 = vadd.f32 %v1708, %v128
    %v1727 = vadd.f32 %v1710, %v129
    %v1728 = vadd.f32 %v1712, %v130
    %v1729 = vadd.f32 %v1714, %v131
    %v1730 = vadd.f32 %v1718, %v132
    %v1731 = vadd.f32 %v1720, %v133
    %v1732 = vadd.f32 %v1722, %v134
    %v1733 = vadd.f32 %v1724, %v135
    %v1734 = vadd.f32 %v1726, %v1727
    %1735 = vadd.xlane.f32.xlu0 %v1734
    %v1736 = vpop.xlane.xlu0 %1735
    %v1737 = vadd.f32 %v1728, %v1729
    %1738 = vadd.xlane.f32.xlu0 %v1737
    %v1739 = vpop.xlane.xlu0 %1738
    %v1740 = vadd.f32 %v1730, %v1731
    %1741 = vadd.xlane.f32.xlu0 %v1740
    %v1742 = vpop.xlane.xlu0 %1741
    %v1743 = vadd.f32 %v1732, %v1733
    %1744 = vadd.xlane.f32.xlu0 %v1743
    %v1745 = vpop.xlane.xlu0 %1744
    %v1746 = vrcp.pop 256.0
    %v1747 = vmul.f32 %v1736, %v1746
    %v1748 = vmul.f32 %v1739, %v1746
    %v1749 = vmul.f32 %v1742, %v1746
    %v1750 = vmul.f32 %v1745, %v1746
    %v1751 = vsub.f32 %v1726, %v1747
    %v1752 = vsub.f32 %v1727, %v1747
    %v1753 = vsub.f32 %v1728, %v1748
    %v1754 = vsub.f32 %v1729, %v1748
    %v1755 = vsub.f32 %v1730, %v1749
    %v1756 = vsub.f32 %v1731, %v1749
    %v1757 = vsub.f32 %v1732, %v1750
    %v1758 = vsub.f32 %v1733, %v1750
    %v1759 = vmul.f32 %v1751, %v1751
    %v1760 = vmul.f32 %v1752, %v1752
    %v1761 = vmul.f32 %v1753, %v1753
    %v1762 = vmul.f32 %v1754, %v1754
    %v1763 = vmul.f32 %v1755, %v1755
    %v1764 = vmul.f32 %v1756, %v1756
    %v1765 = vmul.f32 %v1757, %v1757
    %v1766 = vmul.f32 %v1758, %v1758
    %v1767 = vadd.f32 %v1759, %v1760
    %1768 = vadd.xlane.f32.xlu0 %v1767
    %v1769 = vpop.xlane.xlu0 %1768
    %v1770 = vadd.f32 %v1761, %v1762
    %1771 = vadd.xlane.f32.xlu0 %v1770
    %v1772 = vpop.xlane.xlu0 %1771
    %v1773 = vadd.f32 %v1763, %v1764
    %1774 = vadd.xlane.f32.xlu0 %v1773
    %v1775 = vpop.xlane.xlu0 %1774
    %v1776 = vadd.f32 %v1765, %v1766
    %1777 = vadd.xlane.f32.xlu0 %v1776
    %v1778 = vpop.xlane.xlu0 %1777
    %v1779 = vmul.f32 %v1769, %v1746
    %v1780 = vmul.f32 %v1772, %v1746
    %v1781 = vmul.f32 %v1775, %v1746
    %v1782 = vmul.f32 %v1778, %v1746
    %v1783 = vadd.f32 %v1779, 1e-12
    %v1784 = vadd.f32 %v1780, 1e-12
    %v1785 = vadd.f32 %v1781, 1e-12
    %v1786 = vadd.f32 %v1782, 1e-12
    %v1787 = vrsqrt.pop %v1783
    %v1788 = vrsqrt.pop %v1784
    %v1789 = vrsqrt.pop %v1785
    %v1790 = vrsqrt.pop %v1786
    %v1791 = vmul.f32 %v1751, %v1787
    %v1792 = vmul.f32 %v1752, %v1787
    %v1793 = vmul.f32 %v1753, %v1788
    %v1794 = vmul.f32 %v1754, %v1788
    %v1795 = vmul.f32 %v1755, %v1789
    %v1796 = vmul.f32 %v1756, %v1789
    %v1797 = vmul.f32 %v1757, %v1790
    %v1798 = vmul.f32 %v1758, %v1790
    %v1799 = vlaneseq
    %v1800 = vshrl.u32 %v1799, 7
    %v1801 = vsub.s32 1, %v1800
    %v1802 = vrot.slane %v1467, %v1801
    %v1803 = vlaneseq
    %v1804 = vshrl.u32 %v1803, 7
    %v1805 = vsub.s32 1, %v1804
    %v1806 = vrot.slane %v1468, %v1805
    %v1807 = vmul.f32 %v1791, %v1802
    %v1808 = vmul.f32 %v1792, %v1806
    %v1809 = vmul.f32 %v1793, %v1802
    %v1810 = vmul.f32 %v1794, %v1806
    %v1811 = vmul.f32 %v1795, %v1802
    %v1812 = vmul.f32 %v1796, %v1806
    %v1813 = vmul.f32 %v1797, %v1802
    %v1814 = vmul.f32 %v1798, %v1806
    %v1815 = vlaneseq
    %v1816 = vshrl.u32 %v1815, 7
    %v1817 = vsub.s32 2, %v1816
    %v1818 = vrot.slane %v1467, %v1817
    %v1819 = vlaneseq
    %v1820 = vshrl.u32 %v1819, 7
    %v1821 = vsub.s32 2, %v1820
    %v1822 = vrot.slane %v1468, %v1821
    %v1823 = vadd.f32 %v1807, %v1818
    %v1824 = vadd.f32 %v1808, %v1822
    %v1825 = vadd.f32 %v1809, %v1818
    %v1826 = vadd.f32 %v1810, %v1822
    %v1827 = vadd.f32 %v1811, %v1818
    %v1828 = vadd.f32 %v1812, %v1822
    %v1829 = vadd.f32 %v1813, %v1818
    %v1830 = vadd.f32 %v1814, %v1822
    %v1831 = vpack.c.bf16 %v1825, %v1823
    %v1832 = vpack.c.bf16 %v1826, %v1824
    %v1833 = vpack.c.bf16 %v1829, %v1827
    %v1834 = vpack.c.bf16 %v1830, %v1828
    %v1835 = vld [vmem:[#allocation11] sm:$0xff]
    %v1836 = vld [vmem:[#allocation11 + $0x8] sm:$0xff]
    %v1837 = vld [vmem:[#allocation11 + $0x10] sm:$0xff]
    %v1838 = vld [vmem:[#allocation11 + $0x18] sm:$0xff]
    %v1839 = vld [vmem:[#allocation11 + $0x20] sm:$0xff]
    %v1840 = vld [vmem:[#allocation11 + $0x28] sm:$0xff]
    %v1841 = vld [vmem:[#allocation11 + $0x30] sm:$0xff]
    %v1842 = vld [vmem:[#allocation11 + $0x38] sm:$0xff]
    %v1843 = vld [vmem:[#allocation11 + $0x40] sm:$0xff]
    %v1844 = vld [vmem:[#allocation11 + $0x48] sm:$0xff]
    %v1845 = vld [vmem:[#allocation11 + $0x50] sm:$0xff]
    %v1846 = vld [vmem:[#allocation11 + $0x58] sm:$0xff]
    %v1847 = vld [vmem:[#allocation11 + $0x60] sm:$0xff]
    %v1848 = vld [vmem:[#allocation11 + $0x68] sm:$0xff]
    %v1849 = vld [vmem:[#allocation11 + $0x70] sm:$0xff]
    %v1850 = vld [vmem:[#allocation11 + $0x78] sm:$0xff]
    %v1851 = vld [vmem:[#allocation11 + $0x80] sm:$0xff]
    %v1852 = vld [vmem:[#allocation11 + $0x88] sm:$0xff]
    %v1853 = vld [vmem:[#allocation11 + $0x90] sm:$0xff]
    %v1854 = vld [vmem:[#allocation11 + $0x98] sm:$0xff]
    %v1855 = vld [vmem:[#allocation11 + $0xa0] sm:$0xff]
    %v1856 = vld [vmem:[#allocation11 + $0xa8] sm:$0xff]
    %v1857 = vld [vmem:[#allocation11 + $0xb0] sm:$0xff]
    %v1858 = vld [vmem:[#allocation11 + $0xb8] sm:$0xff]
    %v1859 = vld [vmem:[#allocation11 + $0xc0] sm:$0xff]
    %v1860 = vld [vmem:[#allocation11 + $0xc8] sm:$0xff]
    %v1861 = vld [vmem:[#allocation11 + $0xd0] sm:$0xff]
    %v1862 = vld [vmem:[#allocation11 + $0xd8] sm:$0xff]
    %v1863 = vld [vmem:[#allocation11 + $0xe0] sm:$0xff]
    %v1864 = vld [vmem:[#allocation11 + $0xe8] sm:$0xff]
    %v1865 = vld [vmem:[#allocation11 + $0xf0] sm:$0xff]
    %v1866 = vld [vmem:[#allocation11 + $0xf8] sm:$0xff]
    %v1867 = vld [vmem:[#allocation11 + $0x100] sm:$0xff]
    %v1868 = vld [vmem:[#allocation11 + $0x108] sm:$0xff]
    %v1869 = vld [vmem:[#allocation11 + $0x110] sm:$0xff]
    %v1870 = vld [vmem:[#allocation11 + $0x118] sm:$0xff]
    %v1871 = vld [vmem:[#allocation11 + $0x120] sm:$0xff]
    %v1872 = vld [vmem:[#allocation11 + $0x128] sm:$0xff]
    %v1873 = vld [vmem:[#allocation11 + $0x130] sm:$0xff]
    %v1874 = vld [vmem:[#allocation11 + $0x138] sm:$0xff]
    %v1875 = vld [vmem:[#allocation11 + $0x140] sm:$0xff]
    %v1876 = vld [vmem:[#allocation11 + $0x148] sm:$0xff]
    %v1877 = vld [vmem:[#allocation11 + $0x150] sm:$0xff]
    %v1878 = vld [vmem:[#allocation11 + $0x158] sm:$0xff]
    %v1879 = vld [vmem:[#allocation11 + $0x160] sm:$0xff]
    %v1880 = vld [vmem:[#allocation11 + $0x168] sm:$0xff]
    %v1881 = vld [vmem:[#allocation11 + $0x170] sm:$0xff]
    %v1882 = vld [vmem:[#allocation11 + $0x178] sm:$0xff]
    %v1883 = vld [vmem:[#allocation11 + $0x180] sm:$0xff]
    %v1884 = vld [vmem:[#allocation11 + $0x188] sm:$0xff]
    %v1885 = vld [vmem:[#allocation11 + $0x190] sm:$0xff]
    %v1886 = vld [vmem:[#allocation11 + $0x198] sm:$0xff]
    %v1887 = vld [vmem:[#allocation11 + $0x1a0] sm:$0xff]
    %v1888 = vld [vmem:[#allocation11 + $0x1a8] sm:$0xff]
    %v1889 = vld [vmem:[#allocation11 + $0x1b0] sm:$0xff]
    %v1890 = vld [vmem:[#allocation11 + $0x1b8] sm:$0xff]
    %v1891 = vld [vmem:[#allocation11 + $0x1c0] sm:$0xff]
    %v1892 = vld [vmem:[#allocation11 + $0x1c8] sm:$0xff]
    %v1893 = vld [vmem:[#allocation11 + $0x1d0] sm:$0xff]
    %v1894 = vld [vmem:[#allocation11 + $0x1d8] sm:$0xff]
    %v1895 = vld [vmem:[#allocation11 + $0x1e0] sm:$0xff]
    %v1896 = vld [vmem:[#allocation11 + $0x1e8] sm:$0xff]
    %v1897 = vld [vmem:[#allocation11 + $0x1f0] sm:$0xff]
    %v1898 = vld [vmem:[#allocation11 + $0x1f8] sm:$0xff]
    %v1899 = vld [vmem:[%s7] sm:$0xf]
    %v1901 = vlaneseq
    %v1902 = vshrl.u32 %v1901, 7
    %v1903 = vsub.s32 0, %v1902
    %v1904 = vrot.slane %v1899, %v1903
    %v1905 = vlaneseq
    %v1906 = vshrl.u32 %v1905, 7
    %v1907 = vsub.s32 1, %v1906
    %v1908 = vrot.slane %v1899, %v1907
    %v1909 = vlaneseq
    %v1910 = vshrl.u32 %v1909, 7
    %v1911 = vsub.s32 2, %v1910
    %v1912 = vrot.slane %v1899, %v1911
    %v1913 = vlaneseq
    %v1914 = vshrl.u32 %v1913, 7
    %v1915 = vsub.s32 3, %v1914
    %v1916 = vrot.slane %v1899, %v1915
    %v1985 = vunpack.c.l.b16 %v1835
    %v1986 = vunpack.c.h.b16 %v1835
    %v1987 = vunpack.c.l.b16 %v1836
    %v1988 = vunpack.c.h.b16 %v1836
    %v1989 = vunpack.c.l.b16 %v1837
    %v1990 = vunpack.c.h.b16 %v1837
    %v1991 = vunpack.c.l.b16 %v1838
    %v1992 = vunpack.c.h.b16 %v1838
    %v1993 = vunpack.c.l.b16 %v1839
    %v1994 = vunpack.c.h.b16 %v1839
    %v1995 = vunpack.c.l.b16 %v1840
    %v1996 = vunpack.c.h.b16 %v1840
    %v1997 = vunpack.c.l.b16 %v1841
    %v1998 = vunpack.c.h.b16 %v1841
    %v1999 = vunpack.c.l.b16 %v1842
    %v2000 = vunpack.c.h.b16 %v1842
    %v2001 = vunpack.c.l.b16 %v1843
    %v2002 = vunpack.c.h.b16 %v1843
    %v2003 = vunpack.c.l.b16 %v1844
    %v2004 = vunpack.c.h.b16 %v1844
    %v2005 = vunpack.c.l.b16 %v1845
    %v2006 = vunpack.c.h.b16 %v1845
    %v2007 = vunpack.c.l.b16 %v1846
    %v2008 = vunpack.c.h.b16 %v1846
    %v2009 = vunpack.c.l.b16 %v1847
    %v2010 = vunpack.c.h.b16 %v1847
    %v2011 = vunpack.c.l.b16 %v1848
    %v2012 = vunpack.c.h.b16 %v1848
    %v2013 = vunpack.c.l.b16 %v1849
    %v2014 = vunpack.c.h.b16 %v1849
    %v2015 = vunpack.c.l.b16 %v1850
    %v2016 = vunpack.c.h.b16 %v1850
    %v2017 = vunpack.c.l.b16 %v1851
    %v2018 = vunpack.c.h.b16 %v1851
    %v2019 = vunpack.c.l.b16 %v1852
    %v2020 = vunpack.c.h.b16 %v1852
    %v2021 = vunpack.c.l.b16 %v1853
    %v2022 = vunpack.c.h.b16 %v1853
    %v2023 = vunpack.c.l.b16 %v1854
    %v2024 = vunpack.c.h.b16 %v1854
    %v2025 = vunpack.c.l.b16 %v1855
    %v2026 = vunpack.c.h.b16 %v1855
    %v2027 = vunpack.c.l.b16 %v1856
    %v2028 = vunpack.c.h.b16 %v1856
    %v2029 = vunpack.c.l.b16 %v1857
    %v2030 = vunpack.c.h.b16 %v1857
    %v2031 = vunpack.c.l.b16 %v1858
    %v2032 = vunpack.c.h.b16 %v1858
    %v2033 = vunpack.c.l.b16 %v1859
    %v2034 = vunpack.c.h.b16 %v1859
    %v2035 = vunpack.c.l.b16 %v1860
    %v2036 = vunpack.c.h.b16 %v1860
    %v2037 = vunpack.c.l.b16 %v1861
    %v2038 = vunpack.c.h.b16 %v1861
    %v2039 = vunpack.c.l.b16 %v1862
    %v2040 = vunpack.c.h.b16 %v1862
    %v2041 = vunpack.c.l.b16 %v1863
    %v2042 = vunpack.c.h.b16 %v1863
    %v2043 = vunpack.c.l.b16 %v1864
    %v2044 = vunpack.c.h.b16 %v1864
    %v2045 = vunpack.c.l.b16 %v1865
    %v2046 = vunpack.c.h.b16 %v1865
    %v2047 = vunpack.c.l.b16 %v1866
    %v2048 = vunpack.c.h.b16 %v1866
    %v2049 = vunpack.c.l.b16 %v1867
    %v2050 = vunpack.c.h.b16 %v1867
    %v2051 = vunpack.c.l.b16 %v1868
    %v2052 = vunpack.c.h.b16 %v1868
    %v2053 = vunpack.c.l.b16 %v1869
    %v2054 = vunpack.c.h.b16 %v1869
    %v2055 = vunpack.c.l.b16 %v1870
    %v2056 = vunpack.c.h.b16 %v1870
    %v2057 = vunpack.c.l.b16 %v1871
    %v2058 = vunpack.c.h.b16 %v1871
    %v2059 = vunpack.c.l.b16 %v1872
    %v2060 = vunpack.c.h.b16 %v1872
    %v2061 = vunpack.c.l.b16 %v1873
    %v2062 = vunpack.c.h.b16 %v1873
    %v2063 = vunpack.c.l.b16 %v1874
    %v2064 = vunpack.c.h.b16 %v1874
    %v2065 = vunpack.c.l.b16 %v1875
    %v2066 = vunpack.c.h.b16 %v1875
    %v2067 = vunpack.c.l.b16 %v1876
    %v2068 = vunpack.c.h.b16 %v1876
    %v2069 = vunpack.c.l.b16 %v1877
    %v2070 = vunpack.c.h.b16 %v1877
    %v2071 = vunpack.c.l.b16 %v1878
    %v2072 = vunpack.c.h.b16 %v1878
    %v2073 = vunpack.c.l.b16 %v1879
    %v2074 = vunpack.c.h.b16 %v1879
    %v2075 = vunpack.c.l.b16 %v1880
    %v2076 = vunpack.c.h.b16 %v1880
    %v2077 = vunpack.c.l.b16 %v1881
    %v2078 = vunpack.c.h.b16 %v1881
    %v2079 = vunpack.c.l.b16 %v1882
    %v2080 = vunpack.c.h.b16 %v1882
    %v2081 = vunpack.c.l.b16 %v1883
    %v2082 = vunpack.c.h.b16 %v1883
    %v2083 = vunpack.c.l.b16 %v1884
    %v2084 = vunpack.c.h.b16 %v1884
    %v2085 = vunpack.c.l.b16 %v1885
    %v2086 = vunpack.c.h.b16 %v1885
    %v2087 = vunpack.c.l.b16 %v1886
    %v2088 = vunpack.c.h.b16 %v1886
    %v2089 = vunpack.c.l.b16 %v1887
    %v2090 = vunpack.c.h.b16 %v1887
    %v2091 = vunpack.c.l.b16 %v1888
    %v2092 = vunpack.c.h.b16 %v1888
    %v2093 = vunpack.c.l.b16 %v1889
    %v2094 = vunpack.c.h.b16 %v1889
    %v2095 = vunpack.c.l.b16 %v1890
    %v2096 = vunpack.c.h.b16 %v1890
    %v2097 = vunpack.c.l.b16 %v1891
    %v2098 = vunpack.c.h.b16 %v1891
    %v2099 = vunpack.c.l.b16 %v1892
    %v2100 = vunpack.c.h.b16 %v1892
    %v2101 = vunpack.c.l.b16 %v1893
    %v2102 = vunpack.c.h.b16 %v1893
    %v2103 = vunpack.c.l.b16 %v1894
    %v2104 = vunpack.c.h.b16 %v1894
    %v2105 = vunpack.c.l.b16 %v1895
    %v2106 = vunpack.c.h.b16 %v1895
    %v2107 = vunpack.c.l.b16 %v1896
    %v2108 = vunpack.c.h.b16 %v1896
    %v2109 = vunpack.c.l.b16 %v1897
    %v2110 = vunpack.c.h.b16 %v1897
    %v2111 = vunpack.c.l.b16 %v1898
    %v2112 = vunpack.c.h.b16 %v1898
    %v2113 = vpack.c.b16 %v1989, %v1985
    %v2114 = vpack.c.b16 %v1990, %v1986
    %v2115 = vpack.c.b16 %v1991, %v1987
    %v2116 = vpack.c.b16 %v1992, %v1988
    %v2117 = vpack.c.b16 %v1997, %v1993
    %v2118 = vpack.c.b16 %v1998, %v1994
    %v2119 = vpack.c.b16 %v1999, %v1995
    %v2120 = vpack.c.b16 %v2000, %v1996
    %v2121 = vpack.c.b16 %v2005, %v2001
    %v2122 = vpack.c.b16 %v2006, %v2002
    %v2123 = vpack.c.b16 %v2007, %v2003
    %v2124 = vpack.c.b16 %v2008, %v2004
    %v2125 = vpack.c.b16 %v2013, %v2009
    %v2126 = vpack.c.b16 %v2014, %v2010
    %v2127 = vpack.c.b16 %v2015, %v2011
    %v2128 = vpack.c.b16 %v2016, %v2012
    %v2129 = vpack.c.b16 %v2021, %v2017
    %v2130 = vpack.c.b16 %v2022, %v2018
    %v2131 = vpack.c.b16 %v2023, %v2019
    %v2132 = vpack.c.b16 %v2024, %v2020
    %v2133 = vpack.c.b16 %v2029, %v2025
    %v2134 = vpack.c.b16 %v2030, %v2026
    %v2135 = vpack.c.b16 %v2031, %v2027
    %v2136 = vpack.c.b16 %v2032, %v2028
    %v2137 = vpack.c.b16 %v2037, %v2033
    %v2138 = vpack.c.b16 %v2038, %v2034
    %v2139 = vpack.c.b16 %v2039, %v2035
    %v2140 = vpack.c.b16 %v2040, %v2036
    %v2141 = vpack.c.b16 %v2045, %v2041
    %v2142 = vpack.c.b16 %v2046, %v2042
    %v2143 = vpack.c.b16 %v2047, %v2043
    %v2144 = vpack.c.b16 %v2048, %v2044
    %v2145 = vpack.c.b16 %v2053, %v2049
    %v2146 = vpack.c.b16 %v2054, %v2050
    %v2147 = vpack.c.b16 %v2055, %v2051
    %v2148 = vpack.c.b16 %v2056, %v2052
    %v2149 = vpack.c.b16 %v2061, %v2057
    %v2150 = vpack.c.b16 %v2062, %v2058
    %v2151 = vpack.c.b16 %v2063, %v2059
    %v2152 = vpack.c.b16 %v2064, %v2060
    %v2153 = vpack.c.b16 %v2069, %v2065
    %v2154 = vpack.c.b16 %v2070, %v2066
    %v2155 = vpack.c.b16 %v2071, %v2067
    %v2156 = vpack.c.b16 %v2072, %v2068
    %v2157 = vpack.c.b16 %v2077, %v2073
    %v2158 = vpack.c.b16 %v2078, %v2074
    %v2159 = vpack.c.b16 %v2079, %v2075
    %v2160 = vpack.c.b16 %v2080, %v2076
    %v2161 = vpack.c.b16 %v2085, %v2081
    %v2162 = vpack.c.b16 %v2086, %v2082
    %v2163 = vpack.c.b16 %v2087, %v2083
    %v2164 = vpack.c.b16 %v2088, %v2084
    %v2165 = vpack.c.b16 %v2093, %v2089
    %v2166 = vpack.c.b16 %v2094, %v2090
    %v2167 = vpack.c.b16 %v2095, %v2091
    %v2168 = vpack.c.b16 %v2096, %v2092
    %v2169 = vpack.c.b16 %v2101, %v2097
    %v2170 = vpack.c.b16 %v2102, %v2098
    %v2171 = vpack.c.b16 %v2103, %v2099
    %v2172 = vpack.c.b16 %v2104, %v2100
    %v2173 = vpack.c.b16 %v2109, %v2105
    %v2174 = vpack.c.b16 %v2110, %v2106
    %v2175 = vpack.c.b16 %v2111, %v2107
    %v2176 = vpack.c.b16 %v2112, %v2108
    %2241 = vmatprep.subr.bf16.mxu0 %v2114
    %2242 = vmatpush1.bf16.msra.mxu0 %v2113
    %2243 = vmatprep.subr.bf16.mxu0 %v2118
    %2244 = vmatpush1.bf16.msra.mxu0 %v2117
    %2245 = vmatprep.subr.bf16.mxu0 %v2122
    %2246 = vmatpush1.bf16.msra.mxu0 %v2121
    %2247 = vmatprep.subr.bf16.mxu0 %v2126
    %2248 = vmatpush1.bf16.msra.mxu0 %v2125
    %2249 = vmatprep.subr.bf16.mxu0 %v2130
    %2250 = vmatpush1.bf16.msra.mxu0 %v2129
    %2251 = vmatprep.subr.bf16.mxu0 %v2134
    %2252 = vmatpush1.bf16.msra.mxu0 %v2133
    %2253 = vmatprep.subr.bf16.mxu0 %v2138
    %2254 = vmatpush1.bf16.msra.mxu0 %v2137
    %2255 = vmatprep.subr.bf16.mxu0 %v2142
    %2256 = vmatpush1.bf16.msra.mxu0 %v2141
    %2257 = vmatprep.subr.bf16.mxu0 %v2146
    %2258 = vmatpush1.bf16.msra.mxu0 %v2145
    %2259 = vmatprep.subr.bf16.mxu0 %v2150
    %2260 = vmatpush1.bf16.msra.mxu0 %v2149
    %2261 = vmatprep.subr.bf16.mxu0 %v2154
    %2262 = vmatpush1.bf16.msra.mxu0 %v2153
    %2263 = vmatprep.subr.bf16.mxu0 %v2158
    %2264 = vmatpush1.bf16.msra.mxu0 %v2157
    %2265 = vmatprep.subr.bf16.mxu0 %v2162
    %2266 = vmatpush1.bf16.msra.mxu0 %v2161
    %2267 = vmatprep.subr.bf16.mxu0 %v2166
    %2268 = vmatpush1.bf16.msra.mxu0 %v2165
    %2269 = vmatprep.subr.bf16.mxu0 %v2170
    %2270 = vmatpush1.bf16.msra.mxu0 %v2169
    %2271 = vmatprep.subr.bf16.mxu0 %v2174
    %2272 = vmatpush1.bf16.msra.mxu0 %v2173
    %2273 = vmatprep.mubr.bf16.mxu0 %v1832
    %2274 = vmatmul.mubr.bf16.gmra.mrb[0].mxu0 %v1831
    %v2275 = vpop.f32.mrb[0].mxu0
    %v2276 = vadd.f32 %v1904, %v2275
    %v2277 = vpop.f32.mrb[0].mxu0
    %v2278 = vadd.f32 %v1908, %v2277
    %v2279 = vpop.f32.mrb[0].mxu0
    %v2280 = vadd.f32 %v1904, %v2279
    %v2281 = vpop.f32.mrb[0].mxu0
    %v2282 = vadd.f32 %v1908, %v2281
    %2283 = vmatprep.mubr.bf16.mxu0 %v1834
    %2284 = vmatmul.mubr.bf16.gmra.mrb[0].mxu0 %v1833
    %v2285 = vpop.f32.mrb[0].mxu0
    %v2286 = vadd.f32 %v1904, %v2285
    %v2287 = vpop.f32.mrb[0].mxu0
    %v2288 = vadd.f32 %v1908, %v2287
    %v2289 = vpop.f32.mrb[0].mxu0
    %v2290 = vadd.f32 %v1904, %v2289
    %v2291 = vpop.f32.mrb[0].mxu0
    %v2292 = vadd.f32 %v1908, %v2291
    %2293 = vdwg.mxu0
    %2294 = vmatprep.subr.bf16.mxu0 %v2116
    %2295 = vmatpush1.bf16.msra.mxu0 %v2115
    %2296 = vmatprep.subr.bf16.mxu0 %v2120
    %2297 = vmatpush1.bf16.msra.mxu0 %v2119
    %2298 = vmatprep.subr.bf16.mxu0 %v2124
    %2299 = vmatpush1.bf16.msra.mxu0 %v2123
    %2300 = vmatprep.subr.bf16.mxu0 %v2128
    %2301 = vmatpush1.bf16.msra.mxu0 %v2127
    %2302 = vmatprep.subr.bf16.mxu0 %v2132
    %2303 = vmatpush1.bf16.msra.mxu0 %v2131
    %2304 = vmatprep.subr.bf16.mxu0 %v2136
    %2305 = vmatpush1.bf16.msra.mxu0 %v2135
    %2306 = vmatprep.subr.bf16.mxu0 %v2140
    %2307 = vmatpush1.bf16.msra.mxu0 %v2139
    %2308 = vmatprep.subr.bf16.mxu0 %v2144
    %2309 = vmatpush1.bf16.msra.mxu0 %v2143
    %2310 = vmatprep.subr.bf16.mxu0 %v2148
    %2311 = vmatpush1.bf16.msra.mxu0 %v2147
    %2312 = vmatprep.subr.bf16.mxu0 %v2152
    %2313 = vmatpush1.bf16.msra.mxu0 %v2151
    %2314 = vmatprep.subr.bf16.mxu0 %v2156
    %2315 = vmatpush1.bf16.msra.mxu0 %v2155
    %2316 = vmatprep.subr.bf16.mxu0 %v2160
    %2317 = vmatpush1.bf16.msra.mxu0 %v2159
    %2318 = vmatprep.subr.bf16.mxu0 %v2164
    %2319 = vmatpush1.bf16.msra.mxu0 %v2163
    %2320 = vmatprep.subr.bf16.mxu0 %v2168
    %2321 = vmatpush1.bf16.msra.mxu0 %v2167
    %2322 = vmatprep.subr.bf16.mxu0 %v2172
    %2323 = vmatpush1.bf16.msra.mxu0 %v2171
    %2324 = vmatprep.subr.bf16.mxu0 %v2176
    %2325 = vmatpush1.bf16.msra.mxu0 %v2175
    %2326 = vmatprep.mubr.bf16.mxu0 %v1832
    %2327 = vmatmul.mubr.bf16.gmra.mrb[0].mxu0 %v1831
    %v2328 = vpop.f32.mrb[0].mxu0
    %v2329 = vadd.f32 %v1912, %v2328
    %v2330 = vpop.f32.mrb[0].mxu0
    %v2331 = vadd.f32 %v1916, %v2330
    %v2332 = vpop.f32.mrb[0].mxu0
    %v2333 = vadd.f32 %v1912, %v2332
    %v2334 = vpop.f32.mrb[0].mxu0
    %v2335 = vadd.f32 %v1916, %v2334
    %2336 = vmatprep.mubr.bf16.mxu0 %v1834
    %2337 = vmatmul.mubr.bf16.gmra.mrb[0].mxu0 %v1833
    %v2338 = vpop.f32.mrb[0].mxu0
    %v2339 = vadd.f32 %v1912, %v2338
    %v2340 = vpop.f32.mrb[0].mxu0
    %v2341 = vadd.f32 %v1916, %v2340
    %v2342 = vpop.f32.mrb[0].mxu0
    %v2343 = vadd.f32 %v1912, %v2342
    %v2344 = vpop.f32.mrb[0].mxu0
    %v2345 = vadd.f32 %v1916, %v2344
    %2346 = vdwg.mxu0
    %v2347 = vmul.f32 %v2276, 0.5
    %v2348 = vmul.f32 %v2278, 0.5
    %v2349 = vmul.f32 %v2329, 0.5
    %v2350 = vmul.f32 %v2331, 0.5
    %v2351 = vmul.f32 %v2280, 0.5
    %v2352 = vmul.f32 %v2282, 0.5
    %v2353 = vmul.f32 %v2333, 0.5
    %v2354 = vmul.f32 %v2335, 0.5
    %v2355 = vmul.f32 %v2286, 0.5
    %v2356 = vmul.f32 %v2288, 0.5
    %v2357 = vmul.f32 %v2339, 0.5
    %v2358 = vmul.f32 %v2341, 0.5
    %v2359 = vmul.f32 %v2290, 0.5
    %v2360 = vmul.f32 %v2292, 0.5
    %v2361 = vmul.f32 %v2343, 0.5
    %v2362 = vmul.f32 %v2345, 0.5
    %v2363 = vmul.f32 %v2276, 0.70710677
    %v2364 = vmul.f32 %v2278, 0.70710677
    %v2365 = vmul.f32 %v2329, 0.70710677
    %v2366 = vmul.f32 %v2331, 0.70710677
    %v2367 = vmul.f32 %v2280, 0.70710677
    %v2368 = vmul.f32 %v2282, 0.70710677
    %v2369 = vmul.f32 %v2333, 0.70710677
    %v2370 = vmul.f32 %v2335, 0.70710677
    %v2371 = vmul.f32 %v2286, 0.70710677
    %v2372 = vmul.f32 %v2288, 0.70710677
    %v2373 = vmul.f32 %v2339, 0.70710677
    %v2374 = vmul.f32 %v2341, 0.70710677
    %v2375 = vmul.f32 %v2290, 0.70710677
    %v2376 = vmul.f32 %v2292, 0.70710677
    %v2377 = vmul.f32 %v2343, 0.70710677
    %v2378 = vmul.f32 %v2345, 0.70710677
    %v2379 = verf.f32.pop %v2363
    %v2380 = verf.f32.pop %v2364
    %v2381 = verf.f32.pop %v2365
    %v2382 = verf.f32.pop %v2366
    %v2383 = verf.f32.pop %v2367
    %v2384 = verf.f32.pop %v2368
    %v2385 = verf.f32.pop %v2369
    %v2386 = verf.f32.pop %v2370
    %v2387 = verf.f32.pop %v2371
    %v2388 = verf.f32.pop %v2372
    %v2389 = verf.f32.pop %v2373
    %v2390 = verf.f32.pop %v2374
    %v2391 = verf.f32.pop %v2375
    %v2392 = verf.f32.pop %v2376
    %v2393 = verf.f32.pop %v2377
    %v2394 = verf.f32.pop %v2378
    %v2395 = vadd.f32 %v2379, 1.0
    %v2396 = vadd.f32 %v2380, 1.0
    %v2397 = vadd.f32 %v2381, 1.0
    %v2398 = vadd.f32 %v2382, 1.0
    %v2399 = vadd.f32 %v2383, 1.0
    %v2400 = vadd.f32 %v2384, 1.0
    %v2401 = vadd.f32 %v2385, 1.0
    %v2402 = vadd.f32 %v2386, 1.0
    %v2403 = vadd.f32 %v2387, 1.0
    %v2404 = vadd.f32 %v2388, 1.0
    %v2405 = vadd.f32 %v2389, 1.0
    %v2406 = vadd.f32 %v2390, 1.0
    %v2407 = vadd.f32 %v2391, 1.0
    %v2408 = vadd.f32 %v2392, 1.0
    %v2409 = vadd.f32 %v2393, 1.0
    %v2410 = vadd.f32 %v2394, 1.0
    %v2411 = vmul.f32 %v2347, %v2395
    %v2412 = vmul.f32 %v2348, %v2396
    %v2413 = vmul.f32 %v2349, %v2397
    %v2414 = vmul.f32 %v2350, %v2398
    %v2415 = vmul.f32 %v2351, %v2399
    %v2416 = vmul.f32 %v2352, %v2400
    %v2417 = vmul.f32 %v2353, %v2401
    %v2418 = vmul.f32 %v2354, %v2402
    %v2419 = vmul.f32 %v2355, %v2403
    %v2420 = vmul.f32 %v2356, %v2404
    %v2421 = vmul.f32 %v2357, %v2405
    %v2422 = vmul.f32 %v2358, %v2406
    %v2423 = vmul.f32 %v2359, %v2407
    %v2424 = vmul.f32 %v2360, %v2408
    %v2425 = vmul.f32 %v2361, %v2409
    %v2426 = vmul.f32 %v2362, %v2410
    %v2427 = vpack.c.bf16 %v2415, %v2411
    %v2428 = vpack.c.bf16 %v2416, %v2412
    %v2429 = vpack.c.bf16 %v2417, %v2413
    %v2430 = vpack.c.bf16 %v2418, %v2414
    %v2431 = vpack.c.bf16 %v2423, %v2419
    %v2432 = vpack.c.bf16 %v2424, %v2420
    %v2433 = vpack.c.bf16 %v2425, %v2421
    %v2434 = vpack.c.bf16 %v2426, %v2422
    %v2435 = vld [vmem:[#allocation13] sm:$0xff]
    %v2436 = vld [vmem:[#allocation13 + $0x8] sm:$0xff]
    %v2437 = vld [vmem:[#allocation13 + $0x10] sm:$0xff]
    %v2438 = vld [vmem:[#allocation13 + $0x18] sm:$0xff]
    %v2439 = vld [vmem:[#allocation13 + $0x20] sm:$0xff]
    %v2440 = vld [vmem:[#allocation13 + $0x28] sm:$0xff]
    %v2441 = vld [vmem:[#allocation13 + $0x30] sm:$0xff]
    %v2442 = vld [vmem:[#allocation13 + $0x38] sm:$0xff]
    %v2443 = vld [vmem:[#allocation13 + $0x40] sm:$0xff]
    %v2444 = vld [vmem:[#allocation13 + $0x48] sm:$0xff]
    %v2445 = vld [vmem:[#allocation13 + $0x50] sm:$0xff]
    %v2446 = vld [vmem:[#allocation13 + $0x58] sm:$0xff]
    %v2447 = vld [vmem:[#allocation13 + $0x60] sm:$0xff]
    %v2448 = vld [vmem:[#allocation13 + $0x68] sm:$0xff]
    %v2449 = vld [vmem:[#allocation13 + $0x70] sm:$0xff]
    %v2450 = vld [vmem:[#allocation13 + $0x78] sm:$0xff]
    %v2451 = vld [vmem:[#allocation13 + $0x80] sm:$0xff]
    %v2452 = vld [vmem:[#allocation13 + $0x88] sm:$0xff]
    %v2453 = vld [vmem:[#allocation13 + $0x90] sm:$0xff]
    %v2454 = vld [vmem:[#allocation13 + $0x98] sm:$0xff]
    %v2455 = vld [vmem:[#allocation13 + $0xa0] sm:$0xff]
    %v2456 = vld [vmem:[#allocation13 + $0xa8] sm:$0xff]
    %v2457 = vld [vmem:[#allocation13 + $0xb0] sm:$0xff]
    %v2458 = vld [vmem:[#allocation13 + $0xb8] sm:$0xff]
    %v2459 = vld [vmem:[#allocation13 + $0xc0] sm:$0xff]
    %v2460 = vld [vmem:[#allocation13 + $0xc8] sm:$0xff]
    %v2461 = vld [vmem:[#allocation13 + $0xd0] sm:$0xff]
    %v2462 = vld [vmem:[#allocation13 + $0xd8] sm:$0xff]
    %v2463 = vld [vmem:[#allocation13 + $0xe0] sm:$0xff]
    %v2464 = vld [vmem:[#allocation13 + $0xe8] sm:$0xff]
    %v2465 = vld [vmem:[#allocation13 + $0xf0] sm:$0xff]
    %v2466 = vld [vmem:[#allocation13 + $0xf8] sm:$0xff]
    %v2467 = vld [vmem:[#allocation13 + $0x100] sm:$0xff]
    %v2468 = vld [vmem:[#allocation13 + $0x108] sm:$0xff]
    %v2469 = vld [vmem:[#allocation13 + $0x110] sm:$0xff]
    %v2470 = vld [vmem:[#allocation13 + $0x118] sm:$0xff]
    %v2471 = vld [vmem:[#allocation13 + $0x120] sm:$0xff]
    %v2472 = vld [vmem:[#allocation13 + $0x128] sm:$0xff]
    %v2473 = vld [vmem:[#allocation13 + $0x130] sm:$0xff]
    %v2474 = vld [vmem:[#allocation13 + $0x138] sm:$0xff]
    %v2475 = vld [vmem:[#allocation13 + $0x140] sm:$0xff]
    %v2476 = vld [vmem:[#allocation13 + $0x148] sm:$0xff]
    %v2477 = vld [vmem:[#allocation13 + $0x150] sm:$0xff]
    %v2478 = vld [vmem:[#allocation13 + $0x158] sm:$0xff]
    %v2479 = vld [vmem:[#allocation13 + $0x160] sm:$0xff]
    %v2480 = vld [vmem:[#allocation13 + $0x168] sm:$0xff]
    %v2481 = vld [vmem:[#allocation13 + $0x170] sm:$0xff]
    %v2482 = vld [vmem:[#allocation13 + $0x178] sm:$0xff]
    %v2483 = vld [vmem:[#allocation13 + $0x180] sm:$0xff]
    %v2484 = vld [vmem:[#allocation13 + $0x188] sm:$0xff]
    %v2485 = vld [vmem:[#allocation13 + $0x190] sm:$0xff]
    %v2486 = vld [vmem:[#allocation13 + $0x198] sm:$0xff]
    %v2487 = vld [vmem:[#allocation13 + $0x1a0] sm:$0xff]
    %v2488 = vld [vmem:[#allocation13 + $0x1a8] sm:$0xff]
    %v2489 = vld [vmem:[#allocation13 + $0x1b0] sm:$0xff]
    %v2490 = vld [vmem:[#allocation13 + $0x1b8] sm:$0xff]
    %v2491 = vld [vmem:[#allocation13 + $0x1c0] sm:$0xff]
    %v2492 = vld [vmem:[#allocation13 + $0x1c8] sm:$0xff]
    %v2493 = vld [vmem:[#allocation13 + $0x1d0] sm:$0xff]
    %v2494 = vld [vmem:[#allocation13 + $0x1d8] sm:$0xff]
    %v2495 = vld [vmem:[#allocation13 + $0x1e0] sm:$0xff]
    %v2496 = vld [vmem:[#allocation13 + $0x1e8] sm:$0xff]
    %v2497 = vld [vmem:[#allocation13 + $0x1f0] sm:$0xff]
    %v2498 = vld [vmem:[#allocation13 + $0x1f8] sm:$0xff]
    %v2499 = vlaneseq
    %v2500 = vshrl.u32 %v2499, 7
    %v2501 = vsub.s32 3, %v2500
    %v2502 = vrot.slane %v1467, %v2501
    %v2503 = vlaneseq
    %v2504 = vshrl.u32 %v2503, 7
    %v2505 = vsub.s32 3, %v2504
    %v2506 = vrot.slane %v1468, %v2505
    %v2571 = vunpack.c.l.b16 %v2435
    %v2572 = vunpack.c.h.b16 %v2435
    %v2573 = vunpack.c.l.b16 %v2436
    %v2574 = vunpack.c.h.b16 %v2436
    %v2575 = vunpack.c.l.b16 %v2437
    %v2576 = vunpack.c.h.b16 %v2437
    %v2577 = vunpack.c.l.b16 %v2438
    %v2578 = vunpack.c.h.b16 %v2438
    %v2579 = vunpack.c.l.b16 %v2439
    %v2580 = vunpack.c.h.b16 %v2439
    %v2581 = vunpack.c.l.b16 %v2440
    %v2582 = vunpack.c.h.b16 %v2440
    %v2583 = vunpack.c.l.b16 %v2441
    %v2584 = vunpack.c.h.b16 %v2441
    %v2585 = vunpack.c.l.b16 %v2442
    %v2586 = vunpack.c.h.b16 %v2442
    %v2587 = vunpack.c.l.b16 %v2443
    %v2588 = vunpack.c.h.b16 %v2443
    %v2589 = vunpack.c.l.b16 %v2444
    %v2590 = vunpack.c.h.b16 %v2444
    %v2591 = vunpack.c.l.b16 %v2445
    %v2592 = vunpack.c.h.b16 %v2445
    %v2593 = vunpack.c.l.b16 %v2446
    %v2594 = vunpack.c.h.b16 %v2446
    %v2595 = vunpack.c.l.b16 %v2447
    %v2596 = vunpack.c.h.b16 %v2447
    %v2597 = vunpack.c.l.b16 %v2448
    %v2598 = vunpack.c.h.b16 %v2448
    %v2599 = vunpack.c.l.b16 %v2449
    %v2600 = vunpack.c.h.b16 %v2449
    %v2601 = vunpack.c.l.b16 %v2450
    %v2602 = vunpack.c.h.b16 %v2450
    %v2603 = vunpack.c.l.b16 %v2451
    %v2604 = vunpack.c.h.b16 %v2451
    %v2605 = vunpack.c.l.b16 %v2452
    %v2606 = vunpack.c.h.b16 %v2452
    %v2607 = vunpack.c.l.b16 %v2453
    %v2608 = vunpack.c.h.b16 %v2453
    %v2609 = vunpack.c.l.b16 %v2454
    %v2610 = vunpack.c.h.b16 %v2454
    %v2611 = vunpack.c.l.b16 %v2455
    %v2612 = vunpack.c.h.b16 %v2455
    %v2613 = vunpack.c.l.b16 %v2456
    %v2614 = vunpack.c.h.b16 %v2456
    %v2615 = vunpack.c.l.b16 %v2457
    %v2616 = vunpack.c.h.b16 %v2457
    %v2617 = vunpack.c.l.b16 %v2458
    %v2618 = vunpack.c.h.b16 %v2458
    %v2619 = vunpack.c.l.b16 %v2459
    %v2620 = vunpack.c.h.b16 %v2459
    %v2621 = vunpack.c.l.b16 %v2460
    %v2622 = vunpack.c.h.b16 %v2460
    %v2623 = vunpack.c.l.b16 %v2461
    %v2624 = vunpack.c.h.b16 %v2461
    %v2625 = vunpack.c.l.b16 %v2462
    %v2626 = vunpack.c.h.b16 %v2462
    %v2627 = vunpack.c.l.b16 %v2463
    %v2628 = vunpack.c.h.b16 %v2463
    %v2629 = vunpack.c.l.b16 %v2464
    %v2630 = vunpack.c.h.b16 %v2464
    %v2631 = vunpack.c.l.b16 %v2465
    %v2632 = vunpack.c.h.b16 %v2465
    %v2633 = vunpack.c.l.b16 %v2466
    %v2634 = vunpack.c.h.b16 %v2466
    %v2635 = vunpack.c.l.b16 %v2467
    %v2636 = vunpack.c.h.b16 %v2467
    %v2637 = vunpack.c.l.b16 %v2468
    %v2638 = vunpack.c.h.b16 %v2468
    %v2639 = vunpack.c.l.b16 %v2469
    %v2640 = vunpack.c.h.b16 %v2469
    %v2641 = vunpack.c.l.b16 %v2470
    %v2642 = vunpack.c.h.b16 %v2470
    %v2643 = vunpack.c.l.b16 %v2471
    %v2644 = vunpack.c.h.b16 %v2471
    %v2645 = vunpack.c.l.b16 %v2472
    %v2646 = vunpack.c.h.b16 %v2472
    %v2647 = vunpack.c.l.b16 %v2473
    %v2648 = vunpack.c.h.b16 %v2473
    %v2649 = vunpack.c.l.b16 %v2474
    %v2650 = vunpack.c.h.b16 %v2474
    %v2651 = vunpack.c.l.b16 %v2475
    %v2652 = vunpack.c.h.b16 %v2475
    %v2653 = vunpack.c.l.b16 %v2476
    %v2654 = vunpack.c.h.b16 %v2476
    %v2655 = vunpack.c.l.b16 %v2477
    %v2656 = vunpack.c.h.b16 %v2477
    %v2657 = vunpack.c.l.b16 %v2478
    %v2658 = vunpack.c.h.b16 %v2478
    %v2659 = vunpack.c.l.b16 %v2479
    %v2660 = vunpack.c.h.b16 %v2479
    %v2661 = vunpack.c.l.b16 %v2480
    %v2662 = vunpack.c.h.b16 %v2480
    %v2663 = vunpack.c.l.b16 %v2481
    %v2664 = vunpack.c.h.b16 %v2481
    %v2665 = vunpack.c.l.b16 %v2482
    %v2666 = vunpack.c.h.b16 %v2482
    %v2667 = vunpack.c.l.b16 %v2483
    %v2668 = vunpack.c.h.b16 %v2483
    %v2669 = vunpack.c.l.b16 %v2484
    %v2670 = vunpack.c.h.b16 %v2484
    %v2671 = vunpack.c.l.b16 %v2485
    %v2672 = vunpack.c.h.b16 %v2485
    %v2673 = vunpack.c.l.b16 %v2486
    %v2674 = vunpack.c.h.b16 %v2486
    %v2675 = vunpack.c.l.b16 %v2487
    %v2676 = vunpack.c.h.b16 %v2487
    %v2677 = vunpack.c.l.b16 %v2488
    %v2678 = vunpack.c.h.b16 %v2488
    %v2679 = vunpack.c.l.b16 %v2489
    %v2680 = vunpack.c.h.b16 %v2489
    %v2681 = vunpack.c.l.b16 %v2490
    %v2682 = vunpack.c.h.b16 %v2490
    %v2683 = vunpack.c.l.b16 %v2491
    %v2684 = vunpack.c.h.b16 %v2491
    %v2685 = vunpack.c.l.b16 %v2492
    %v2686 = vunpack.c.h.b16 %v2492
    %v2687 = vunpack.c.l.b16 %v2493
    %v2688 = vunpack.c.h.b16 %v2493
    %v2689 = vunpack.c.l.b16 %v2494
    %v2690 = vunpack.c.h.b16 %v2494
    %v2691 = vunpack.c.l.b16 %v2495
    %v2692 = vunpack.c.h.b16 %v2495
    %v2693 = vunpack.c.l.b16 %v2496
    %v2694 = vunpack.c.h.b16 %v2496
    %v2695 = vunpack.c.l.b16 %v2497
    %v2696 = vunpack.c.h.b16 %v2497
    %v2697 = vunpack.c.l.b16 %v2498
    %v2698 = vunpack.c.h.b16 %v2498
    %v2699 = vpack.c.b16 %v2573, %v2571
    %v2700 = vpack.c.b16 %v2574, %v2572
    %v2701 = vpack.c.b16 %v2577, %v2575
    %v2702 = vpack.c.b16 %v2578, %v2576
    %v2703 = vpack.c.b16 %v2581, %v2579
    %v2704 = vpack.c.b16 %v2582, %v2580
    %v2705 = vpack.c.b16 %v2585, %v2583
    %v2706 = vpack.c.b16 %v2586, %v2584
    %v2707 = vpack.c.b16 %v2589, %v2587
    %v2708 = vpack.c.b16 %v2590, %v2588
    %v2709 = vpack.c.b16 %v2593, %v2591
    %v2710 = vpack.c.b16 %v2594, %v2592
    %v2711 = vpack.c.b16 %v2597, %v2595
    %v2712 = vpack.c.b16 %v2598, %v2596
    %v2713 = vpack.c.b16 %v2601, %v2599
    %v2714 = vpack.c.b16 %v2602, %v2600
    %v2715 = vpack.c.b16 %v2605, %v2603
    %v2716 = vpack.c.b16 %v2606, %v2604
    %v2717 = vpack.c.b16 %v2609, %v2607
    %v2718 = vpack.c.b16 %v2610, %v2608
    %v2719 = vpack.c.b16 %v2613, %v2611
    %v2720 = vpack.c.b16 %v2614, %v2612
    %v2721 = vpack.c.b16 %v2617, %v2615
    %v2722 = vpack.c.b16 %v2618, %v2616
    %v2723 = vpack.c.b16 %v2621, %v2619
    %v2724 = vpack.c.b16 %v2622, %v2620
    %v2725 = vpack.c.b16 %v2625, %v2623
    %v2726 = vpack.c.b16 %v2626, %v2624
    %v2727 = vpack.c.b16 %v2629, %v2627
    %v2728 = vpack.c.b16 %v2630, %v2628
    %v2729 = vpack.c.b16 %v2633, %v2631
    %v2730 = vpack.c.b16 %v2634, %v2632
    %v2731 = vpack.c.b16 %v2637, %v2635
    %v2732 = vpack.c.b16 %v2638, %v2636
    %v2733 = vpack.c.b16 %v2641, %v2639
    %v2734 = vpack.c.b16 %v2642, %v2640
    %v2735 = vpack.c.b16 %v2645, %v2643
    %v2736 = vpack.c.b16 %v2646, %v2644
    %v2737 = vpack.c.b16 %v2649, %v2647
    %v2738 = vpack.c.b16 %v2650, %v2648
    %v2739 = vpack.c.b16 %v2653, %v2651
    %v2740 = vpack.c.b16 %v2654, %v2652
    %v2741 = vpack.c.b16 %v2657, %v2655
    %v2742 = vpack.c.b16 %v2658, %v2656
    %v2743 = vpack.c.b16 %v2661, %v2659
    %v2744 = vpack.c.b16 %v2662, %v2660
    %v2745 = vpack.c.b16 %v2665, %v2663
    %v2746 = vpack.c.b16 %v2666, %v2664
    %v2747 = vpack.c.b16 %v2669, %v2667
    %v2748 = vpack.c.b16 %v2670, %v2668
    %v2749 = vpack.c.b16 %v2673, %v2671
    %v2750 = vpack.c.b16 %v2674, %v2672
    %v2751 = vpack.c.b16 %v2677, %v2675
    %v2752 = vpack.c.b16 %v2678, %v2676
    %v2753 = vpack.c.b16 %v2681, %v2679
    %v2754 = vpack.c.b16 %v2682, %v2680
    %v2755 = vpack.c.b16 %v2685, %v2683
    %v2756 = vpack.c.b16 %v2686, %v2684
    %v2757 = vpack.c.b16 %v2689, %v2687
    %v2758 = vpack.c.b16 %v2690, %v2688
    %v2759 = vpack.c.b16 %v2693, %v2691
    %v2760 = vpack.c.b16 %v2694, %v2692
    %v2761 = vpack.c.b16 %v2697, %v2695
    %v2762 = vpack.c.b16 %v2698, %v2696
    %2827 = vmatprep.subr.bf16.mxu0 %v2700
    %2828 = vmatpush1.bf16.msra.mxu0 %v2699
    %2829 = vmatprep.subr.bf16.mxu0 %v2702
    %2830 = vmatpush1.bf16.msra.mxu0 %v2701
    %2831 = vmatprep.subr.bf16.mxu0 %v2704
    %2832 = vmatpush1.bf16.msra.mxu0 %v2703
    %2833 = vmatprep.subr.bf16.mxu0 %v2706
    %2834 = vmatpush1.bf16.msra.mxu0 %v2705
    %2835 = vmatprep.subr.bf16.mxu0 %v2708
    %2836 = vmatpush1.bf16.msra.mxu0 %v2707
    %2837 = vmatprep.subr.bf16.mxu0 %v2710
    %2838 = vmatpush1.bf16.msra.mxu0 %v2709
    %2839 = vmatprep.subr.bf16.mxu0 %v2712
    %2840 = vmatpush1.bf16.msra.mxu0 %v2711
    %2841 = vmatprep.subr.bf16.mxu0 %v2714
    %2842 = vmatpush1.bf16.msra.mxu0 %v2713
    %2843 = vmatprep.subr.bf16.mxu0 %v2716
    %2844 = vmatpush1.bf16.msra.mxu0 %v2715
    %2845 = vmatprep.subr.bf16.mxu0 %v2718
    %2846 = vmatpush1.bf16.msra.mxu0 %v2717
    %2847 = vmatprep.subr.bf16.mxu0 %v2720
    %2848 = vmatpush1.bf16.msra.mxu0 %v2719
    %2849 = vmatprep.subr.bf16.mxu0 %v2722
    %2850 = vmatpush1.bf16.msra.mxu0 %v2721
    %2851 = vmatprep.subr.bf16.mxu0 %v2724
    %2852 = vmatpush1.bf16.msra.mxu0 %v2723
    %2853 = vmatprep.subr.bf16.mxu0 %v2726
    %2854 = vmatpush1.bf16.msra.mxu0 %v2725
    %2855 = vmatprep.subr.bf16.mxu0 %v2728
    %2856 = vmatpush1.bf16.msra.mxu0 %v2727
    %2857 = vmatprep.subr.bf16.mxu0 %v2730
    %2858 = vmatpush1.bf16.msra.mxu0 %v2729
    %2859 = vmatprep.mubr.bf16.mxu0 %v2428
    %2860 = vmatmul.mubr.bf16.gmra.mrb[0].mxu0 %v2427
    %v2861 = vpop.f32.mrb[0].mxu0
    %v2862 = vadd.f32 %v2502, %v2861
    %v2863 = vpop.f32.mrb[0].mxu0
    %v2864 = vadd.f32 %v2506, %v2863
    %v2865 = vpop.f32.mrb[0].mxu0
    %v2866 = vadd.f32 %v2502, %v2865
    %v2867 = vpop.f32.mrb[0].mxu0
    %v2868 = vadd.f32 %v2506, %v2867
    %2869 = vmatprep.mubr.bf16.mxu0 %v2432
    %2870 = vmatmul.mubr.bf16.gmra.mrb[0].mxu0 %v2431
    %v2871 = vpop.f32.mrb[0].mxu0
    %v2872 = vadd.f32 %v2502, %v2871
    %v2873 = vpop.f32.mrb[0].mxu0
    %v2874 = vadd.f32 %v2506, %v2873
    %v2875 = vpop.f32.mrb[0].mxu0
    %v2876 = vadd.f32 %v2502, %v2875
    %v2877 = vpop.f32.mrb[0].mxu0
    %v2878 = vadd.f32 %v2506, %v2877
    %2879 = vdwg.mxu0
    %2880 = vmatprep.subr.bf16.mxu0 %v2732
    %2881 = vmatpush1.bf16.msra.mxu0 %v2731
    %2882 = vmatprep.subr.bf16.mxu0 %v2734
    %2883 = vmatpush1.bf16.msra.mxu0 %v2733
    %2884 = vmatprep.subr.bf16.mxu0 %v2736
    %2885 = vmatpush1.bf16.msra.mxu0 %v2735
    %2886 = vmatprep.subr.bf16.mxu0 %v2738
    %2887 = vmatpush1.bf16.msra.mxu0 %v2737
    %2888 = vmatprep.subr.bf16.mxu0 %v2740
    %2889 = vmatpush1.bf16.msra.mxu0 %v2739
    %2890 = vmatprep.subr.bf16.mxu0 %v2742
    %2891 = vmatpush1.bf16.msra.mxu0 %v2741
    %2892 = vmatprep.subr.bf16.mxu0 %v2744
    %2893 = vmatpush1.bf16.msra.mxu0 %v2743
    %2894 = vmatprep.subr.bf16.mxu0 %v2746
    %2895 = vmatpush1.bf16.msra.mxu0 %v2745
    %2896 = vmatprep.subr.bf16.mxu0 %v2748
    %2897 = vmatpush1.bf16.msra.mxu0 %v2747
    %2898 = vmatprep.subr.bf16.mxu0 %v2750
    %2899 = vmatpush1.bf16.msra.mxu0 %v2749
    %2900 = vmatprep.subr.bf16.mxu0 %v2752
    %2901 = vmatpush1.bf16.msra.mxu0 %v2751
    %2902 = vmatprep.subr.bf16.mxu0 %v2754
    %2903 = vmatpush1.bf16.msra.mxu0 %v2753
    %2904 = vmatprep.subr.bf16.mxu0 %v2756
    %2905 = vmatpush1.bf16.msra.mxu0 %v2755
    %2906 = vmatprep.subr.bf16.mxu0 %v2758
    %2907 = vmatpush1.bf16.msra.mxu0 %v2757
    %2908 = vmatprep.subr.bf16.mxu0 %v2760
    %2909 = vmatpush1.bf16.msra.mxu0 %v2759
    %2910 = vmatprep.subr.bf16.mxu0 %v2762
    %2911 = vmatpush1.bf16.msra.mxu0 %v2761
    %2912 = vmatprep.mubr.bf16.mxu0 %v2430
    %2913 = vmatmul.mubr.bf16.gmra.mrb[0].mxu0 %v2429
    %v2914 = vpop.f32.mrb[0].mxu0
    %v2915 = vadd.f32 %v2862, %v2914
    %v2916 = vpop.f32.mrb[0].mxu0
    %v2917 = vadd.f32 %v2864, %v2916
    %v2918 = vpop.f32.mrb[0].mxu0
    %v2919 = vadd.f32 %v2866, %v2918
    %v2920 = vpop.f32.mrb[0].mxu0
    %v2921 = vadd.f32 %v2868, %v2920
    %2922 = vmatprep.mubr.bf16.mxu0 %v2434
    %2923 = vmatmul.mubr.bf16.gmra.mrb[0].mxu0 %v2433
    %v2924 = vpop.f32.mrb[0].mxu0
    %v2925 = vadd.f32 %v2872, %v2924
    %v2926 = vpop.f32.mrb[0].mxu0
    %v2927 = vadd.f32 %v2874, %v2926
    %v2928 = vpop.f32.mrb[0].mxu0
    %v2929 = vadd.f32 %v2876, %v2928
    %v2930 = vpop.f32.mrb[0].mxu0
    %v2931 = vadd.f32 %v2878, %v2930
    %2932 = vdwg.mxu0
    %v2933 = vadd.f32 %v2915, %v1823
    %v2934 = vadd.f32 %v2917, %v1824
    %v2935 = vadd.f32 %v2919, %v1825
    %v2936 = vadd.f32 %v2921, %v1826
    %v2937 = vadd.f32 %v2925, %v1827
    %v2938 = vadd.f32 %v2927, %v1828
    %v2939 = vadd.f32 %v2929, %v1829
    %v2940 = vadd.f32 %v2931, %v1830
    %v2941 = vadd.f32 %v2933, %v2934
    %2942 = vadd.xlane.f32.xlu0 %v2941
    %v2943 = vpop.xlane.xlu0 %2942
    %v2944 = vadd.f32 %v2935, %v2936
    %2945 = vadd.xlane.f32.xlu0 %v2944
    %v2946 = vpop.xlane.xlu0 %2945
    %v2947 = vadd.f32 %v2937, %v2938
    %2948 = vadd.xlane.f32.xlu0 %v2947
    %v2949 = vpop.xlane.xlu0 %2948
    %v2950 = vadd.f32 %v2939, %v2940
    %2951 = vadd.xlane.f32.xlu0 %v2950
    %v2952 = vpop.xlane.xlu0 %2951
    %v2953 = vmul.f32 %v2943, %v1746
    %v2954 = vmul.f32 %v2946, %v1746
    %v2955 = vmul.f32 %v2949, %v1746
    %v2956 = vmul.f32 %v2952, %v1746
    %v2957 = vsub.f32 %v2933, %v2953
    %v2958 = vsub.f32 %v2934, %v2953
    %v2959 = vsub.f32 %v2935, %v2954
    %v2960 = vsub.f32 %v2936, %v2954
    %v2961 = vsub.f32 %v2937, %v2955
    %v2962 = vsub.f32 %v2938, %v2955
    %v2963 = vsub.f32 %v2939, %v2956
    %v2964 = vsub.f32 %v2940, %v2956
    %v2965 = vmul.f32 %v2957, %v2957
    %v2966 = vmul.f32 %v2958, %v2958
    %v2967 = vmul.f32 %v2959, %v2959
    %v2968 = vmul.f32 %v2960, %v2960
    %v2969 = vmul.f32 %v2961, %v2961
    %v2970 = vmul.f32 %v2962, %v2962
    %v2971 = vmul.f32 %v2963, %v2963
    %v2972 = vmul.f32 %v2964, %v2964
    %v2973 = vadd.f32 %v2965, %v2966
    %2974 = vadd.xlane.f32.xlu0 %v2973
    %v2975 = vpop.xlane.xlu0 %2974
    %v2976 = vadd.f32 %v2967, %v2968
    %2977 = vadd.xlane.f32.xlu0 %v2976
    %v2978 = vpop.xlane.xlu0 %2977
    %v2979 = vadd.f32 %v2969, %v2970
    %2980 = vadd.xlane.f32.xlu0 %v2979
    %v2981 = vpop.xlane.xlu0 %2980
    %v2982 = vadd.f32 %v2971, %v2972
    %2983 = vadd.xlane.f32.xlu0 %v2982
    %v2984 = vpop.xlane.xlu0 %2983
    %v2985 = vmul.f32 %v2975, %v1746
    %v2986 = vmul.f32 %v2978, %v1746
    %v2987 = vmul.f32 %v2981, %v1746
    %v2988 = vmul.f32 %v2984, %v1746
    %v2989 = vadd.f32 %v2985, 1e-12
    %v2990 = vadd.f32 %v2986, 1e-12
    %v2991 = vadd.f32 %v2987, 1e-12
    %v2992 = vadd.f32 %v2988, 1e-12
    %v2993 = vrsqrt.pop %v2989
    %v2994 = vrsqrt.pop %v2990
    %v2995 = vrsqrt.pop %v2991
    %v2996 = vrsqrt.pop %v2992
    %v2997 = vmul.f32 %v2957, %v2993
    %v2998 = vmul.f32 %v2958, %v2993
    %v2999 = vmul.f32 %v2959, %v2994
    %v3000 = vmul.f32 %v2960, %v2994
    %v3001 = vmul.f32 %v2961, %v2995
    %v3002 = vmul.f32 %v2962, %v2995
    %v3003 = vmul.f32 %v2963, %v2996
    %v3004 = vmul.f32 %v2964, %v2996
    %v3005 = vlaneseq
    %v3006 = vshrl.u32 %v3005, 7
    %v3007 = vsub.s32 4, %v3006
    %v3008 = vrot.slane %v1467, %v3007
    %v3009 = vlaneseq
    %v3010 = vshrl.u32 %v3009, 7
    %v3011 = vsub.s32 4, %v3010
    %v3012 = vrot.slane %v1468, %v3011
    %v3013 = vmul.f32 %v2997, %v3008
    %v3014 = vmul.f32 %v2998, %v3012
    %v3015 = vmul.f32 %v2999, %v3008
    %v3016 = vmul.f32 %v3000, %v3012
    %v3017 = vmul.f32 %v3001, %v3008
    %v3018 = vmul.f32 %v3002, %v3012
    %v3019 = vmul.f32 %v3003, %v3008
    %v3020 = vmul.f32 %v3004, %v3012
    %v3021 = vlaneseq
    %v3022 = vshrl.u32 %v3021, 7
    %v3023 = vsub.s32 5, %v3022
    %v3024 = vrot.slane %v1467, %v3023
    %v3025 = vlaneseq
    %v3026 = vshrl.u32 %v3025, 7
    %v3027 = vsub.s32 5, %v3026
    %v3028 = vrot.slane %v1468, %v3027
    %v3029 = vadd.f32 %v3013, %v3024
    %v3030 = vadd.f32 %v3014, %v3028
    %v3031 = vadd.f32 %v3015, %v3024
    %v3032 = vadd.f32 %v3016, %v3028
    %v3033 = vadd.f32 %v3017, %v3024
    %v3034 = vadd.f32 %v3018, %v3028
    %v3035 = vadd.f32 %v3019, %v3024
    %v3036 = vadd.f32 %v3020, %v3028
    %3037 = vst [vmem:[#allocation14] sm:$0xff] %v3029
    %3038 = vst [vmem:[#allocation14 + $0x8] sm:$0xff] %v3030
    %3039 = vst [vmem:[#allocation14 + $0x10] sm:$0xff] %v3031
    %3040 = vst [vmem:[#allocation14 + $0x18] sm:$0xff] %v3032
    %3041 = vst [vmem:[#allocation14 + $0x20] sm:$0xff] %v3033
    %3042 = vst [vmem:[#allocation14 + $0x28] sm:$0xff] %v3034
    %3043 = vst [vmem:[#allocation14 + $0x30] sm:$0xff] %v3035
    %3044 = vst [vmem:[#allocation14 + $0x38] sm:$0xff] %v3036
    // Predicated region
    $region70: #{tpu_custom_call.1} parent=1 // pred_check
      _
    $region71: #{tpu_custom_call.1} parent=1 // pred_check_branch
      %3046 = sbr.rel (0) target = $region73
    $region72: #{tpu_custom_call.1} parent=1 // pred_region
      %s3048 = ssub.s32 1024, 1024
      %3049 = vsyncadd [#allocation4], %s3048
      %s3050 = sshll.u32 [#allocation14], 4
      %s3051 = int_to_ptr.vmem [resolvable:$true] %s3050
      %3056 = dma.vmem_to_hbm [thread:$0]  %s3051, 1024, %s10, [#allocation4], 256, 256, 16
    $region73: #{tpu_custom_call.1} parent=1 // pred_fallthru
      _
    // Predicated region
    $region74: #{tpu_custom_call.1} parent=1 // pred_check
      _
    $region75: #{tpu_custom_call.1} parent=1 // pred_check_branch
      %3058 = sbr.rel (0) target = $region77
    $region76: #{tpu_custom_call.1} parent=1 // pred_region
      %3059 = dma.done [#allocation4], 1024
    $region77: #{tpu_custom_call.1} parent=1 // pred_fallthru
      _
    %3060 = vsyncpa [#allocation3], 1
    %3061 = vsyncpa [#allocation6], 1
    %3062 = vsyncpa [#allocation9], 1
    %3063 = vsyncpa [#allocation12], 1
    %3064 = vsyncpa [#allocation4], 1

</llo_original>
